<compile_context>
chip_gen: v7x
topology: tpu7x:2x2x1
jax: 0.10.0
libtpu: 0.0.40
codegen_flags: <defaults>
</compile_context>

<pallas_src>
import jax
import jax.numpy as jnp
from jax.experimental import pallas as pl
from jax.experimental.pallas import tpu as pltpu


def _round_up(x, k):
    return ((x + k - 1) // k) * k


def _vmem_limit(streamed_bytes, resident_bytes):
    """Double-buffered streamed blocks + resident operands, with headroom."""
    est = int(2.5 * streamed_bytes) + resident_bytes + (2 << 20)
    return min(48 << 20, max(32 << 20, est))   # cap below v7x's 64 MiB physical


# ----------------------------------------------------------------------------
# Pallas kernels
# ----------------------------------------------------------------------------
def _merged_conv_kernel(x_ref, w12_ref, b12_ref, w3_ref, b3_ref, o12_ref, o3_ref):
    """Per (batch, m-tile): y12 = W12 @ x + b12 ; y3 = W3 @ x + b3.

    x tile is (C, tn) of the flattened (T*V) axis -> outputs are lane dense.
    One pass over x feeds conv1|conv2 (relation channels) and conv3.
    """
    x = x_ref[0]                                                 # (C, tn)
    o12_ref[0] = (
        jnp.dot(w12_ref[...], x, preferred_element_type=jnp.float32) + b12_ref[...]
    )
    o3_ref[0] = (
        jnp.dot(w3_ref[...], x, preferred_element_type=jnp.float32) + b3_ref[...]
    )


def _adj_aggregate_kernel(x1_ref, x2_ref, x3_ref, w4_ref, base_ref, o_ref):
    """Per grid step, for each of Bn batch elements b:
         diff[r,u,v] = tanh(x1[b,r,u] - x2[b,r,v])                 (R, V, V)
         adj[c,u,v]  = base[c,u,v] + sum_r (alpha*W4)[c,r]*diff[r,u,v]
         out[b,c,t,v] = sum_u x3[b,c,t,u] * adj[c,u,v]             (Cout, T, V)
       base = alpha*b4 + A is n-invariant and precomputed on the host.
       The adjacency tensor never touches HBM.
    """
    w4 = w4_ref[...]                                             # (Cout, R)
    base = base_ref[...]                                         # (Cout, V, V)
    bn = x1_ref.shape[0]
    n_rel = w4.shape[1]

    for b in range(bn):                                          # small static Bn
        x1 = x1_ref[b]                                           # (R, V)
        x2 = x2_ref[b]                                           # (R, V)
        diff = jnp.tanh(x1[:, :, None] - x2[:, None, :])         # (R, V, V) EUP tanh

        if n_rel >= 16:
            # Large-R configs: conv4 over relation channels on the MXU.
            adj = base + jnp.einsum(
                "cr,ruv->cuv", w4, diff, preferred_element_type=jnp.float32)
        else:
            # Small R (e.g. 8): unrolled VPU weighted sum, no relayouts.
            adj = base
            for ri in range(n_rel):
                adj = adj + w4[:, ri:ri + 1, None] * diff[ri][None, :, :]

        # Batched contraction on the MXU (bf16 operands, f32 accumulation).
        out = jnp.einsum(
            "ctu,cuv->ctv",
            x3_ref[b].astype(jnp.bfloat16),
            adj.astype(jnp.bfloat16),
            preferred_element_type=jnp.float32,
        )
        o_ref[b] = out


# ----------------------------------------------------------------------------
# Pallas wrappers
# ----------------------------------------------------------------------------
def merged_conv1x1(x_flat, w12, b12, w3, b3, *, tn_max=2048):
    """x_flat: (N, C, M=T*V); w12: (2R, C); w3: (Cout, C).

    Returns (y12: (N, 2R, M), y3: (N, Cout, M)).
    """
    n, c, m = x_flat.shape
    r2 = w12.shape[0]
    cout = w3.shape[0]

    tn = min(tn_max, _round_up(m, 128))          # always a multiple of 128
    m_tiles = pl.cdiv(m, tn)                     # partial last tile is masked

    streamed = (c + r2 + cout) * tn * 4
    resident = (r2 + cout) * (c + 1) * 4
    vmem = _vmem_limit(streamed, resident)

    return pl.pallas_call(
        _merged_conv_kernel,
        out_shape=(jax.ShapeDtypeStruct((n, r2, m), jnp.float32),
                   jax.ShapeDtypeStruct((n, cout, m), jnp.float32)),
        grid=(n, m_tiles),
        in_specs=[
            pl.BlockSpec((1, c, tn), lambda i, j: (i, 0, j)),
            pl.BlockSpec((r2, c), lambda i, j: (0, 0)),
            pl.BlockSpec((r2, 1), lambda i, j: (0, 0)),
            pl.BlockSpec((cout, c), lambda i, j: (0, 0)),
            pl.BlockSpec((cout, 1), lambda i, j: (0, 0)),
        ],
        out_specs=(
            pl.BlockSpec((1, r2, tn), lambda i, j: (i, 0, j)),
            pl.BlockSpec((1, cout, tn), lambda i, j: (i, 0, j)),
        ),
        compiler_params=pltpu.CompilerParams(
            dimension_semantics=("parallel", "parallel"),
            vmem_limit_bytes=vmem),
    )(x_flat, w12, b12, w3, b3)


def adjacency_aggregate(x1, x2, x3, w4a, base, *, bn_max=4):
    """x1,x2: (N,R,V); x3: (N,Cout,T,V); w4a: (Cout,R); base: (Cout,V,V)."""
    n, r, v = x1.shape
    cout, t = x3.shape[1], x3.shape[2]

    # Largest divisor of N up to bn_max (bn_max=4 keeps v7x VMEM comfortable;
    # raise to 8 on v5e/v6e if desired).
    bn = 1
    for cand in range(min(bn_max, n), 0, -1):
        if n % cand == 0:
            bn = cand
            break

    streamed = bn * (2 * r * v + 2 * cout * t * v) * 4
    resident = (cout * r + cout * v * v) * 4
    vmem = _vmem_limit(streamed, resident)

    return pl.pallas_call(
        _adj_aggregate_kernel,
        out_shape=jax.ShapeDtypeStruct((n, cout, t, v), jnp.float32),
        grid=(n // bn,),
        in_specs=[
            pl.BlockSpec((bn, r, v), lambda i: (i, 0, 0)),
            pl.BlockSpec((bn, r, v), lambda i: (i, 0, 0)),
            pl.BlockSpec((bn, cout, t, v), lambda i: (i, 0, 0, 0)),
            pl.BlockSpec((cout, r), lambda i: (0, 0)),
            pl.BlockSpec((cout, v, v), lambda i: (0, 0, 0)),
        ],
        out_specs=pl.BlockSpec((bn, cout, t, v), lambda i: (i, 0, 0, 0)),
        compiler_params=pltpu.CompilerParams(
            dimension_semantics=("parallel",),
            vmem_limit_bytes=vmem),
    )(x1, x2, x3, w4a, base)


# ----------------------------------------------------------------------------
# Full forward (only free reshapes + tiny reductions in JAX glue)
# ----------------------------------------------------------------------------
def ctrgc_forward(x, p, a_mat, alpha=1.0):
    """x: (N, C, T, V) float32, returns (N, out_channels, T, V) like the module."""
    n, c, t, v = x.shape
    r = p["W1"].shape[0]
    cout = p["W3"].shape[0]

    # conv1|conv2 weights merged; conv3 kept separate so x3 needs no slice/transpose.
    w12 = jnp.concatenate([p["W1"], p["W2"]], axis=0)            # (2R, C)
    b12 = jnp.concatenate([p["b1"], p["b2"]], axis=0)[:, None]   # (2R, 1)
    w3 = p["W3"]                                                 # (Cout, C)
    b3 = p["b3"][:, None]                                        # (Cout, 1)

    x_flat = x.reshape(n, c, t * v)                              # free reshape
    y12, y3 = merged_conv1x1(x_flat, w12, b12, w3, b3)

    # x1 = conv1(x).mean(-2), x2 = conv2(x).mean(-2)  (tiny: 2R channels only)
    x12 = jnp.mean(y12.reshape(n, 2 * r, t, v), axis=2)          # (N, 2R, V)
    x1 = x12[:, :r]                                              # (N, R, V)
    x2 = x12[:, r:]                                              # (N, R, V)
    x3 = y3.reshape(n, cout, t, v)                               # free reshape

    # Fold alpha (and conv4 bias) into the weights (exact); precompute the
    # n-invariant adjacency base alpha*b4 + A once.
    w4a = p["W4"] * alpha                                        # (Cout, R)
    base = (p["b4"] * alpha)[:, None, None] + a_mat[None, :, :]  # (Cout, V, V)

    return adjacency_aggregate(x1, x2, x3, w4a, base)


# ----------------------------------------------------------------------------
# Deterministic synthetic parameters (shapes per CTRGC.__init__)
# ----------------------------------------------------------------------------
def init_params(key, cin, cout, rel_reduction=8):
    rel = 8 if cin <= 16 else cin // rel_reduction
    ks = jax.random.split(key, 8)

    def nrm(k, shape, s=0.1):
        return jax.random.normal(k, shape, dtype=jnp.float32) * s

    return {
        "W1": nrm(ks[0], (rel, cin)), "b1": nrm(ks[1], (rel,)),
        "W2": nrm(ks[2], (rel, cin)), "b2": nrm(ks[3], (rel,)),
        "W3": nrm(ks[4], (cout, cin)), "b3": nrm(ks[5], (cout,)),
        "W4": nrm(ks[6], (cout, rel)), "b4": nrm(ks[7], (cout,)),
    }


# ----------------------------------------------------------------------------
# Pure-JAX reference (mirrors the PyTorch forward, for a silent check)
# ----------------------------------------------------------------------------
def reference_forward(x, p, a_mat, alpha=1.0):
    def conv(z, w, b):
        return jnp.einsum("oc,nctv->notv", w, z) + b[None, :, None, None]

    x1 = jnp.mean(conv(x, p["W1"], p["b1"]), axis=-2)   # (N, R, V)
    x2 = jnp.mean(conv(x, p["W2"], p["b2"]), axis=-2)   # (N, R, V)
    x3 = conv(x, p["W3"], p["b3"])                       # (N, Cout, T, V)

    d = jnp.tanh(x1[..., :, None] - x2[..., None, :])    # (N, R, V, V)
    adj = jnp.einsum("oc,ncuv->nouv", p["W4"], d) + p["b4"][None, :, None, None]
    adj = adj * alpha + a_mat[None, None]                # (N, Cout, V, V)
    return jnp.einsum("ncuv,nctu->nctv", adj, x3)        # (N, Cout, T, V)


# ----------------------------------------------------------------------------
if __name__ == "__main__":
    N, C, T, V = 2, 4, 16, 16        # in_channels=4 <= 16 -> rel_channels = 8
    COUT = 16
    ALPHA = 0.5

    key = jax.random.PRNGKey(0)
    kx, kp, ka = jax.random.split(key, 3)
    x = jax.random.normal(kx, (N, C, T, V), dtype=jnp.float32)
    A = jax.random.normal(ka, (V, V), dtype=jnp.float32) * 0.2
    params = init_params(kp, C, COUT)

    fwd = jax.jit(lambda xx: ctrgc_forward(xx, params, A, ALPHA))
    out = jax.block_until_ready(fwd(x))

    assert out.shape == (N, COUT, T, V) and out.dtype == jnp.float32
    ref = reference_forward(x, params, A, ALPHA)
    # Tolerance accounts for the bf16 MXU operands of the aggregation matmul
    # (accumulation stays f32); everything else is exact f32.
    assert jnp.allclose(out, ref, atol=2e-2, rtol=2e-2), float(
        jnp.max(jnp.abs(out - ref)))

    print("KERNEL_OK")
</pallas_src>

<mosaic_0001>
module attributes {stable_mosaic.version = 11 : i64} {
  func.func @_merged_conv_kernel(%arg0: i32, %arg1: i32, %arg2: memref<1x4x256xf32, #tpu.memory_space<vmem>>, %arg3: memref<16x4xf32, #tpu.memory_space<vmem>>, %arg4: memref<16x1xf32, #tpu.memory_space<vmem>>, %arg5: memref<16x4xf32, #tpu.memory_space<vmem>>, %arg6: memref<16x1xf32, #tpu.memory_space<vmem>>, %arg7: memref<1x16x256xf32, #tpu.memory_space<vmem>>, %arg8: memref<1x16x256xf32, #tpu.memory_space<vmem>>) attributes {dimension_semantics = [#tpu.dimension_semantics<parallel>, #tpu.dimension_semantics<parallel>], iteration_bounds = array<i64: 2, 1>, scalar_prefetch = 0 : i64, scratch_operands = 0 : i64, tpu.core_type = #tpu.core_type<tc>, window_params = [{transform_indices = @transform_0, window_bounds = array<i64: 1, 4, 256>}, {pipeline_mode = #tpu.pipeline_mode<synchronous>, transform_indices = @transform_1, window_bounds = array<i64: 16, 4>}, {pipeline_mode = #tpu.pipeline_mode<synchronous>, transform_indices = @transform_2, window_bounds = array<i64: 16, 1>}, {pipeline_mode = #tpu.pipeline_mode<synchronous>, transform_indices = @transform_3, window_bounds = array<i64: 16, 4>}, {pipeline_mode = #tpu.pipeline_mode<synchronous>, transform_indices = @transform_4, window_bounds = array<i64: 16, 1>}, {transform_indices = @transform_5, window_bounds = array<i64: 1, 16, 256>}, {transform_indices = @transform_6, window_bounds = array<i64: 1, 16, 256>}]} {
    %c0 = arith.constant 0 : index
    %c0_0 = arith.constant 0 : index
    %c0_1 = arith.constant 0 : index
    %0 = vector.load %arg2[%c0, %c0_0, %c0_1] : memref<1x4x256xf32, #tpu.memory_space<vmem>>, vector<1x4x256xf32>
    %1 = vector.shape_cast %0 : vector<1x4x256xf32> to vector<4x256xf32>
    %c0_2 = arith.constant 0 : index
    %c0_3 = arith.constant 0 : index
    %2 = vector.load %arg3[%c0_2, %c0_3] : memref<16x4xf32, #tpu.memory_space<vmem>>, vector<16x4xf32>
    %cst = arith.constant dense<0.000000e+00> : vector<16x256xf32>
    %3 = tpu.matmul %2, %1, %cst {dimension_numbers = #tpu.dot_dimension_numbers<[1], [0], [0], [1], [0, 0, 1, 1], [], []>} : vector<16x4xf32>, vector<4x256xf32>, vector<16x256xf32> -> vector<16x256xf32>
    %c0_4 = arith.constant 0 : index
    %c0_5 = arith.constant 0 : index
    %4 = vector.load %arg4[%c0_4, %c0_5] : memref<16x1xf32, #tpu.memory_space<vmem>>, vector<16x1xf32>
    %5 = vector.broadcast %4 : vector<16x1xf32> to vector<16x256xf32>
    %6 = arith.addf %3, %5 : vector<16x256xf32>
    %c0_6 = arith.constant 0 : index
    %c0_7 = arith.constant 0 : index
    %c0_8 = arith.constant 0 : index
    %7 = vector.load %arg7[%c0_6, %c0_7, %c0_8] : memref<1x16x256xf32, #tpu.memory_space<vmem>>, vector<1x16x256xf32>
    %8 = vector.shape_cast %7 : vector<1x16x256xf32> to vector<16x256xf32>
    %9 = vector.shape_cast %6 : vector<16x256xf32> to vector<1x16x256xf32>
    tpu.vector_store %arg7[%c0_6, %c0_7, %c0_8], %9 {strides = array<i32>} : memref<1x16x256xf32, #tpu.memory_space<vmem>>, vector<1x16x256xf32>,
    %c0_9 = arith.constant 0 : index
    %c0_10 = arith.constant 0 : index
    %10 = vector.load %arg5[%c0_9, %c0_10] : memref<16x4xf32, #tpu.memory_space<vmem>>, vector<16x4xf32>
    %cst_11 = arith.constant dense<0.000000e+00> : vector<16x256xf32>
    %11 = tpu.matmul %10, %1, %cst_11 {dimension_numbers = #tpu.dot_dimension_numbers<[1], [0], [0], [1], [0, 0, 1, 1], [], []>} : vector<16x4xf32>, vector<4x256xf32>, vector<16x256xf32> -> vector<16x256xf32>
    %c0_12 = arith.constant 0 : index
    %c0_13 = arith.constant 0 : index
    %12 = vector.load %arg6[%c0_12, %c0_13] : memref<16x1xf32, #tpu.memory_space<vmem>>, vector<16x1xf32>
    %13 = vector.broadcast %12 : vector<16x1xf32> to vector<16x256xf32>
    %14 = arith.addf %11, %13 : vector<16x256xf32>
    %c0_14 = arith.constant 0 : index
    %c0_15 = arith.constant 0 : index
    %c0_16 = arith.constant 0 : index
    %15 = vector.load %arg8[%c0_14, %c0_15, %c0_16] : memref<1x16x256xf32, #tpu.memory_space<vmem>>, vector<1x16x256xf32>
    %16 = vector.shape_cast %15 : vector<1x16x256xf32> to vector<16x256xf32>
    %17 = vector.shape_cast %14 : vector<16x256xf32> to vector<1x16x256xf32>
    tpu.vector_store %arg8[%c0_14, %c0_15, %c0_16], %17 {strides = array<i32>} : memref<1x16x256xf32, #tpu.memory_space<vmem>>, vector<1x16x256xf32>,
    return
  }
  func.func @transform_0(%arg0: i32, %arg1: i32) -> (i32, i32, i32) {
    %c0_i32 = arith.constant 0 : i32
    %c0_i32_0 = arith.constant 0 : i32
    return %arg0, %c0_i32, %arg1 : i32, i32, i32
  }
  func.func @transform_1(%arg0: i32, %arg1: i32) -> (i32, i32) {
    %c0_i32 = arith.constant 0 : i32
    %c0_i32_0 = arith.constant 0 : i32
    %c0_i32_1 = arith.constant 0 : i32
    return %c0_i32, %c0_i32_0 : i32, i32
  }
  func.func @transform_2(%arg0: i32, %arg1: i32) -> (i32, i32) {
    %c0_i32 = arith.constant 0 : i32
    %c0_i32_0 = arith.constant 0 : i32
    %c0_i32_1 = arith.constant 0 : i32
    return %c0_i32, %c0_i32_0 : i32, i32
  }
  func.func @transform_3(%arg0: i32, %arg1: i32) -> (i32, i32) {
    %c0_i32 = arith.constant 0 : i32
    %c0_i32_0 = arith.constant 0 : i32
    %c0_i32_1 = arith.constant 0 : i32
    return %c0_i32, %c0_i32_0 : i32, i32
  }
  func.func @transform_4(%arg0: i32, %arg1: i32) -> (i32, i32) {
    %c0_i32 = arith.constant 0 : i32
    %c0_i32_0 = arith.constant 0 : i32
    %c0_i32_1 = arith.constant 0 : i32
    return %c0_i32, %c0_i32_0 : i32, i32
  }
  func.func @transform_5(%arg0: i32, %arg1: i32) -> (i32, i32, i32) {
    %c0_i32 = arith.constant 0 : i32
    %c0_i32_0 = arith.constant 0 : i32
    return %arg0, %c0_i32, %arg1 : i32, i32, i32
  }
  func.func @transform_6(%arg0: i32, %arg1: i32) -> (i32, i32, i32) {
    %c0_i32 = arith.constant 0 : i32
    %c0_i32_0 = arith.constant 0 : i32
    return %arg0, %c0_i32, %arg1 : i32, i32, i32
  }
}

module attributes {stable_mosaic.version = 11 : i64} {
  func.func @_adj_aggregate_kernel(%arg0: i32, %arg1: memref<2x8x16xf32, #tpu.memory_space<vmem>>, %arg2: memref<2x8x16xf32, #tpu.memory_space<vmem>>, %arg3: memref<2x16x16x16xf32, #tpu.memory_space<vmem>>, %arg4: memref<16x8xf32, #tpu.memory_space<vmem>>, %arg5: memref<16x16x16xf32, #tpu.memory_space<vmem>>, %arg6: memref<2x16x16x16xf32, #tpu.memory_space<vmem>>) attributes {dimension_semantics = [#tpu.dimension_semantics<parallel>], iteration_bounds = array<i64: 1>, scalar_prefetch = 0 : i64, scratch_operands = 0 : i64, tpu.core_type = #tpu.core_type<tc>, window_params = [{transform_indices = @transform_0, window_bounds = array<i64: 2, 8, 16>}, {transform_indices = @transform_1, window_bounds = array<i64: 2, 8, 16>}, {transform_indices = @transform_2, window_bounds = array<i64: 2, 16, 16, 16>}, {pipeline_mode = #tpu.pipeline_mode<synchronous>, transform_indices = @transform_3, window_bounds = array<i64: 16, 8>}, {pipeline_mode = #tpu.pipeline_mode<synchronous>, transform_indices = @transform_4, window_bounds = array<i64: 16, 16, 16>}, {transform_indices = @transform_5, window_bounds = array<i64: 2, 16, 16, 16>}]} {
    %c0 = arith.constant 0 : index
    %c0_0 = arith.constant 0 : index
    %0 = vector.load %arg4[%c0, %c0_0] : memref<16x8xf32, #tpu.memory_space<vmem>>, vector<16x8xf32>
    %c0_1 = arith.constant 0 : index
    %c0_2 = arith.constant 0 : index
    %c0_3 = arith.constant 0 : index
    %1 = vector.load %arg5[%c0_1, %c0_2, %c0_3] : memref<16x16x16xf32, #tpu.memory_space<vmem>>, vector<16x16x16xf32>
    %c0_4 = arith.constant 0 : index
    %c0_5 = arith.constant 0 : index
    %c0_6 = arith.constant 0 : index
    %2 = vector.load %arg1[%c0_4, %c0_5, %c0_6] : memref<2x8x16xf32, #tpu.memory_space<vmem>>, vector<1x8x16xf32>
    %3 = vector.shape_cast %2 : vector<1x8x16xf32> to vector<8x16xf32>
    %c0_7 = arith.constant 0 : index
    %c0_8 = arith.constant 0 : index
    %c0_9 = arith.constant 0 : index
    %4 = vector.load %arg2[%c0_7, %c0_8, %c0_9] : memref<2x8x16xf32, #tpu.memory_space<vmem>>, vector<1x8x16xf32>
    %5 = vector.shape_cast %4 : vector<1x8x16xf32> to vector<8x16xf32>
    %6 = vector.shape_cast %3 : vector<8x16xf32> to vector<8x16x1xf32>
    %7 = vector.shape_cast %5 : vector<8x16xf32> to vector<8x1x16xf32>
    %8 = vector.broadcast %6 : vector<8x16x1xf32> to vector<8x16x16xf32>
    %9 = vector.broadcast %7 : vector<8x1x16xf32> to vector<8x16x16xf32>
    %10 = arith.subf %8, %9 : vector<8x16x16xf32>
    %11 = math.tanh %10 : vector<8x16x16xf32>
    %12 = vector.extract_strided_slice %0 {offsets = [0, 0], sizes = [16, 1], strides = [1, 1]} : vector<16x8xf32> to vector<16x1xf32>
    %13 = vector.shape_cast %12 : vector<16x1xf32> to vector<16x1x1xf32>
    %14 = vector.extract_strided_slice %11 {offsets = [0, 0, 0], sizes = [1, 16, 16], strides = [1, 1, 1]} : vector<8x16x16xf32> to vector<1x16x16xf32>
    %15 = vector.shape_cast %14 : vector<1x16x16xf32> to vector<16x16xf32>
    %16 = vector.shape_cast %15 : vector<16x16xf32> to vector<1x16x16xf32>
    %17 = vector.broadcast %13 : vector<16x1x1xf32> to vector<16x16x16xf32>
    %18 = vector.broadcast %16 : vector<1x16x16xf32> to vector<16x16x16xf32>
    %19 = arith.mulf %17, %18 : vector<16x16x16xf32>
    %20 = arith.addf %1, %19 : vector<16x16x16xf32>
    %21 = vector.extract_strided_slice %0 {offsets = [0, 1], sizes = [16, 1], strides = [1, 1]} : vector<16x8xf32> to vector<16x1xf32>
    %22 = vector.shape_cast %21 : vector<16x1xf32> to vector<16x1x1xf32>
    %23 = vector.extract_strided_slice %11 {offsets = [1, 0, 0], sizes = [1, 16, 16], strides = [1, 1, 1]} : vector<8x16x16xf32> to vector<1x16x16xf32>
    %24 = vector.shape_cast %23 : vector<1x16x16xf32> to vector<16x16xf32>
    %25 = vector.shape_cast %24 : vector<16x16xf32> to vector<1x16x16xf32>
    %26 = vector.broadcast %22 : vector<16x1x1xf32> to vector<16x16x16xf32>
    %27 = vector.broadcast %25 : vector<1x16x16xf32> to vector<16x16x16xf32>
    %28 = arith.mulf %26, %27 : vector<16x16x16xf32>
    %29 = arith.addf %20, %28 : vector<16x16x16xf32>
    %30 = vector.extract_strided_slice %0 {offsets = [0, 2], sizes = [16, 1], strides = [1, 1]} : vector<16x8xf32> to vector<16x1xf32>
    %31 = vector.shape_cast %30 : vector<16x1xf32> to vector<16x1x1xf32>
    %32 = vector.extract_strided_slice %11 {offsets = [2, 0, 0], sizes = [1, 16, 16], strides = [1, 1, 1]} : vector<8x16x16xf32> to vector<1x16x16xf32>
    %33 = vector.shape_cast %32 : vector<1x16x16xf32> to vector<16x16xf32>
    %34 = vector.shape_cast %33 : vector<16x16xf32> to vector<1x16x16xf32>
    %35 = vector.broadcast %31 : vector<16x1x1xf32> to vector<16x16x16xf32>
    %36 = vector.broadcast %34 : vector<1x16x16xf32> to vector<16x16x16xf32>
    %37 = arith.mulf %35, %36 : vector<16x16x16xf32>
    %38 = arith.addf %29, %37 : vector<16x16x16xf32>
    %39 = vector.extract_strided_slice %0 {offsets = [0, 3], sizes = [16, 1], strides = [1, 1]} : vector<16x8xf32> to vector<16x1xf32>
    %40 = vector.shape_cast %39 : vector<16x1xf32> to vector<16x1x1xf32>
    %41 = vector.extract_strided_slice %11 {offsets = [3, 0, 0], sizes = [1, 16, 16], strides = [1, 1, 1]} : vector<8x16x16xf32> to vector<1x16x16xf32>
    %42 = vector.shape_cast %41 : vector<1x16x16xf32> to vector<16x16xf32>
    %43 = vector.shape_cast %42 : vector<16x16xf32> to vector<1x16x16xf32>
    %44 = vector.broadcast %40 : vector<16x1x1xf32> to vector<16x16x16xf32>
    %45 = vector.broadcast %43 : vector<1x16x16xf32> to vector<16x16x16xf32>
    %46 = arith.mulf %44, %45 : vector<16x16x16xf32>
    %47 = arith.addf %38, %46 : vector<16x16x16xf32>
    %48 = vector.extract_strided_slice %0 {offsets = [0, 4], sizes = [16, 1], strides = [1, 1]} : vector<16x8xf32> to vector<16x1xf32>
    %49 = vector.shape_cast %48 : vector<16x1xf32> to vector<16x1x1xf32>
    %50 = vector.extract_strided_slice %11 {offsets = [4, 0, 0], sizes = [1, 16, 16], strides = [1, 1, 1]} : vector<8x16x16xf32> to vector<1x16x16xf32>
    %51 = vector.shape_cast %50 : vector<1x16x16xf32> to vector<16x16xf32>
    %52 = vector.shape_cast %51 : vector<16x16xf32> to vector<1x16x16xf32>
    %53 = vector.broadcast %49 : vector<16x1x1xf32> to vector<16x16x16xf32>
    %54 = vector.broadcast %52 : vector<1x16x16xf32> to vector<16x16x16xf32>
    %55 = arith.mulf %53, %54 : vector<16x16x16xf32>
    %56 = arith.addf %47, %55 : vector<16x16x16xf32>
    %57 = vector.extract_strided_slice %0 {offsets = [0, 5], sizes = [16, 1], strides = [1, 1]} : vector<16x8xf32> to vector<16x1xf32>
    %58 = vector.shape_cast %57 : vector<16x1xf32> to vector<16x1x1xf32>
    %59 = vector.extract_strided_slice %11 {offsets = [5, 0, 0], sizes = [1, 16, 16], strides = [1, 1, 1]} : vector<8x16x16xf32> to vector<1x16x16xf32>
    %60 = vector.shape_cast %59 : vector<1x16x16xf32> to vector<16x16xf32>
    %61 = vector.shape_cast %60 : vector<16x16xf32> to vector<1x16x16xf32>
    %62 = vector.broadcast %58 : vector<16x1x1xf32> to vector<16x16x16xf32>
    %63 = vector.broadcast %61 : vector<1x16x16xf32> to vector<16x16x16xf32>
    %64 = arith.mulf %62, %63 : vector<16x16x16xf32>
    %65 = arith.addf %56, %64 : vector<16x16x16xf32>
    %66 = vector.extract_strided_slice %0 {offsets = [0, 6], sizes = [16, 1], strides = [1, 1]} : vector<16x8xf32> to vector<16x1xf32>
    %67 = vector.shape_cast %66 : vector<16x1xf32> to vector<16x1x1xf32>
    %68 = vector.extract_strided_slice %11 {offsets = [6, 0, 0], sizes = [1, 16, 16], strides = [1, 1, 1]} : vector<8x16x16xf32> to vector<1x16x16xf32>
    %69 = vector.shape_cast %68 : vector<1x16x16xf32> to vector<16x16xf32>
    %70 = vector.shape_cast %69 : vector<16x16xf32> to vector<1x16x16xf32>
    %71 = vector.broadcast %67 : vector<16x1x1xf32> to vector<16x16x16xf32>
    %72 = vector.broadcast %70 : vector<1x16x16xf32> to vector<16x16x16xf32>
    %73 = arith.mulf %71, %72 : vector<16x16x16xf32>
    %74 = arith.addf %65, %73 : vector<16x16x16xf32>
    %75 = vector.extract_strided_slice %0 {offsets = [0, 7], sizes = [16, 1], strides = [1, 1]} : vector<16x8xf32> to vector<16x1xf32>
    %76 = vector.shape_cast %75 : vector<16x1xf32> to vector<16x1x1xf32>
    %77 = vector.extract_strided_slice %11 {offsets = [7, 0, 0], sizes = [1, 16, 16], strides = [1, 1, 1]} : vector<8x16x16xf32> to vector<1x16x16xf32>
    %78 = vector.shape_cast %77 : vector<1x16x16xf32> to vector<16x16xf32>
    %79 = vector.shape_cast %78 : vector<16x16xf32> to vector<1x16x16xf32>
    %80 = vector.broadcast %76 : vector<16x1x1xf32> to vector<16x16x16xf32>
    %81 = vector.broadcast %79 : vector<1x16x16xf32> to vector<16x16x16xf32>
    %82 = arith.mulf %80, %81 : vector<16x16x16xf32>
    %83 = arith.addf %74, %82 : vector<16x16x16xf32>
    %c0_10 = arith.constant 0 : index
    %c0_11 = arith.constant 0 : index
    %c0_12 = arith.constant 0 : index
    %c0_13 = arith.constant 0 : index
    %84 = vector.load %arg3[%c0_10, %c0_11, %c0_12, %c0_13] : memref<2x16x16x16xf32, #tpu.memory_space<vmem>>, vector<1x16x16x16xf32>
    %85 = vector.shape_cast %84 : vector<1x16x16x16xf32> to vector<16x16x16xf32>
    %86 = arith.truncf %85 : vector<16x16x16xf32> to vector<16x16x16xbf16>
    %87 = arith.truncf %83 : vector<16x16x16xf32> to vector<16x16x16xbf16>
    "tpu.trace_start"() <{level = 10 : i32, message = "ctu,cuv->ctv"}> : () -> ()
    %cst = arith.constant dense<0.000000e+00> : vector<16x16x16xf32>
    %88 = tpu.matmul %86, %87, %cst {dimension_numbers = #tpu.dot_dimension_numbers<[2], [1], [1], [2], [0, 0, 0, 1, 1, 2], [0], [0]>} : vector<16x16x16xbf16>, vector<16x16x16xbf16>, vector<16x16x16xf32> -> vector<16x16x16xf32>
    "tpu.trace_stop"() : () -> ()
    %c0_14 = arith.constant 0 : index
    %c0_15 = arith.constant 0 : index
    %c0_16 = arith.constant 0 : index
    %c0_17 = arith.constant 0 : index
    %89 = vector.load %arg6[%c0_14, %c0_15, %c0_16, %c0_17] : memref<2x16x16x16xf32, #tpu.memory_space<vmem>>, vector<1x16x16x16xf32>
    %90 = vector.shape_cast %89 : vector<1x16x16x16xf32> to vector<16x16x16xf32>
    %91 = vector.shape_cast %88 : vector<16x16x16xf32> to vector<1x16x16x16xf32>
    tpu.vector_store %arg6[%c0_14, %c0_15, %c0_16, %c0_17], %91 {strides = array<i32>} : memref<2x16x16x16xf32, #tpu.memory_space<vmem>>, vector<1x16x16x16xf32>,
    %c1 = arith.constant 1 : index
    %c0_18 = arith.constant 0 : index
    %c0_19 = arith.constant 0 : index
    %92 = vector.load %arg1[%c1, %c0_18, %c0_19] : memref<2x8x16xf32, #tpu.memory_space<vmem>>, vector<1x8x16xf32>
    %93 = vector.shape_cast %92 : vector<1x8x16xf32> to vector<8x16xf32>
    %c1_20 = arith.constant 1 : index
    %c0_21 = arith.constant 0 : index
    %c0_22 = arith.constant 0 : index
    %94 = vector.load %arg2[%c1_20, %c0_21, %c0_22] : memref<2x8x16xf32, #tpu.memory_space<vmem>>, vector<1x8x16xf32>
    %95 = vector.shape_cast %94 : vector<1x8x16xf32> to vector<8x16xf32>
    %96 = vector.shape_cast %93 : vector<8x16xf32> to vector<8x16x1xf32>
    %97 = vector.shape_cast %95 : vector<8x16xf32> to vector<8x1x16xf32>
    %98 = vector.broadcast %96 : vector<8x16x1xf32> to vector<8x16x16xf32>
    %99 = vector.broadcast %97 : vector<8x1x16xf32> to vector<8x16x16xf32>
    %100 = arith.subf %98, %99 : vector<8x16x16xf32>
    %101 = math.tanh %100 : vector<8x16x16xf32>
    %102 = vector.extract_strided_slice %0 {offsets = [0, 0], sizes = [16, 1], strides = [1, 1]} : vector<16x8xf32> to vector<16x1xf32>
    %103 = vector.shape_cast %102 : vector<16x1xf32> to vector<16x1x1xf32>
    %104 = vector.extract_strided_slice %101 {offsets = [0, 0, 0], sizes = [1, 16, 16], strides = [1, 1, 1]} : vector<8x16x16xf32> to vector<1x16x16xf32>
    %105 = vector.shape_cast %104 : vector<1x16x16xf32> to vector<16x16xf32>
    %106 = vector.shape_cast %105 : vector<16x16xf32> to vector<1x16x16xf32>
    %107 = vector.broadcast %103 : vector<16x1x1xf32> to vector<16x16x16xf32>
    %108 = vector.broadcast %106 : vector<1x16x16xf32> to vector<16x16x16xf32>
    %109 = arith.mulf %107, %108 : vector<16x16x16xf32>
    %110 = arith.addf %1, %109 : vector<16x16x16xf32>
    %111 = vector.extract_strided_slice %0 {offsets = [0, 1], sizes = [16, 1], strides = [1, 1]} : vector<16x8xf32> to vector<16x1xf32>
    %112 = vector.shape_cast %111 : vector<16x1xf32> to vector<16x1x1xf32>
    %113 = vector.extract_strided_slice %101 {offsets = [1, 0, 0], sizes = [1, 16, 16], strides = [1, 1, 1]} : vector<8x16x16xf32> to vector<1x16x16xf32>
    %114 = vector.shape_cast %113 : vector<1x16x16xf32> to vector<16x16xf32>
    %115 = vector.shape_cast %114 : vector<16x16xf32> to vector<1x16x16xf32>
    %116 = vector.broadcast %112 : vector<16x1x1xf32> to vector<16x16x16xf32>
    %117 = vector.broadcast %115 : vector<1x16x16xf32> to vector<16x16x16xf32>
    %118 = arith.mulf %116, %117 : vector<16x16x16xf32>
    %119 = arith.addf %110, %118 : vector<16x16x16xf32>
    %120 = vector.extract_strided_slice %0 {offsets = [0, 2], sizes = [16, 1], strides = [1, 1]} : vector<16x8xf32> to vector<16x1xf32>
    %121 = vector.shape_cast %120 : vector<16x1xf32> to vector<16x1x1xf32>
    %122 = vector.extract_strided_slice %101 {offsets = [2, 0, 0], sizes = [1, 16, 16], strides = [1, 1, 1]} : vector<8x16x16xf32> to vector<1x16x16xf32>
    %123 = vector.shape_cast %122 : vector<1x16x16xf32> to vector<16x16xf32>
    %124 = vector.shape_cast %123 : vector<16x16xf32> to vector<1x16x16xf32>
    %125 = vector.broadcast %121 : vector<16x1x1xf32> to vector<16x16x16xf32>
    %126 = vector.broadcast %124 : vector<1x16x16xf32> to vector<16x16x16xf32>
    %127 = arith.mulf %125, %126 : vector<16x16x16xf32>
    %128 = arith.addf %119, %127 : vector<16x16x16xf32>
    %129 = vector.extract_strided_slice %0 {offsets = [0, 3], sizes = [16, 1], strides = [1, 1]} : vector<16x8xf32> to vector<16x1xf32>
    %130 = vector.shape_cast %129 : vector<16x1xf32> to vector<16x1x1xf32>
    %131 = vector.extract_strided_slice %101 {offsets = [3, 0, 0], sizes = [1, 16, 16], strides = [1, 1, 1]} : vector<8x16x16xf32> to vector<1x16x16xf32>
    %132 = vector.shape_cast %131 : vector<1x16x16xf32> to vector<16x16xf32>
    %133 = vector.shape_cast %132 : vector<16x16xf32> to vector<1x16x16xf32>
    %134 = vector.broadcast %130 : vector<16x1x1xf32> to vector<16x16x16xf32>
    %135 = vector.broadcast %133 : vector<1x16x16xf32> to vector<16x16x16xf32>
    %136 = arith.mulf %134, %135 : vector<16x16x16xf32>
    %137 = arith.addf %128, %136 : vector<16x16x16xf32>
    %138 = vector.extract_strided_slice %0 {offsets = [0, 4], sizes = [16, 1], strides = [1, 1]} : vector<16x8xf32> to vector<16x1xf32>
    %139 = vector.shape_cast %138 : vector<16x1xf32> to vector<16x1x1xf32>
    %140 = vector.extract_strided_slice %101 {offsets = [4, 0, 0], sizes = [1, 16, 16], strides = [1, 1, 1]} : vector<8x16x16xf32> to vector<1x16x16xf32>
    %141 = vector.shape_cast %140 : vector<1x16x16xf32> to vector<16x16xf32>
    %142 = vector.shape_cast %141 : vector<16x16xf32> to vector<1x16x16xf32>
    %143 = vector.broadcast %139 : vector<16x1x1xf32> to vector<16x16x16xf32>
    %144 = vector.broadcast %142 : vector<1x16x16xf32> to vector<16x16x16xf32>
    %145 = arith.mulf %143, %144 : vector<16x16x16xf32>
    %146 = arith.addf %137, %145 : vector<16x16x16xf32>
    %147 = vector.extract_strided_slice %0 {offsets = [0, 5], sizes = [16, 1], strides = [1, 1]} : vector<16x8xf32> to vector<16x1xf32>
    %148 = vector.shape_cast %147 : vector<16x1xf32> to vector<16x1x1xf32>
    %149 = vector.extract_strided_slice %101 {offsets = [5, 0, 0], sizes = [1, 16, 16], strides = [1, 1, 1]} : vector<8x16x16xf32> to vector<1x16x16xf32>
    %150 = vector.shape_cast %149 : vector<1x16x16xf32> to vector<16x16xf32>
    %151 = vector.shape_cast %150 : vector<16x16xf32> to vector<1x16x16xf32>
    %152 = vector.broadcast %148 : vector<16x1x1xf32> to vector<16x16x16xf32>
    %153 = vector.broadcast %151 : vector<1x16x16xf32> to vector<16x16x16xf32>
    %154 = arith.mulf %152, %153 : vector<16x16x16xf32>
    %155 = arith.addf %146, %154 : vector<16x16x16xf32>
    %156 = vector.extract_strided_slice %0 {offsets = [0, 6], sizes = [16, 1], strides = [1, 1]} : vector<16x8xf32> to vector<16x1xf32>
    %157 = vector.shape_cast %156 : vector<16x1xf32> to vector<16x1x1xf32>
    %158 = vector.extract_strided_slice %101 {offsets = [6, 0, 0], sizes = [1, 16, 16], strides = [1, 1, 1]} : vector<8x16x16xf32> to vector<1x16x16xf32>
    %159 = vector.shape_cast %158 : vector<1x16x16xf32> to vector<16x16xf32>
    %160 = vector.shape_cast %159 : vector<16x16xf32> to vector<1x16x16xf32>
    %161 = vector.broadcast %157 : vector<16x1x1xf32> to vector<16x16x16xf32>
    %162 = vector.broadcast %160 : vector<1x16x16xf32> to vector<16x16x16xf32>
    %163 = arith.mulf %161, %162 : vector<16x16x16xf32>
    %164 = arith.addf %155, %163 : vector<16x16x16xf32>
    %165 = vector.extract_strided_slice %0 {offsets = [0, 7], sizes = [16, 1], strides = [1, 1]} : vector<16x8xf32> to vector<16x1xf32>
    %166 = vector.shape_cast %165 : vector<16x1xf32> to vector<16x1x1xf32>
    %167 = vector.extract_strided_slice %101 {offsets = [7, 0, 0], sizes = [1, 16, 16], strides = [1, 1, 1]} : vector<8x16x16xf32> to vector<1x16x16xf32>
    %168 = vector.shape_cast %167 : vector<1x16x16xf32> to vector<16x16xf32>
    %169 = vector.shape_cast %168 : vector<16x16xf32> to vector<1x16x16xf32>
    %170 = vector.broadcast %166 : vector<16x1x1xf32> to vector<16x16x16xf32>
    %171 = vector.broadcast %169 : vector<1x16x16xf32> to vector<16x16x16xf32>
    %172 = arith.mulf %170, %171 : vector<16x16x16xf32>
    %173 = arith.addf %164, %172 : vector<16x16x16xf32>
    %c1_23 = arith.constant 1 : index
    %c0_24 = arith.constant 0 : index
    %c0_25 = arith.constant 0 : index
    %c0_26 = arith.constant 0 : index
    %174 = vector.load %arg3[%c1_23, %c0_24, %c0_25, %c0_26] : memref<2x16x16x16xf32, #tpu.memory_space<vmem>>, vector<1x16x16x16xf32>
    %175 = vector.shape_cast %174 : vector<1x16x16x16xf32> to vector<16x16x16xf32>
    %176 = arith.truncf %175 : vector<16x16x16xf32> to vector<16x16x16xbf16>
    %177 = arith.truncf %173 : vector<16x16x16xf32> to vector<16x16x16xbf16>
    "tpu.trace_start"() <{level = 10 : i32, message = "ctu,cuv->ctv"}> : () -> ()
    %cst_27 = arith.constant dense<0.000000e+00> : vector<16x16x16xf32>
    %178 = tpu.matmul %176, %177, %cst_27 {dimension_numbers = #tpu.dot_dimension_numbers<[2], [1], [1], [2], [0, 0, 0, 1, 1, 2], [0], [0]>} : vector<16x16x16xbf16>, vector<16x16x16xbf16>, vector<16x16x16xf32> -> vector<16x16x16xf32>
    "tpu.trace_stop"() : () -> ()
    %c1_28 = arith.constant 1 : index
    %c0_29 = arith.constant 0 : index
    %c0_30 = arith.constant 0 : index
    %c0_31 = arith.constant 0 : index
    %179 = vector.load %arg6[%c1_28, %c0_29, %c0_30, %c0_31] : memref<2x16x16x16xf32, #tpu.memory_space<vmem>>, vector<1x16x16x16xf32>
    %180 = vector.shape_cast %179 : vector<1x16x16x16xf32> to vector<16x16x16xf32>
    %181 = vector.shape_cast %178 : vector<16x16x16xf32> to vector<1x16x16x16xf32>
    tpu.vector_store %arg6[%c1_28, %c0_29, %c0_30, %c0_31], %181 {strides = array<i32>} : memref<2x16x16x16xf32, #tpu.memory_space<vmem>>, vector<1x16x16x16xf32>,
    return
  }
  func.func @transform_0(%arg0: i32) -> (i32, i32, i32) {
    %c0_i32 = arith.constant 0 : i32
    %c0_i32_0 = arith.constant 0 : i32
    %c0_i32_1 = arith.constant 0 : i32
    return %arg0, %c0_i32, %c0_i32_0 : i32, i32, i32
  }
  func.func @transform_1(%arg0: i32) -> (i32, i32, i32) {
    %c0_i32 = arith.constant 0 : i32
    %c0_i32_0 = arith.constant 0 : i32
    %c0_i32_1 = arith.constant 0 : i32
    return %arg0, %c0_i32, %c0_i32_0 : i32, i32, i32
  }
  func.func @transform_2(%arg0: i32) -> (i32, i32, i32, i32) {
    %c0_i32 = arith.constant 0 : i32
    %c0_i32_0 = arith.constant 0 : i32
    %c0_i32_1 = arith.constant 0 : i32
    %c0_i32_2 = arith.constant 0 : i32
    return %arg0, %c0_i32, %c0_i32_0, %c0_i32_1 : i32, i32, i32, i32
  }
  func.func @transform_3(%arg0: i32) -> (i32, i32) {
    %c0_i32 = arith.constant 0 : i32
    %c0_i32_0 = arith.constant 0 : i32
    %c0_i32_1 = arith.constant 0 : i32
    return %c0_i32, %c0_i32_0 : i32, i32
  }
  func.func @transform_4(%arg0: i32) -> (i32, i32, i32) {
    %c0_i32 = arith.constant 0 : i32
    %c0_i32_0 = arith.constant 0 : i32
    %c0_i32_1 = arith.constant 0 : i32
    %c0_i32_2 = arith.constant 0 : i32
    return %c0_i32, %c0_i32_0, %c0_i32_1 : i32, i32, i32
  }
  func.func @transform_5(%arg0: i32) -> (i32, i32, i32, i32) {
    %c0_i32 = arith.constant 0 : i32
    %c0_i32_0 = arith.constant 0 : i32
    %c0_i32_1 = arith.constant 0 : i32
    %c0_i32_2 = arith.constant 0 : i32
    return %arg0, %c0_i32, %c0_i32_0, %c0_i32_1 : i32, i32, i32, i32
  }
}

</mosaic_0001>

<llo_original>
// kernel: _lambda_.2
$region0: #{_lambda_.2}
  #allocation0 [shape = 'u32[]', space=smem, size = 0x4, offset = 0x4, fixed_abs, tag = 'smem constant byte address 0x4 - core index']
  #allocation1 [shape = 'u32[144,128]{1,0:T(1,128)}', space=vmem, size = 0x12000, scoped, tag = 'internal scratch']
  %s0 = inlined_call_operand.vmem [shape: f32[2,4,256], index: 0, kind: input, shape index: {}]
  %s1 = inlined_call_operand.vmem [shape: f32[16,4], index: 1, kind: input, shape index: {}]
  %s2 = inlined_call_operand.vmem [shape: f32[16,1], index: 2, kind: input, shape index: {}]
  %s3 = inlined_call_operand.vmem [shape: f32[16,4], index: 3, kind: input, shape index: {}]
  %s4 = inlined_call_operand.vmem [shape: f32[16,1], index: 4, kind: input, shape index: {}]
  %s5 = inlined_call_operand.vmem [shape: f32[2,16,256], index: 5, kind: output, shape index: {0}]
  %s6 = inlined_call_operand.vmem [shape: f32[2,16,256], index: 6, kind: output, shape index: {1}]
  %7 = xla_tuple %s5, %s6
  %s8 = sld [smem:[#allocation0]]
  $region61: #{_lambda_.2} parent=0
    _
  %s10 = ssub.s32 1, %s8
  %s11 = scalar_select 0, %s10, %s8
  loop: start=0, step=1, limit=4
  $region2: #{_lambda_.2} parent=0 // loop_pre_header
    _
  $region3: #{_lambda_.2} parent=0 // loop_header
    %s13 = sphi 0, %s17
    %p14 = scmp.ge.s32.totalorder %s13, 4
    %s20 = sphi 0, %s32
    %s21 = sphi 0, %s28
    %s22 = sphi 0, %s20
    %s23 = sphi 0, %s21
    %s24 = sphi 0, %s22
    %s25 = sphi 0, %s23
    %s37 = sphi 0, %s39
    %s40 = sphi 0, %s37
    %s41 = sphi 0, %s40
    %s57 = sphi 0, %s41
    %s61 = sphi 0, %s61
    %s63 = sphi 0, %s61
    %s64 = sphi 0, %s63
    %s78 = sphi 0, %s64
    %s82 = sphi 0, %s82
    %s84 = sphi 0, %s82
    %s85 = sphi 0, %s84
    %s99 = sphi 0, %s85
    %s103 = sphi 0, %s103
    %s105 = sphi 0, %s103
    %s106 = sphi 0, %s105
    %s120 = sphi 0, %s106
    %s124 = sphi 0, %s124
    %s126 = sphi 0, %s124
    %s127 = sphi 0, %s126
    %s141 = sphi 0, %s127
    %s149 = sphi 0, %s151
    %s152 = sphi 0, %s149
    %s153 = sphi 0, %s152
    %s169 = sphi 0, %s153
    %s177 = sphi 0, %s179
    %s180 = sphi 0, %s177
    %s181 = sphi 0, %s180
    %s197 = sphi 0, %s181
  $region4: #{_lambda_.2} parent=0 // loop_header_branch
    %16 = sbr.rel (%p14) target = $region8
  $region5: #{_lambda_.2} parent=0 // loop_body
    %s18 = ssub.s32 %s13, 1
    %s19 = ssub.s32 %s13, 2
    %s26 = sadd.s32 1, %s21
    %p27 = scmp.ge.s32.totalorder %s26, 1
    %s28 = scalar_select %p27, 0, %s26
    %s29 = sadd.s32 1, %s20
    %s30 = scalar_select %p27, %s29, %s20
    %p31 = scmp.ge.s32.totalorder %s30, 2
    %s32 = scalar_select %p31, 0, %s30
    %s33 = ssub.s32 %s20, %s32
    %s34 = ssub.s32 %s21, %s28
    %s35 = sor.u32 %s33, %s34
    %p36 = scmp.eq.s32.totalorder %s35, 0
    %s38 = sadd.s32 %s37, 1
    %s39 = scalar_select %p36, %s37, %s38
    %p42 = pneg %p36
    %p43 = scmp.eq.s32.totalorder %s13, 1
    %p44 = por %p42, %p43
    %p45 = scmp.ne.s32.totalorder %s37, %s40
    %p46 = scmp.eq.s32.totalorder %s13, 0
    %p47 = por %p45, %p46
    %p48 = scmp.ne.s32.totalorder %s37, %s40
    %p49 = scmp.eq.s32.totalorder %s18, 1
    %p50 = por %p48, %p49
    %p51 = scmp.ne.s32.totalorder %s40, %s41
    %p52 = scmp.eq.s32.totalorder %s18, 0
    %p53 = por %p51, %p52
    %p54 = scmp.ne.s32.totalorder %s40, %s41
    %p55 = scmp.eq.s32.totalorder %s19, 1
    %p56 = por %p54, %p55
    %p58 = scmp.ne.s32.totalorder %s41, %s57
    %p59 = scmp.eq.s32.totalorder %s19, 0
    %p60 = por %p58, %p59
    %s62 = sadd.s32 %s61, 1
    %p65 = scmp.eq.s32.totalorder %s13, 1
    %p66 = scmp.ne.s32.totalorder %s61, %s63
    %p67 = scmp.eq.s32.totalorder %s13, 0
    %p68 = por %p66, %p67
    %p69 = scmp.ne.s32.totalorder %s61, %s63
    %p70 = scmp.eq.s32.totalorder %s18, 1
    %p71 = por %p69, %p70
    %p72 = scmp.ne.s32.totalorder %s63, %s64
    %p73 = scmp.eq.s32.totalorder %s18, 0
    %p74 = por %p72, %p73
    %p75 = scmp.ne.s32.totalorder %s63, %s64
    %p76 = scmp.eq.s32.totalorder %s19, 1
    %p77 = por %p75, %p76
    %p79 = scmp.ne.s32.totalorder %s64, %s78
    %p80 = scmp.eq.s32.totalorder %s19, 0
    %p81 = por %p79, %p80
    %s83 = sadd.s32 %s82, 1
    %p86 = scmp.eq.s32.totalorder %s13, 1
    %p87 = scmp.ne.s32.totalorder %s82, %s84
    %p88 = scmp.eq.s32.totalorder %s13, 0
    %p89 = por %p87, %p88
    %p90 = scmp.ne.s32.totalorder %s82, %s84
    %p91 = scmp.eq.s32.totalorder %s18, 1
    %p92 = por %p90, %p91
    %p93 = scmp.ne.s32.totalorder %s84, %s85
    %p94 = scmp.eq.s32.totalorder %s18, 0
    %p95 = por %p93, %p94
    %p96 = scmp.ne.s32.totalorder %s84, %s85
    %p97 = scmp.eq.s32.totalorder %s19, 1
    %p98 = por %p96, %p97
    %p100 = scmp.ne.s32.totalorder %s85, %s99
    %p101 = scmp.eq.s32.totalorder %s19, 0
    %p102 = por %p100, %p101
    %s104 = sadd.s32 %s103, 1
    %p107 = scmp.eq.s32.totalorder %s13, 1
    %p108 = scmp.ne.s32.totalorder %s103, %s105
    %p109 = scmp.eq.s32.totalorder %s13, 0
    %p110 = por %p108, %p109
    %p111 = scmp.ne.s32.totalorder %s103, %s105
    %p112 = scmp.eq.s32.totalorder %s18, 1
    %p113 = por %p111, %p112
    %p114 = scmp.ne.s32.totalorder %s105, %s106
    %p115 = scmp.eq.s32.totalorder %s18, 0
    %p116 = por %p114, %p115
    %p117 = scmp.ne.s32.totalorder %s105, %s106
    %p118 = scmp.eq.s32.totalorder %s19, 1
    %p119 = por %p117, %p118
    %p121 = scmp.ne.s32.totalorder %s106, %s120
    %p122 = scmp.eq.s32.totalorder %s19, 0
    %p123 = por %p121, %p122
    %s125 = sadd.s32 %s124, 1
    %p128 = scmp.eq.s32.totalorder %s13, 1
    %p129 = scmp.ne.s32.totalorder %s124, %s126
    %p130 = scmp.eq.s32.totalorder %s13, 0
    %p131 = por %p129, %p130
    %p132 = scmp.ne.s32.totalorder %s124, %s126
    %p133 = scmp.eq.s32.totalorder %s18, 1
    %p134 = por %p132, %p133
    %p135 = scmp.ne.s32.totalorder %s126, %s127
    %p136 = scmp.eq.s32.totalorder %s18, 0
    %p137 = por %p135, %p136
    %p138 = scmp.ne.s32.totalorder %s126, %s127
    %p139 = scmp.eq.s32.totalorder %s19, 1
    %p140 = por %p138, %p139
    %p142 = scmp.ne.s32.totalorder %s127, %s141
    %p143 = scmp.eq.s32.totalorder %s19, 0
    %p144 = por %p142, %p143
    %s145 = ssub.s32 %s20, %s32
    %s146 = ssub.s32 %s21, %s28
    %s147 = sor.u32 %s145, %s146
    %p148 = scmp.eq.s32.totalorder %s147, 0
    %s150 = sadd.s32 %s149, 1
    %s151 = scalar_select %p148, %s149, %s150
    %p154 = pneg %p148
    %p155 = scmp.eq.s32.totalorder %s13, 1
    %p156 = por %p154, %p155
    %p157 = scmp.ne.s32.totalorder %s149, %s152
    %p158 = scmp.eq.s32.totalorder %s13, 0
    %p159 = por %p157, %p158
    %p160 = scmp.ne.s32.totalorder %s149, %s152
    %p161 = scmp.eq.s32.totalorder %s18, 1
    %p162 = por %p160, %p161
    %p163 = scmp.ne.s32.totalorder %s152, %s153
    %p164 = scmp.eq.s32.totalorder %s18, 0
    %p165 = por %p163, %p164
    %p166 = scmp.ne.s32.totalorder %s152, %s153
    %p167 = scmp.eq.s32.totalorder %s19, 1
    %p168 = por %p166, %p167
    %p170 = scmp.ne.s32.totalorder %s153, %s169
    %p171 = scmp.eq.s32.totalorder %s19, 0
    %p172 = por %p170, %p171
    %s173 = ssub.s32 %s20, %s32
    %s174 = ssub.s32 %s21, %s28
    %s175 = sor.u32 %s173, %s174
    %p176 = scmp.eq.s32.totalorder %s175, 0
    %s178 = sadd.s32 %s177, 1
    %s179 = scalar_select %p176, %s177, %s178
    %p182 = pneg %p176
    %p183 = scmp.eq.s32.totalorder %s13, 1
    %p184 = por %p182, %p183
    %p185 = scmp.ne.s32.totalorder %s177, %s180
    %p186 = scmp.eq.s32.totalorder %s13, 0
    %p187 = por %p185, %p186
    %p188 = scmp.ne.s32.totalorder %s177, %s180
    %p189 = scmp.eq.s32.totalorder %s18, 1
    %p190 = por %p188, %p189
    %p191 = scmp.ne.s32.totalorder %s180, %s181
    %p192 = scmp.eq.s32.totalorder %s18, 0
    %p193 = por %p191, %p192
    %p194 = scmp.ne.s32.totalorder %s180, %s181
    %p195 = scmp.eq.s32.totalorder %s19, 1
    %p196 = por %p194, %p195
    %p198 = scmp.ne.s32.totalorder %s181, %s197
    %p199 = scmp.eq.s32.totalorder %s19, 0
    %p200 = por %p198, %p199
    %p201 = scmp.le.s32.totalorder 1, %s13
    %p202 = scmp.lt.s32.totalorder %s13, 3
    %p203 = pnand %p201, %p202
    %p204 = pneg %p203
    // Predicated region
    $region9: #{_lambda_.2} parent=5 // pred_check
      _
    $region10: #{_lambda_.2} parent=5 // pred_check_branch
      %206 = sbr.rel (%p203) target = $region12
    $region11: #{_lambda_.2} parent=5 // pred_region
      %s207 = ssub.s32 %s13, 1
      // Predicated region
      $region13: #{_lambda_.2} parent=11 // pred_check
        %p208 = pneg %p74
      $region14: #{_lambda_.2} parent=11 // pred_check_branch
        %210 = sbr.rel (%p208) target = $region16
      $region15: #{_lambda_.2} parent=11 // pred_region
        _
      $region16: #{_lambda_.2} parent=11 // pred_fallthru
        _
      // Predicated region
      $region17: #{_lambda_.2} parent=11 // pred_check
        %p211 = pneg %p95
      $region18: #{_lambda_.2} parent=11 // pred_check_branch
        %213 = sbr.rel (%p211) target = $region20
      $region19: #{_lambda_.2} parent=11 // pred_region
        _
      $region20: #{_lambda_.2} parent=11 // pred_fallthru
        _
      // Predicated region
      $region21: #{_lambda_.2} parent=11 // pred_check
        %p214 = pneg %p116
      $region22: #{_lambda_.2} parent=11 // pred_check_branch
        %216 = sbr.rel (%p214) target = $region24
      $region23: #{_lambda_.2} parent=11 // pred_region
        _
      $region24: #{_lambda_.2} parent=11 // pred_fallthru
        _
      // Predicated region
      $region25: #{_lambda_.2} parent=11 // pred_check
        %p217 = pneg %p137
      $region26: #{_lambda_.2} parent=11 // pred_check_branch
        %219 = sbr.rel (%p217) target = $region28
      $region27: #{_lambda_.2} parent=11 // pred_region
        _
      $region28: #{_lambda_.2} parent=11 // pred_fallthru
        _
    $region12: #{_lambda_.2} parent=5 // pred_fallthru
      _
    %p220 = scmp.lt.s32.totalorder %s13, 2
    // Predicated region
    $region29: #{_lambda_.2} parent=5 // pred_check
      %p221 = pneg %p220
    $region30: #{_lambda_.2} parent=5 // pred_check_branch
      %223 = sbr.rel (%p221) target = $region32
    $region31: #{_lambda_.2} parent=5 // pred_region
      // Predicated region
      $region33: #{_lambda_.2} parent=31 // pred_check
        %p224 = pneg %p47
      $region34: #{_lambda_.2} parent=31 // pred_check_branch
        %226 = sbr.rel (%p224) target = $region36
      $region35: #{_lambda_.2} parent=31 // pred_region
        %s227 = smul.u32 2, %s21
        %p228 = scmp.lt.s32.totalorder %s20, 1
        %s229 = scalar_select %p228, %s20, 1
        %p230 = scmp.lt.s32.totalorder %s227, 1
        %s231 = scalar_select %p230, %s227, 1
        %s232 = smul.addr %s229, 2
        %s233 = sadd.s32 %s231, %s232
        %s234 = smul.addr %s233, 4
        %s235 = scalar_lea.vmem %s0, %s234
        %s236 = smul.u32 2, %s21
      $region36: #{_lambda_.2} parent=31 // pred_fallthru
        _
    $region32: #{_lambda_.2} parent=5 // pred_fallthru
      _
    %p237 = scmp.le.s32.totalorder 1, %s13
    %p238 = scmp.lt.s32.totalorder %s13, 3
    %p239 = pnand %p237, %p238
    %p240 = pneg %p239
    // Predicated region
    $region37: #{_lambda_.2} parent=5 // pred_check
      _
    $region38: #{_lambda_.2} parent=5 // pred_check_branch
      %242 = sbr.rel (%p239) target = $region40
    $region39: #{_lambda_.2} parent=5 // pred_region
      %s243 = ssub.s32 %s13, 1
      %s244 = smul.u32 2, %s23
      %p245 = scmp.lt.s32.totalorder %s22, 1
      %s246 = scalar_select %p245, %s22, 1
      %p247 = scmp.lt.s32.totalorder %s244, 1
      %s248 = scalar_select %p247, %s244, 1
      %s249 = smul.addr %s246, 2
      %s250 = sadd.s32 %s248, %s249
      %s251 = smul.addr %s250, 4
      %s252 = scalar_lea.vmem %s0, %s251
      %p253 = pneg %p53
      %p254 = pneg %p50
      %p255 = pneg %p74
      %p256 = pneg %p71
      %p257 = pneg %p95
      %p258 = pneg %p92
      %p259 = pneg %p116
      %p260 = pneg %p113
      %p261 = pneg %p137
      %p262 = pneg %p134
      %p263 = pneg %p165
      %p264 = pneg %p162
      %s265 = smul.u32 2, %s23
      %p266 = scmp.lt.s32.totalorder %s22, 1
      %s267 = scalar_select %p266, %s22, 1
      %p268 = scmp.lt.s32.totalorder %s265, 1
      %s269 = scalar_select %p268, %s265, 1
      %s270 = smul.addr %s267, 4
      %s271 = sadd.s32 %s269, %s270
      %s272 = smul.addr %s271, 8
      %s273 = scalar_lea.vmem %s5, %s272
      %p274 = pneg %p193
      %p275 = pneg %p190
      %s276 = smul.u32 2, %s23
      %p277 = scmp.lt.s32.totalorder %s22, 1
      %s278 = scalar_select %p277, %s22, 1
      %p279 = scmp.lt.s32.totalorder %s276, 1
      %s280 = scalar_select %p279, %s276, 1
      %s281 = smul.addr %s278, 4
      %s282 = sadd.s32 %s280, %s281
      %s283 = smul.addr %s282, 8
      %s284 = scalar_lea.vmem %s6, %s283
      %s285 = smul.u32 2, %s23
      %p286 = scmp.lt.s32.totalorder %s22, 1
      %s287 = scalar_select %p286, %s22, 1
      %p288 = scmp.lt.s32.totalorder %s285, 1
      %s289 = scalar_select %p288, %s285, 1
      %s290 = smul.addr %s287, 2
      %s291 = sadd.s32 %s289, %s290
      %s292 = smul.addr %s291, 4
      %s293 = scalar_lea.vmem %s0, %s292
      %s294 = smul.u32 2, %s23
      %s295 = smul.u32 2, %s23
      %p296 = scmp.lt.s32.totalorder %s22, 1
      %s297 = scalar_select %p296, %s22, 1
      %p298 = scmp.lt.s32.totalorder %s295, 1
      %s299 = scalar_select %p298, %s295, 1
      %s300 = smul.addr %s297, 4
      %s301 = sadd.s32 %s299, %s300
      %s302 = smul.addr %s301, 8
      %s303 = scalar_lea.vmem %s5, %s302
      %s304 = smul.u32 2, %s23
      %s305 = smul.u32 2, %s23
      %p306 = scmp.lt.s32.totalorder %s22, 1
      %s307 = scalar_select %p306, %s22, 1
      %p308 = scmp.lt.s32.totalorder %s305, 1
      %s309 = scalar_select %p308, %s305, 1
      %s310 = smul.addr %s307, 4
      %s311 = sadd.s32 %s309, %s310
      %s312 = smul.addr %s311, 8
      %s313 = scalar_lea.vmem %s6, %s312
      %s314 = smul.u32 2, %s23
      %v315 = vld [vmem:[%s293] sm:$0xff]
      %v316 = vld [vmem:[%s1] sm:$0xff]
      %v317 = vld [vmem:[%s1 + $0x8] sm:$0xff]
      %v318 = vld [vmem:[%s2] sm:$0xff]
      %v319 = vld [vmem:[%s2 + $0x8] sm:$0xff]
      %321 = vset.pattern.permute.xlu0 0
      %322 = vperm.xlu0 %321, %v318
      %v323 = vpop.permute.xlu0 %322
      %326 = vset.pattern.permute.xlu0 0
      %327 = vperm.xlu0 %326, %v319
      %v328 = vpop.permute.xlu0 %327
      %v331 = vcombine.high %v315, %v315
      %vm332 = vcmask 31744
      %v334 = vsel %vm332, %v316, 0
      %v337 = vsel %vm332, %v317, 0
      %vm339 = vcmask 1043456
      %v340 = vsel %vm339, %v315, 0
      %v342 = vsel %vm339, %v331, 0
      %344 = vmatprep.subr.mxu0 %v342
      %345 = vmatpush1.msra.mxu0 %v340
      %346 = vmatprep.subr.mxu0 0.0
      %347 = vmatpush1.msra.mxu0 0.0
      %348 = vmatprep.subr.mxu0 0.0
      %349 = vmatpush1.msra.mxu0 0.0
      %350 = vmatprep.subr.mxu0 0.0
      %351 = vmatpush1.msra.mxu0 0.0
      %352 = vmatprep.subr.mxu0 0.0
      %353 = vmatpush1.msra.mxu0 0.0
      %354 = vmatprep.subr.mxu0 0.0
      %355 = vmatpush1.msra.mxu0 0.0
      %356 = vmatprep.subr.mxu0 0.0
      %357 = vmatpush1.msra.mxu0 0.0
      %358 = vmatprep.subr.mxu0 0.0
      %359 = vmatpush1.msra.mxu0 0.0
      %360 = vmatprep.subr.mxu0 0.0
      %361 = vmatpush1.msra.mxu0 0.0
      %362 = vmatprep.subr.mxu0 0.0
      %363 = vmatpush1.msra.mxu0 0.0
      %364 = vmatprep.subr.mxu0 0.0
      %365 = vmatpush1.msra.mxu0 0.0
      %366 = vmatprep.subr.mxu0 0.0
      %367 = vmatpush1.msra.mxu0 0.0
      %368 = vmatprep.subr.mxu0 0.0
      %369 = vmatpush1.msra.mxu0 0.0
      %370 = vmatprep.subr.mxu0 0.0
      %371 = vmatpush1.msra.mxu0 0.0
      %372 = vmatprep.subr.mxu0 0.0
      %373 = vmatpush1.msra.mxu0 0.0
      %374 = vmatprep.subr.mxu0 0.0
      %375 = vmatpush1.msra.mxu0 0.0
      %376 = vmatprep.subr.mxu0 0.0
      %377 = vmatpush1.msra.mxu0 0.0
      %378 = vmatprep.subr.mxu0 0.0
      %379 = vmatpush1.msra.mxu0 0.0
      %380 = vmatprep.subr.mxu0 0.0
      %381 = vmatpush1.msra.mxu0 0.0
      %382 = vmatprep.subr.mxu0 0.0
      %383 = vmatpush1.msra.mxu0 0.0
      %384 = vmatprep.subr.mxu0 0.0
      %385 = vmatpush1.msra.mxu0 0.0
      %386 = vmatprep.subr.mxu0 0.0
      %387 = vmatpush1.msra.mxu0 0.0
      %388 = vmatprep.subr.mxu0 0.0
      %389 = vmatpush1.msra.mxu0 0.0
      %390 = vmatprep.subr.mxu0 0.0
      %391 = vmatpush1.msra.mxu0 0.0
      %392 = vmatprep.subr.mxu0 0.0
      %393 = vmatpush1.msra.mxu0 0.0
      %394 = vmatprep.subr.mxu0 0.0
      %395 = vmatpush1.msra.mxu0 0.0
      %396 = vmatprep.subr.mxu0 0.0
      %397 = vmatpush1.msra.mxu0 0.0
      %398 = vmatprep.subr.mxu0 0.0
      %399 = vmatpush1.msra.mxu0 0.0
      %400 = vmatprep.subr.mxu0 0.0
      %401 = vmatpush1.msra.mxu0 0.0
      %402 = vmatprep.subr.mxu0 0.0
      %403 = vmatpush1.msra.mxu0 0.0
      %404 = vmatprep.subr.mxu0 0.0
      %405 = vmatpush1.msra.mxu0 0.0
      %406 = vmatprep.subr.mxu0 0.0
      %407 = vmatpush1.msra.mxu0 0.0
      %408 = vmatprep.mubr.f32.mxu0 0.0
      %409 = vmatmul.mubr.f32.gmra.mrb[0].mxu0 %v334
      %v410 = vpop.f32.mrb[0].mxu0
      %v411 = vadd.f32 %v323, %v410
      %v412 = vpop.f32.mrb[0].mxu0
      %v413 = vadd.f32 %v323, %v412
      %414 = vmatprep.mubr.f32.mxu0 0.0
      %415 = vmatmul.mubr.f32.gmra.mrb[0].mxu0 %v337
      %v416 = vpop.f32.mrb[0].mxu0
      %v417 = vadd.f32 %v328, %v416
      %v418 = vpop.f32.mrb[0].mxu0
      %v419 = vadd.f32 %v328, %v418
      %420 = vdwg.mxu0
      %421 = vst [vmem:[%s303] sm:$0xff] %v411
      %422 = vst [vmem:[%s303 + $0x8] sm:$0xff] %v413
      %423 = vst [vmem:[%s303 + $0x10] sm:$0xff] %v417
      %424 = vst [vmem:[%s303 + $0x18] sm:$0xff] %v419
      %v425 = vld [vmem:[%s3] sm:$0xff]
      %v426 = vld [vmem:[%s3 + $0x8] sm:$0xff]
      %v427 = vld [vmem:[%s4] sm:$0xff]
      %v428 = vld [vmem:[%s4 + $0x8] sm:$0xff]
      %430 = vset.pattern.permute.xlu0 0
      %431 = vperm.xlu0 %430, %v427
      %v432 = vpop.permute.xlu0 %431
      %435 = vset.pattern.permute.xlu0 0
      %436 = vperm.xlu0 %435, %v428
      %v437 = vpop.permute.xlu0 %436
      %v440 = vsel %vm332, %v425, 0
      %v443 = vsel %vm332, %v426, 0
      %445 = vmatprep.subr.mxu0 %v342
      %446 = vmatpush1.msra.mxu0 %v340
      %447 = vmatprep.subr.mxu0 0.0
      %448 = vmatpush1.msra.mxu0 0.0
      %449 = vmatprep.subr.mxu0 0.0
      %450 = vmatpush1.msra.mxu0 0.0
      %451 = vmatprep.subr.mxu0 0.0
      %452 = vmatpush1.msra.mxu0 0.0
      %453 = vmatprep.subr.mxu0 0.0
      %454 = vmatpush1.msra.mxu0 0.0
      %455 = vmatprep.subr.mxu0 0.0
      %456 = vmatpush1.msra.mxu0 0.0
      %457 = vmatprep.subr.mxu0 0.0
      %458 = vmatpush1.msra.mxu0 0.0
      %459 = vmatprep.subr.mxu0 0.0
      %460 = vmatpush1.msra.mxu0 0.0
      %461 = vmatprep.subr.mxu0 0.0
      %462 = vmatpush1.msra.mxu0 0.0
      %463 = vmatprep.subr.mxu0 0.0
      %464 = vmatpush1.msra.mxu0 0.0
      %465 = vmatprep.subr.mxu0 0.0
      %466 = vmatpush1.msra.mxu0 0.0
      %467 = vmatprep.subr.mxu0 0.0
      %468 = vmatpush1.msra.mxu0 0.0
      %469 = vmatprep.subr.mxu0 0.0
      %470 = vmatpush1.msra.mxu0 0.0
      %471 = vmatprep.subr.mxu0 0.0
      %472 = vmatpush1.msra.mxu0 0.0
      %473 = vmatprep.subr.mxu0 0.0
      %474 = vmatpush1.msra.mxu0 0.0
      %475 = vmatprep.subr.mxu0 0.0
      %476 = vmatpush1.msra.mxu0 0.0
      %477 = vmatprep.subr.mxu0 0.0
      %478 = vmatpush1.msra.mxu0 0.0
      %479 = vmatprep.subr.mxu0 0.0
      %480 = vmatpush1.msra.mxu0 0.0
      %481 = vmatprep.subr.mxu0 0.0
      %482 = vmatpush1.msra.mxu0 0.0
      %483 = vmatprep.subr.mxu0 0.0
      %484 = vmatpush1.msra.mxu0 0.0
      %485 = vmatprep.subr.mxu0 0.0
      %486 = vmatpush1.msra.mxu0 0.0
      %487 = vmatprep.subr.mxu0 0.0
      %488 = vmatpush1.msra.mxu0 0.0
      %489 = vmatprep.subr.mxu0 0.0
      %490 = vmatpush1.msra.mxu0 0.0
      %491 = vmatprep.subr.mxu0 0.0
      %492 = vmatpush1.msra.mxu0 0.0
      %493 = vmatprep.subr.mxu0 0.0
      %494 = vmatpush1.msra.mxu0 0.0
      %495 = vmatprep.subr.mxu0 0.0
      %496 = vmatpush1.msra.mxu0 0.0
      %497 = vmatprep.subr.mxu0 0.0
      %498 = vmatpush1.msra.mxu0 0.0
      %499 = vmatprep.subr.mxu0 0.0
      %500 = vmatpush1.msra.mxu0 0.0
      %501 = vmatprep.subr.mxu0 0.0
      %502 = vmatpush1.msra.mxu0 0.0
      %503 = vmatprep.subr.mxu0 0.0
      %504 = vmatpush1.msra.mxu0 0.0
      %505 = vmatprep.subr.mxu0 0.0
      %506 = vmatpush1.msra.mxu0 0.0
      %507 = vmatprep.subr.mxu0 0.0
      %508 = vmatpush1.msra.mxu0 0.0
      %509 = vmatprep.mubr.f32.mxu0 0.0
      %510 = vmatmul.mubr.f32.gmra.mrb[0].mxu0 %v440
      %v511 = vpop.f32.mrb[0].mxu0
      %v512 = vadd.f32 %v432, %v511
      %v513 = vpop.f32.mrb[0].mxu0
      %v514 = vadd.f32 %v432, %v513
      %515 = vmatprep.mubr.f32.mxu0 0.0
      %516 = vmatmul.mubr.f32.gmra.mrb[0].mxu0 %v443
      %v517 = vpop.f32.mrb[0].mxu0
      %v518 = vadd.f32 %v437, %v517
      %v519 = vpop.f32.mrb[0].mxu0
      %v520 = vadd.f32 %v437, %v519
      %521 = vdwg.mxu0
      %522 = vst [vmem:[%s313] sm:$0xff] %v512
      %523 = vst [vmem:[%s313 + $0x8] sm:$0xff] %v514
      %524 = vst [vmem:[%s313 + $0x10] sm:$0xff] %v518
      %525 = vst [vmem:[%s313 + $0x18] sm:$0xff] %v520
      %s526 = smul.u32 2, %s23
      %p527 = scmp.lt.s32.totalorder %s22, 1
      %s528 = scalar_select %p527, %s22, 1
      %p529 = scmp.lt.s32.totalorder %s526, 1
      %s530 = scalar_select %p529, %s526, 1
      %s531 = smul.addr %s528, 4
      %s532 = sadd.s32 %s530, %s531
      %s533 = smul.addr %s532, 8
      %s534 = scalar_lea.vmem %s5, %s533
      %s535 = smul.u32 2, %s23
      %p536 = scmp.lt.s32.totalorder %s22, 1
      %s537 = scalar_select %p536, %s22, 1
      %p538 = scmp.lt.s32.totalorder %s535, 1
      %s539 = scalar_select %p538, %s535, 1
      %s540 = smul.addr %s537, 4
      %s541 = sadd.s32 %s539, %s540
      %s542 = smul.addr %s541, 8
      %s543 = scalar_lea.vmem %s6, %s542
      // Predicated region
      $region41: #{_lambda_.2} parent=39 // pred_check
        %p544 = pneg %p162
      $region42: #{_lambda_.2} parent=39 // pred_check_branch
        %546 = sbr.rel (%p544) target = $region44
      $region43: #{_lambda_.2} parent=39 // pred_region
        %s547 = smul.u32 2, %s23
      $region44: #{_lambda_.2} parent=39 // pred_fallthru
        _
      // Predicated region
      $region45: #{_lambda_.2} parent=39 // pred_check
        %p548 = pneg %p190
      $region46: #{_lambda_.2} parent=39 // pred_check_branch
        %550 = sbr.rel (%p548) target = $region48
      $region47: #{_lambda_.2} parent=39 // pred_region
        %s551 = smul.u32 2, %s23
      $region48: #{_lambda_.2} parent=39 // pred_fallthru
        _
    $region40: #{_lambda_.2} parent=5 // pred_fallthru
      _
    %p552 = scmp.le.s32.totalorder 2, %s13
    // Predicated region
    $region49: #{_lambda_.2} parent=5 // pred_check
      %p553 = pneg %p552
    $region50: #{_lambda_.2} parent=5 // pred_check_branch
      %555 = sbr.rel (%p553) target = $region52
    $region51: #{_lambda_.2} parent=5 // pred_region
      %s556 = ssub.s32 %s13, 2
      // Predicated region
      $region53: #{_lambda_.2} parent=51 // pred_check
        %p557 = pneg %p168
      $region54: #{_lambda_.2} parent=51 // pred_check_branch
        %559 = sbr.rel (%p557) target = $region56
      $region55: #{_lambda_.2} parent=51 // pred_region
        %s560 = smul.u32 2, %s25
        %p561 = scmp.lt.s32.totalorder %s24, 1
        %s562 = scalar_select %p561, %s24, 1
        %p563 = scmp.lt.s32.totalorder %s560, 1
        %s564 = scalar_select %p563, %s560, 1
        %s565 = smul.addr %s562, 4
        %s566 = sadd.s32 %s564, %s565
        %s567 = smul.addr %s566, 8
        %s568 = scalar_lea.vmem %s5, %s567
      $region56: #{_lambda_.2} parent=51 // pred_fallthru
        _
      // Predicated region
      $region57: #{_lambda_.2} parent=51 // pred_check
        %p569 = pneg %p196
      $region58: #{_lambda_.2} parent=51 // pred_check_branch
        %571 = sbr.rel (%p569) target = $region60
      $region59: #{_lambda_.2} parent=51 // pred_region
        %s572 = smul.u32 2, %s25
        %p573 = scmp.lt.s32.totalorder %s24, 1
        %s574 = scalar_select %p573, %s24, 1
        %p575 = scmp.lt.s32.totalorder %s572, 1
        %s576 = scalar_select %p575, %s572, 1
        %s577 = smul.addr %s574, 4
        %s578 = sadd.s32 %s576, %s577
        %s579 = smul.addr %s578, 8
        %s580 = scalar_lea.vmem %s6, %s579
      $region60: #{_lambda_.2} parent=51 // pred_fallthru
        _
    $region52: #{_lambda_.2} parent=5 // pred_fallthru
      _
  $region6: #{_lambda_.2} parent=0 // loop_footer
    %s17 = sadd.s32 1, %s13
  $region7: #{_lambda_.2} parent=0 // loop_footer_branch
    %12 = sbr.rel target = $region3
  $region8: #{_lambda_.2} parent=0 // loop_exit
    _

// kernel: _lambda_.3
$region0: #{_lambda_.3}
  #allocation0 [shape = 'u32[]', space=smem, size = 0x4, offset = 0x4, fixed_abs, tag = 'smem constant byte address 0x4 - core index']
  #allocation1 [shape = 'u32[144,128]{1,0:T(1,128)}', space=vmem, size = 0x12000, scoped, tag = 'internal scratch']
  %s0 = inlined_call_operand.vmem [shape: f32[2,8,16], index: 0, kind: input, shape index: {}]
  %s1 = inlined_call_operand.vmem [shape: f32[2,8,16], index: 1, kind: input, shape index: {}]
  %s2 = inlined_call_operand.vmem [shape: f32[2,16,16,16], index: 2, kind: input, shape index: {}]
  %s3 = inlined_call_operand.vmem [shape: f32[16,8], index: 3, kind: input, shape index: {}]
  %s4 = inlined_call_operand.vmem [shape: f32[16,16,16], index: 4, kind: input, shape index: {}]
  %s5 = inlined_call_operand.hbm [shape: f32[2,16,16,16], index: 5, kind: output, shape index: {}]
  %s6 = sld [smem:[#allocation0]]
  $region30: #{_lambda_.3} parent=0
    _
  %s8 = ssub.s32 1, %s6
  %s9 = scalar_select 0, %s8, %s6
  $region1: #{_lambda_.3} parent=0
    #allocation2 [shape = 'u8[262144]{0}', space=vmem, size = 0x40000, scoped, tag = 'output window, operand 0, single buffered']
    #allocation3 [shape = 's32[1]{0}', space=sflag, size = 0x4, scoped, tag = 'scoped memory for _lambda_.3']
    %10 = vsyncpa [#allocation3], 0
    // Predicated region
    $region2: #{_lambda_.3} parent=1 // pred_check
      _
    $region3: #{_lambda_.3} parent=1 // pred_check_branch
      %12 = sbr.rel (0) target = $region5
    $region4: #{_lambda_.3} parent=1 // pred_region
      _
    $region5: #{_lambda_.3} parent=1 // pred_fallthru
      _
    // Predicated region
    $region6: #{_lambda_.3} parent=1 // pred_check
      _
    $region7: #{_lambda_.3} parent=1 // pred_check_branch
      %14 = sbr.rel (0) target = $region9
    $region8: #{_lambda_.3} parent=1 // pred_region
      _
    $region9: #{_lambda_.3} parent=1 // pred_fallthru
      _
    // Predicated region
    $region10: #{_lambda_.3} parent=1 // pred_check
      _
    $region11: #{_lambda_.3} parent=1 // pred_check_branch
      %16 = sbr.rel (0) target = $region13
    $region12: #{_lambda_.3} parent=1 // pred_region
      _
    $region13: #{_lambda_.3} parent=1 // pred_fallthru
      _
    // Predicated region
    $region14: #{_lambda_.3} parent=1 // pred_check
      _
    $region15: #{_lambda_.3} parent=1 // pred_check_branch
      %18 = sbr.rel (0) target = $region17
    $region16: #{_lambda_.3} parent=1 // pred_region
      _
    $region17: #{_lambda_.3} parent=1 // pred_fallthru
      _
    // Predicated region
    $region18: #{_lambda_.3} parent=1 // pred_check
      _
    $region19: #{_lambda_.3} parent=1 // pred_check_branch
      %20 = sbr.rel (0) target = $region21
    $region20: #{_lambda_.3} parent=1 // pred_region
      _
    $region21: #{_lambda_.3} parent=1 // pred_fallthru
      _
    %v22 = vld [vmem:[%s3] sm:$0xff]
    %v23 = vld [vmem:[%s3 + $0x8] sm:$0xff]
    %v24 = vld [vmem:[%s4] sm:$0xff]
    %v25 = vld [vmem:[%s4 + $0x8] sm:$0xff]
    %v26 = vld [vmem:[%s4 + $0x10] sm:$0xff]
    %v27 = vld [vmem:[%s4 + $0x18] sm:$0xff]
    %v28 = vld [vmem:[%s4 + $0x20] sm:$0xff]
    %v29 = vld [vmem:[%s4 + $0x28] sm:$0xff]
    %v30 = vld [vmem:[%s4 + $0x30] sm:$0xff]
    %v31 = vld [vmem:[%s4 + $0x38] sm:$0xff]
    %v32 = vld [vmem:[%s4 + $0x40] sm:$0xff]
    %v33 = vld [vmem:[%s4 + $0x48] sm:$0xff]
    %v34 = vld [vmem:[%s4 + $0x50] sm:$0xff]
    %v35 = vld [vmem:[%s4 + $0x58] sm:$0xff]
    %v36 = vld [vmem:[%s4 + $0x60] sm:$0xff]
    %v37 = vld [vmem:[%s4 + $0x68] sm:$0xff]
    %v38 = vld [vmem:[%s4 + $0x70] sm:$0xff]
    %v39 = vld [vmem:[%s4 + $0x78] sm:$0xff]
    %v40 = vld [vmem:[%s4 + $0x80] sm:$0xff]
    %v41 = vld [vmem:[%s4 + $0x88] sm:$0xff]
    %v42 = vld [vmem:[%s4 + $0x90] sm:$0xff]
    %v43 = vld [vmem:[%s4 + $0x98] sm:$0xff]
    %v44 = vld [vmem:[%s4 + $0xa0] sm:$0xff]
    %v45 = vld [vmem:[%s4 + $0xa8] sm:$0xff]
    %v46 = vld [vmem:[%s4 + $0xb0] sm:$0xff]
    %v47 = vld [vmem:[%s4 + $0xb8] sm:$0xff]
    %v48 = vld [vmem:[%s4 + $0xc0] sm:$0xff]
    %v49 = vld [vmem:[%s4 + $0xc8] sm:$0xff]
    %v50 = vld [vmem:[%s4 + $0xd0] sm:$0xff]
    %v51 = vld [vmem:[%s4 + $0xd8] sm:$0xff]
    %v52 = vld [vmem:[%s4 + $0xe0] sm:$0xff]
    %v53 = vld [vmem:[%s4 + $0xe8] sm:$0xff]
    %v54 = vld [vmem:[%s4 + $0xf0] sm:$0xff]
    %v55 = vld [vmem:[%s4 + $0xf8] sm:$0xff]
    %v56 = vld [vmem:[%s0] sm:$0xff]
    %v57 = vld [vmem:[%s1] sm:$0xff]
    %v58 = vlaneseq
    %v59 = vshrl.u32 %v58, 7
    %v60 = vsub.s32 0, %v59
    %v61 = vrot.slane %v56, %v60
    %63 = vbcast.lane.b32.xlu0 %v61, 256
    %v64 = vpop.permute.xlu0 %63
    %s66 = sor.u32 256, 8
    %67 = vbcast.lane.b32.xlu0 %v61, %s66
    %v68 = vpop.permute.xlu0 %67
    %v69 = vlaneseq
    %v70 = vshrl.u32 %v69, 7
    %v71 = vsub.s32 1, %v70
    %v72 = vrot.slane %v56, %v71
    %74 = vbcast.lane.b32.xlu0 %v72, 256
    %v75 = vpop.permute.xlu0 %74
    %s77 = sor.u32 256, 8
    %78 = vbcast.lane.b32.xlu0 %v72, %s77
    %v79 = vpop.permute.xlu0 %78
    %v80 = vlaneseq
    %v81 = vshrl.u32 %v80, 7
    %v82 = vsub.s32 2, %v81
    %v83 = vrot.slane %v56, %v82
    %85 = vbcast.lane.b32.xlu0 %v83, 256
    %v86 = vpop.permute.xlu0 %85
    %s88 = sor.u32 256, 8
    %89 = vbcast.lane.b32.xlu0 %v83, %s88
    %v90 = vpop.permute.xlu0 %89
    %v91 = vlaneseq
    %v92 = vshrl.u32 %v91, 7
    %v93 = vsub.s32 3, %v92
    %v94 = vrot.slane %v56, %v93
    %96 = vbcast.lane.b32.xlu0 %v94, 256
    %v97 = vpop.permute.xlu0 %96
    %s99 = sor.u32 256, 8
    %100 = vbcast.lane.b32.xlu0 %v94, %s99
    %v101 = vpop.permute.xlu0 %100
    %v102 = vlaneseq
    %v103 = vshrl.u32 %v102, 7
    %v104 = vsub.s32 4, %v103
    %v105 = vrot.slane %v56, %v104
    %107 = vbcast.lane.b32.xlu0 %v105, 256
    %v108 = vpop.permute.xlu0 %107
    %s110 = sor.u32 256, 8
    %111 = vbcast.lane.b32.xlu0 %v105, %s110
    %v112 = vpop.permute.xlu0 %111
    %v113 = vlaneseq
    %v114 = vshrl.u32 %v113, 7
    %v115 = vsub.s32 5, %v114
    %v116 = vrot.slane %v56, %v115
    %118 = vbcast.lane.b32.xlu0 %v116, 256
    %v119 = vpop.permute.xlu0 %118
    %s121 = sor.u32 256, 8
    %122 = vbcast.lane.b32.xlu0 %v116, %s121
    %v123 = vpop.permute.xlu0 %122
    %v124 = vlaneseq
    %v125 = vshrl.u32 %v124, 7
    %v126 = vsub.s32 6, %v125
    %v127 = vrot.slane %v56, %v126
    %129 = vbcast.lane.b32.xlu0 %v127, 256
    %v130 = vpop.permute.xlu0 %129
    %s132 = sor.u32 256, 8
    %133 = vbcast.lane.b32.xlu0 %v127, %s132
    %v134 = vpop.permute.xlu0 %133
    %v135 = vlaneseq
    %v136 = vshrl.u32 %v135, 7
    %v137 = vsub.s32 7, %v136
    %v138 = vrot.slane %v56, %v137
    %140 = vbcast.lane.b32.xlu0 %v138, 256
    %v141 = vpop.permute.xlu0 %140
    %s143 = sor.u32 256, 8
    %144 = vbcast.lane.b32.xlu0 %v138, %s143
    %v145 = vpop.permute.xlu0 %144
    %v147 = vcombine.high %v57, %v57
    %v149 = vunpack.c.l.s4 1966171168
    %v150 = vunpack.c.0.s8 %v149
    %v151 = vlaneseq
    %v152 = vshrl.u32 %v151, 7
    %v153 = vsub.s32 %v150, %v152
    %v154 = vrot.slane %v57, %v153
    %v156 = vunpack.c.l.s4 1966171168
    %v157 = vunpack.c.0.s8 %v156
    %v158 = vlaneseq
    %v159 = vshrl.u32 %v158, 7
    %v160 = vsub.s32 %v157, %v159
    %v161 = vrot.slane %v147, %v160
    %v162 = vcombine.high %v154, %v154
    %v163 = vcombine.high %v161, %v161
    %v165 = vunpack.c.l.s4 1966171168
    %v166 = vunpack.c.0.s8 %v165
    %v167 = vlaneseq
    %v168 = vshrl.u32 %v167, 7
    %v169 = vsub.s32 %v166, %v168
    %v170 = vrot.slane %v154, %v169
    %v172 = vunpack.c.l.s4 1966171168
    %v173 = vunpack.c.0.s8 %v172
    %v174 = vlaneseq
    %v175 = vshrl.u32 %v174, 7
    %v176 = vsub.s32 %v173, %v175
    %v177 = vrot.slane %v161, %v176
    %v179 = vunpack.c.l.s4 1966171168
    %v180 = vunpack.c.0.s8 %v179
    %v181 = vlaneseq
    %v182 = vshrl.u32 %v181, 7
    %v183 = vsub.s32 %v180, %v182
    %v184 = vrot.slane %v162, %v183
    %v186 = vunpack.c.l.s4 1966171168
    %v187 = vunpack.c.0.s8 %v186
    %v188 = vlaneseq
    %v189 = vshrl.u32 %v188, 7
    %v190 = vsub.s32 %v187, %v189
    %v191 = vrot.slane %v163, %v190
    %v192 = vcombine.high %v170, %v170
    %v193 = vcombine.high %v177, %v177
    %v194 = vcombine.high %v184, %v184
    %v195 = vcombine.high %v191, %v191
    %v196 = vlaneseq
    %v197 = vshrl.u32 %v196, 7
    %v198 = vsub.s32 0, %v197
    %v199 = vrot.slane %v170, %v198
    %v200 = vlaneseq
    %v201 = vshrl.u32 %v200, 7
    %v202 = vsub.s32 0, %v201
    %v203 = vrot.slane %v184, %v202
    %v204 = vlaneseq
    %v205 = vshrl.u32 %v204, 7
    %v206 = vsub.s32 0, %v205
    %v207 = vrot.slane %v192, %v206
    %v208 = vlaneseq
    %v209 = vshrl.u32 %v208, 7
    %v210 = vsub.s32 0, %v209
    %v211 = vrot.slane %v194, %v210
    %v212 = vlaneseq
    %v213 = vshrl.u32 %v212, 7
    %v214 = vsub.s32 0, %v213
    %v215 = vrot.slane %v177, %v214
    %v216 = vlaneseq
    %v217 = vshrl.u32 %v216, 7
    %v218 = vsub.s32 0, %v217
    %v219 = vrot.slane %v191, %v218
    %v220 = vlaneseq
    %v221 = vshrl.u32 %v220, 7
    %v222 = vsub.s32 0, %v221
    %v223 = vrot.slane %v193, %v222
    %v224 = vlaneseq
    %v225 = vshrl.u32 %v224, 7
    %v226 = vsub.s32 0, %v225
    %v227 = vrot.slane %v195, %v226
    %v236 = vsub.f32 %v64, %v199
    %v237 = vsub.f32 %v68, %v199
    %v238 = vsub.f32 %v75, %v203
    %v239 = vsub.f32 %v79, %v203
    %v240 = vsub.f32 %v86, %v207
    %v241 = vsub.f32 %v90, %v207
    %v242 = vsub.f32 %v97, %v211
    %v243 = vsub.f32 %v101, %v211
    %v244 = vsub.f32 %v108, %v215
    %v245 = vsub.f32 %v112, %v215
    %v246 = vsub.f32 %v119, %v219
    %v247 = vsub.f32 %v123, %v219
    %v248 = vsub.f32 %v130, %v223
    %v249 = vsub.f32 %v134, %v223
    %v250 = vsub.f32 %v141, %v227
    %v251 = vsub.f32 %v145, %v227
    %v252 = vtanh.pop %v236
    %v253 = vtanh.pop %v237
    %v254 = vtanh.pop %v238
    %v255 = vtanh.pop %v239
    %v256 = vtanh.pop %v240
    %v257 = vtanh.pop %v241
    %v258 = vtanh.pop %v242
    %v259 = vtanh.pop %v243
    %v260 = vtanh.pop %v244
    %v261 = vtanh.pop %v245
    %v262 = vtanh.pop %v246
    %v263 = vtanh.pop %v247
    %v264 = vtanh.pop %v248
    %v265 = vtanh.pop %v249
    %v266 = vtanh.pop %v250
    %v267 = vtanh.pop %v251
    %v270 = vcombine.high %v22, %v22
    %v272 = vunpack.c.l.s4 1966171168
    %v273 = vunpack.c.0.s8 %v272
    %v274 = vlaneseq
    %v275 = vshrl.u32 %v274, 7
    %v276 = vsub.s32 %v273, %v275
    %v277 = vrot.slane %v22, %v276
    %v279 = vunpack.c.l.s4 1966171168
    %v280 = vunpack.c.0.s8 %v279
    %v281 = vlaneseq
    %v282 = vshrl.u32 %v281, 7
    %v283 = vsub.s32 %v280, %v282
    %v284 = vrot.slane %v270, %v283
    %v285 = vcombine.high %v277, %v277
    %v286 = vcombine.high %v284, %v284
    %v288 = vunpack.c.l.s4 1966171168
    %v289 = vunpack.c.0.s8 %v288
    %v290 = vlaneseq
    %v291 = vshrl.u32 %v290, 7
    %v292 = vsub.s32 %v289, %v291
    %v293 = vrot.slane %v277, %v292
    %v295 = vunpack.c.l.s4 1966171168
    %v296 = vunpack.c.0.s8 %v295
    %v297 = vlaneseq
    %v298 = vshrl.u32 %v297, 7
    %v299 = vsub.s32 %v296, %v298
    %v300 = vrot.slane %v284, %v299
    %v302 = vunpack.c.l.s4 1966171168
    %v303 = vunpack.c.0.s8 %v302
    %v304 = vlaneseq
    %v305 = vshrl.u32 %v304, 7
    %v306 = vsub.s32 %v303, %v305
    %v307 = vrot.slane %v285, %v306
    %v309 = vunpack.c.l.s4 1966171168
    %v310 = vunpack.c.0.s8 %v309
    %v311 = vlaneseq
    %v312 = vshrl.u32 %v311, 7
    %v313 = vsub.s32 %v310, %v312
    %v314 = vrot.slane %v286, %v313
    %v315 = vcombine.high %v293, %v293
    %v316 = vcombine.high %v300, %v300
    %v317 = vcombine.high %v307, %v307
    %v318 = vcombine.high %v314, %v314
    %v319 = vcombine.high %v23, %v23
    %v321 = vunpack.c.l.s4 1966171168
    %v322 = vunpack.c.0.s8 %v321
    %v323 = vlaneseq
    %v324 = vshrl.u32 %v323, 7
    %v325 = vsub.s32 %v322, %v324
    %v326 = vrot.slane %v23, %v325
    %v328 = vunpack.c.l.s4 1966171168
    %v329 = vunpack.c.0.s8 %v328
    %v330 = vlaneseq
    %v331 = vshrl.u32 %v330, 7
    %v332 = vsub.s32 %v329, %v331
    %v333 = vrot.slane %v319, %v332
    %v334 = vcombine.high %v326, %v326
    %v335 = vcombine.high %v333, %v333
    %v337 = vunpack.c.l.s4 1966171168
    %v338 = vunpack.c.0.s8 %v337
    %v339 = vlaneseq
    %v340 = vshrl.u32 %v339, 7
    %v341 = vsub.s32 %v338, %v340
    %v342 = vrot.slane %v326, %v341
    %v344 = vunpack.c.l.s4 1966171168
    %v345 = vunpack.c.0.s8 %v344
    %v346 = vlaneseq
    %v347 = vshrl.u32 %v346, 7
    %v348 = vsub.s32 %v345, %v347
    %v349 = vrot.slane %v333, %v348
    %v351 = vunpack.c.l.s4 1966171168
    %v352 = vunpack.c.0.s8 %v351
    %v353 = vlaneseq
    %v354 = vshrl.u32 %v353, 7
    %v355 = vsub.s32 %v352, %v354
    %v356 = vrot.slane %v334, %v355
    %v358 = vunpack.c.l.s4 1966171168
    %v359 = vunpack.c.0.s8 %v358
    %v360 = vlaneseq
    %v361 = vshrl.u32 %v360, 7
    %v362 = vsub.s32 %v359, %v361
    %v363 = vrot.slane %v335, %v362
    %v364 = vcombine.high %v342, %v342
    %v365 = vcombine.high %v349, %v349
    %v366 = vcombine.high %v356, %v356
    %v367 = vcombine.high %v363, %v363
    %v368 = vlaneseq
    %v369 = vshrl.u32 %v368, 7
    %v370 = vsub.s32 0, %v369
    %v371 = vrot.slane %v293, %v370
    %v372 = vlaneseq
    %v373 = vshrl.u32 %v372, 7
    %v374 = vsub.s32 0, %v373
    %v375 = vrot.slane %v307, %v374
    %v376 = vlaneseq
    %v377 = vshrl.u32 %v376, 7
    %v378 = vsub.s32 0, %v377
    %v379 = vrot.slane %v315, %v378
    %v380 = vlaneseq
    %v381 = vshrl.u32 %v380, 7
    %v382 = vsub.s32 0, %v381
    %v383 = vrot.slane %v317, %v382
    %v384 = vlaneseq
    %v385 = vshrl.u32 %v384, 7
    %v386 = vsub.s32 0, %v385
    %v387 = vrot.slane %v300, %v386
    %v388 = vlaneseq
    %v389 = vshrl.u32 %v388, 7
    %v390 = vsub.s32 0, %v389
    %v391 = vrot.slane %v314, %v390
    %v392 = vlaneseq
    %v393 = vshrl.u32 %v392, 7
    %v394 = vsub.s32 0, %v393
    %v395 = vrot.slane %v316, %v394
    %v396 = vlaneseq
    %v397 = vshrl.u32 %v396, 7
    %v398 = vsub.s32 0, %v397
    %v399 = vrot.slane %v318, %v398
    %v400 = vlaneseq
    %v401 = vshrl.u32 %v400, 7
    %v402 = vsub.s32 0, %v401
    %v403 = vrot.slane %v342, %v402
    %v404 = vlaneseq
    %v405 = vshrl.u32 %v404, 7
    %v406 = vsub.s32 0, %v405
    %v407 = vrot.slane %v356, %v406
    %v408 = vlaneseq
    %v409 = vshrl.u32 %v408, 7
    %v410 = vsub.s32 0, %v409
    %v411 = vrot.slane %v364, %v410
    %v412 = vlaneseq
    %v413 = vshrl.u32 %v412, 7
    %v414 = vsub.s32 0, %v413
    %v415 = vrot.slane %v366, %v414
    %v416 = vlaneseq
    %v417 = vshrl.u32 %v416, 7
    %v418 = vsub.s32 0, %v417
    %v419 = vrot.slane %v349, %v418
    %v420 = vlaneseq
    %v421 = vshrl.u32 %v420, 7
    %v422 = vsub.s32 0, %v421
    %v423 = vrot.slane %v363, %v422
    %v424 = vlaneseq
    %v425 = vshrl.u32 %v424, 7
    %v426 = vsub.s32 0, %v425
    %v427 = vrot.slane %v365, %v426
    %v428 = vlaneseq
    %v429 = vshrl.u32 %v428, 7
    %v430 = vsub.s32 0, %v429
    %v431 = vrot.slane %v367, %v430
    %432 = vset.pattern.permute.xlu0 0
    %433 = vperm.xlu0 %432, %v371
    %v434 = vpop.permute.xlu0 %433
    %436 = vset.pattern.permute.xlu0 0
    %437 = vperm.xlu0 %436, %v375
    %v438 = vpop.permute.xlu0 %437
    %440 = vset.pattern.permute.xlu0 0
    %441 = vperm.xlu0 %440, %v379
    %v442 = vpop.permute.xlu0 %441
    %444 = vset.pattern.permute.xlu0 0
    %445 = vperm.xlu0 %444, %v383
    %v446 = vpop.permute.xlu0 %445
    %448 = vset.pattern.permute.xlu0 0
    %449 = vperm.xlu0 %448, %v387
    %v450 = vpop.permute.xlu0 %449
    %452 = vset.pattern.permute.xlu0 0
    %453 = vperm.xlu0 %452, %v391
    %v454 = vpop.permute.xlu0 %453
    %456 = vset.pattern.permute.xlu0 0
    %457 = vperm.xlu0 %456, %v395
    %v458 = vpop.permute.xlu0 %457
    %460 = vset.pattern.permute.xlu0 0
    %461 = vperm.xlu0 %460, %v399
    %v462 = vpop.permute.xlu0 %461
    %464 = vset.pattern.permute.xlu0 0
    %465 = vperm.xlu0 %464, %v403
    %v466 = vpop.permute.xlu0 %465
    %468 = vset.pattern.permute.xlu0 0
    %469 = vperm.xlu0 %468, %v407
    %v470 = vpop.permute.xlu0 %469
    %472 = vset.pattern.permute.xlu0 0
    %473 = vperm.xlu0 %472, %v411
    %v474 = vpop.permute.xlu0 %473
    %476 = vset.pattern.permute.xlu0 0
    %477 = vperm.xlu0 %476, %v415
    %v478 = vpop.permute.xlu0 %477
    %480 = vset.pattern.permute.xlu0 0
    %481 = vperm.xlu0 %480, %v419
    %v482 = vpop.permute.xlu0 %481
    %484 = vset.pattern.permute.xlu0 0
    %485 = vperm.xlu0 %484, %v423
    %v486 = vpop.permute.xlu0 %485
    %488 = vset.pattern.permute.xlu0 0
    %489 = vperm.xlu0 %488, %v427
    %v490 = vpop.permute.xlu0 %489
    %492 = vset.pattern.permute.xlu0 0
    %493 = vperm.xlu0 %492, %v431
    %v494 = vpop.permute.xlu0 %493
    %v496 = vmul.f32 %v434, %v252
    %v497 = vmul.f32 %v434, %v253
    %v498 = vmul.f32 %v438, %v252
    %v499 = vmul.f32 %v438, %v253
    %v500 = vmul.f32 %v442, %v252
    %v501 = vmul.f32 %v442, %v253
    %v502 = vmul.f32 %v446, %v252
    %v503 = vmul.f32 %v446, %v253
    %v504 = vmul.f32 %v450, %v252
    %v505 = vmul.f32 %v450, %v253
    %v506 = vmul.f32 %v454, %v252
    %v507 = vmul.f32 %v454, %v253
    %v508 = vmul.f32 %v458, %v252
    %v509 = vmul.f32 %v458, %v253
    %v510 = vmul.f32 %v462, %v252
    %v511 = vmul.f32 %v462, %v253
    %v512 = vmul.f32 %v466, %v252
    %v513 = vmul.f32 %v466, %v253
    %v514 = vmul.f32 %v470, %v252
    %v515 = vmul.f32 %v470, %v253
    %v516 = vmul.f32 %v474, %v252
    %v517 = vmul.f32 %v474, %v253
    %v518 = vmul.f32 %v478, %v252
    %v519 = vmul.f32 %v478, %v253
    %v520 = vmul.f32 %v482, %v252
    %v521 = vmul.f32 %v482, %v253
    %v522 = vmul.f32 %v486, %v252
    %v523 = vmul.f32 %v486, %v253
    %v524 = vmul.f32 %v490, %v252
    %v525 = vmul.f32 %v490, %v253
    %v526 = vmul.f32 %v494, %v252
    %v527 = vmul.f32 %v494, %v253
    %v528 = vadd.f32 %v24, %v496
    %v529 = vadd.f32 %v25, %v497
    %v530 = vadd.f32 %v26, %v498
    %v531 = vadd.f32 %v27, %v499
    %v532 = vadd.f32 %v28, %v500
    %v533 = vadd.f32 %v29, %v501
    %v534 = vadd.f32 %v30, %v502
    %v535 = vadd.f32 %v31, %v503
    %v536 = vadd.f32 %v32, %v504
    %v537 = vadd.f32 %v33, %v505
    %v538 = vadd.f32 %v34, %v506
    %v539 = vadd.f32 %v35, %v507
    %v540 = vadd.f32 %v36, %v508
    %v541 = vadd.f32 %v37, %v509
    %v542 = vadd.f32 %v38, %v510
    %v543 = vadd.f32 %v39, %v511
    %v544 = vadd.f32 %v40, %v512
    %v545 = vadd.f32 %v41, %v513
    %v546 = vadd.f32 %v42, %v514
    %v547 = vadd.f32 %v43, %v515
    %v548 = vadd.f32 %v44, %v516
    %v549 = vadd.f32 %v45, %v517
    %v550 = vadd.f32 %v46, %v518
    %v551 = vadd.f32 %v47, %v519
    %v552 = vadd.f32 %v48, %v520
    %v553 = vadd.f32 %v49, %v521
    %v554 = vadd.f32 %v50, %v522
    %v555 = vadd.f32 %v51, %v523
    %v556 = vadd.f32 %v52, %v524
    %v557 = vadd.f32 %v53, %v525
    %v558 = vadd.f32 %v54, %v526
    %v559 = vadd.f32 %v55, %v527
    %560 = vset.pattern.permute.xlu0 1
    %561 = vperm.xlu0 %560, %v371
    %v562 = vpop.permute.xlu0 %561
    %564 = vset.pattern.permute.xlu0 1
    %565 = vperm.xlu0 %564, %v375
    %v566 = vpop.permute.xlu0 %565
    %568 = vset.pattern.permute.xlu0 1
    %569 = vperm.xlu0 %568, %v379
    %v570 = vpop.permute.xlu0 %569
    %572 = vset.pattern.permute.xlu0 1
    %573 = vperm.xlu0 %572, %v383
    %v574 = vpop.permute.xlu0 %573
    %576 = vset.pattern.permute.xlu0 1
    %577 = vperm.xlu0 %576, %v387
    %v578 = vpop.permute.xlu0 %577
    %580 = vset.pattern.permute.xlu0 1
    %581 = vperm.xlu0 %580, %v391
    %v582 = vpop.permute.xlu0 %581
    %584 = vset.pattern.permute.xlu0 1
    %585 = vperm.xlu0 %584, %v395
    %v586 = vpop.permute.xlu0 %585
    %588 = vset.pattern.permute.xlu0 1
    %589 = vperm.xlu0 %588, %v399
    %v590 = vpop.permute.xlu0 %589
    %592 = vset.pattern.permute.xlu0 1
    %593 = vperm.xlu0 %592, %v403
    %v594 = vpop.permute.xlu0 %593
    %596 = vset.pattern.permute.xlu0 1
    %597 = vperm.xlu0 %596, %v407
    %v598 = vpop.permute.xlu0 %597
    %600 = vset.pattern.permute.xlu0 1
    %601 = vperm.xlu0 %600, %v411
    %v602 = vpop.permute.xlu0 %601
    %604 = vset.pattern.permute.xlu0 1
    %605 = vperm.xlu0 %604, %v415
    %v606 = vpop.permute.xlu0 %605
    %608 = vset.pattern.permute.xlu0 1
    %609 = vperm.xlu0 %608, %v419
    %v610 = vpop.permute.xlu0 %609
    %612 = vset.pattern.permute.xlu0 1
    %613 = vperm.xlu0 %612, %v423
    %v614 = vpop.permute.xlu0 %613
    %616 = vset.pattern.permute.xlu0 1
    %617 = vperm.xlu0 %616, %v427
    %v618 = vpop.permute.xlu0 %617
    %620 = vset.pattern.permute.xlu0 1
    %621 = vperm.xlu0 %620, %v431
    %v622 = vpop.permute.xlu0 %621
    %v624 = vmul.f32 %v562, %v254
    %v625 = vmul.f32 %v562, %v255
    %v626 = vmul.f32 %v566, %v254
    %v627 = vmul.f32 %v566, %v255
    %v628 = vmul.f32 %v570, %v254
    %v629 = vmul.f32 %v570, %v255
    %v630 = vmul.f32 %v574, %v254
    %v631 = vmul.f32 %v574, %v255
    %v632 = vmul.f32 %v578, %v254
    %v633 = vmul.f32 %v578, %v255
    %v634 = vmul.f32 %v582, %v254
    %v635 = vmul.f32 %v582, %v255
    %v636 = vmul.f32 %v586, %v254
    %v637 = vmul.f32 %v586, %v255
    %v638 = vmul.f32 %v590, %v254
    %v639 = vmul.f32 %v590, %v255
    %v640 = vmul.f32 %v594, %v254
    %v641 = vmul.f32 %v594, %v255
    %v642 = vmul.f32 %v598, %v254
    %v643 = vmul.f32 %v598, %v255
    %v644 = vmul.f32 %v602, %v254
    %v645 = vmul.f32 %v602, %v255
    %v646 = vmul.f32 %v606, %v254
    %v647 = vmul.f32 %v606, %v255
    %v648 = vmul.f32 %v610, %v254
    %v649 = vmul.f32 %v610, %v255
    %v650 = vmul.f32 %v614, %v254
    %v651 = vmul.f32 %v614, %v255
    %v652 = vmul.f32 %v618, %v254
    %v653 = vmul.f32 %v618, %v255
    %v654 = vmul.f32 %v622, %v254
    %v655 = vmul.f32 %v622, %v255
    %v656 = vadd.f32 %v528, %v624
    %v657 = vadd.f32 %v529, %v625
    %v658 = vadd.f32 %v530, %v626
    %v659 = vadd.f32 %v531, %v627
    %v660 = vadd.f32 %v532, %v628
    %v661 = vadd.f32 %v533, %v629
    %v662 = vadd.f32 %v534, %v630
    %v663 = vadd.f32 %v535, %v631
    %v664 = vadd.f32 %v536, %v632
    %v665 = vadd.f32 %v537, %v633
    %v666 = vadd.f32 %v538, %v634
    %v667 = vadd.f32 %v539, %v635
    %v668 = vadd.f32 %v540, %v636
    %v669 = vadd.f32 %v541, %v637
    %v670 = vadd.f32 %v542, %v638
    %v671 = vadd.f32 %v543, %v639
    %v672 = vadd.f32 %v544, %v640
    %v673 = vadd.f32 %v545, %v641
    %v674 = vadd.f32 %v546, %v642
    %v675 = vadd.f32 %v547, %v643
    %v676 = vadd.f32 %v548, %v644
    %v677 = vadd.f32 %v549, %v645
    %v678 = vadd.f32 %v550, %v646
    %v679 = vadd.f32 %v551, %v647
    %v680 = vadd.f32 %v552, %v648
    %v681 = vadd.f32 %v553, %v649
    %v682 = vadd.f32 %v554, %v650
    %v683 = vadd.f32 %v555, %v651
    %v684 = vadd.f32 %v556, %v652
    %v685 = vadd.f32 %v557, %v653
    %v686 = vadd.f32 %v558, %v654
    %v687 = vadd.f32 %v559, %v655
    %688 = vset.pattern.permute.xlu0 2
    %689 = vperm.xlu0 %688, %v371
    %v690 = vpop.permute.xlu0 %689
    %692 = vset.pattern.permute.xlu0 2
    %693 = vperm.xlu0 %692, %v375
    %v694 = vpop.permute.xlu0 %693
    %696 = vset.pattern.permute.xlu0 2
    %697 = vperm.xlu0 %696, %v379
    %v698 = vpop.permute.xlu0 %697
    %700 = vset.pattern.permute.xlu0 2
    %701 = vperm.xlu0 %700, %v383
    %v702 = vpop.permute.xlu0 %701
    %704 = vset.pattern.permute.xlu0 2
    %705 = vperm.xlu0 %704, %v387
    %v706 = vpop.permute.xlu0 %705
    %708 = vset.pattern.permute.xlu0 2
    %709 = vperm.xlu0 %708, %v391
    %v710 = vpop.permute.xlu0 %709
    %712 = vset.pattern.permute.xlu0 2
    %713 = vperm.xlu0 %712, %v395
    %v714 = vpop.permute.xlu0 %713
    %716 = vset.pattern.permute.xlu0 2
    %717 = vperm.xlu0 %716, %v399
    %v718 = vpop.permute.xlu0 %717
    %720 = vset.pattern.permute.xlu0 2
    %721 = vperm.xlu0 %720, %v403
    %v722 = vpop.permute.xlu0 %721
    %724 = vset.pattern.permute.xlu0 2
    %725 = vperm.xlu0 %724, %v407
    %v726 = vpop.permute.xlu0 %725
    %728 = vset.pattern.permute.xlu0 2
    %729 = vperm.xlu0 %728, %v411
    %v730 = vpop.permute.xlu0 %729
    %732 = vset.pattern.permute.xlu0 2
    %733 = vperm.xlu0 %732, %v415
    %v734 = vpop.permute.xlu0 %733
    %736 = vset.pattern.permute.xlu0 2
    %737 = vperm.xlu0 %736, %v419
    %v738 = vpop.permute.xlu0 %737
    %740 = vset.pattern.permute.xlu0 2
    %741 = vperm.xlu0 %740, %v423
    %v742 = vpop.permute.xlu0 %741
    %744 = vset.pattern.permute.xlu0 2
    %745 = vperm.xlu0 %744, %v427
    %v746 = vpop.permute.xlu0 %745
    %748 = vset.pattern.permute.xlu0 2
    %749 = vperm.xlu0 %748, %v431
    %v750 = vpop.permute.xlu0 %749
    %v752 = vmul.f32 %v690, %v256
    %v753 = vmul.f32 %v690, %v257
    %v754 = vmul.f32 %v694, %v256
    %v755 = vmul.f32 %v694, %v257
    %v756 = vmul.f32 %v698, %v256
    %v757 = vmul.f32 %v698, %v257
    %v758 = vmul.f32 %v702, %v256
    %v759 = vmul.f32 %v702, %v257
    %v760 = vmul.f32 %v706, %v256
    %v761 = vmul.f32 %v706, %v257
    %v762 = vmul.f32 %v710, %v256
    %v763 = vmul.f32 %v710, %v257
    %v764 = vmul.f32 %v714, %v256
    %v765 = vmul.f32 %v714, %v257
    %v766 = vmul.f32 %v718, %v256
    %v767 = vmul.f32 %v718, %v257
    %v768 = vmul.f32 %v722, %v256
    %v769 = vmul.f32 %v722, %v257
    %v770 = vmul.f32 %v726, %v256
    %v771 = vmul.f32 %v726, %v257
    %v772 = vmul.f32 %v730, %v256
    %v773 = vmul.f32 %v730, %v257
    %v774 = vmul.f32 %v734, %v256
    %v775 = vmul.f32 %v734, %v257
    %v776 = vmul.f32 %v738, %v256
    %v777 = vmul.f32 %v738, %v257
    %v778 = vmul.f32 %v742, %v256
    %v779 = vmul.f32 %v742, %v257
    %v780 = vmul.f32 %v746, %v256
    %v781 = vmul.f32 %v746, %v257
    %v782 = vmul.f32 %v750, %v256
    %v783 = vmul.f32 %v750, %v257
    %v784 = vadd.f32 %v656, %v752
    %v785 = vadd.f32 %v657, %v753
    %v786 = vadd.f32 %v658, %v754
    %v787 = vadd.f32 %v659, %v755
    %v788 = vadd.f32 %v660, %v756
    %v789 = vadd.f32 %v661, %v757
    %v790 = vadd.f32 %v662, %v758
    %v791 = vadd.f32 %v663, %v759
    %v792 = vadd.f32 %v664, %v760
    %v793 = vadd.f32 %v665, %v761
    %v794 = vadd.f32 %v666, %v762
    %v795 = vadd.f32 %v667, %v763
    %v796 = vadd.f32 %v668, %v764
    %v797 = vadd.f32 %v669, %v765
    %v798 = vadd.f32 %v670, %v766
    %v799 = vadd.f32 %v671, %v767
    %v800 = vadd.f32 %v672, %v768
    %v801 = vadd.f32 %v673, %v769
    %v802 = vadd.f32 %v674, %v770
    %v803 = vadd.f32 %v675, %v771
    %v804 = vadd.f32 %v676, %v772
    %v805 = vadd.f32 %v677, %v773
    %v806 = vadd.f32 %v678, %v774
    %v807 = vadd.f32 %v679, %v775
    %v808 = vadd.f32 %v680, %v776
    %v809 = vadd.f32 %v681, %v777
    %v810 = vadd.f32 %v682, %v778
    %v811 = vadd.f32 %v683, %v779
    %v812 = vadd.f32 %v684, %v780
    %v813 = vadd.f32 %v685, %v781
    %v814 = vadd.f32 %v686, %v782
    %v815 = vadd.f32 %v687, %v783
    %816 = vset.pattern.permute.xlu0 3
    %817 = vperm.xlu0 %816, %v371
    %v818 = vpop.permute.xlu0 %817
    %820 = vset.pattern.permute.xlu0 3
    %821 = vperm.xlu0 %820, %v375
    %v822 = vpop.permute.xlu0 %821
    %824 = vset.pattern.permute.xlu0 3
    %825 = vperm.xlu0 %824, %v379
    %v826 = vpop.permute.xlu0 %825
    %828 = vset.pattern.permute.xlu0 3
    %829 = vperm.xlu0 %828, %v383
    %v830 = vpop.permute.xlu0 %829
    %832 = vset.pattern.permute.xlu0 3
    %833 = vperm.xlu0 %832, %v387
    %v834 = vpop.permute.xlu0 %833
    %836 = vset.pattern.permute.xlu0 3
    %837 = vperm.xlu0 %836, %v391
    %v838 = vpop.permute.xlu0 %837
    %840 = vset.pattern.permute.xlu0 3
    %841 = vperm.xlu0 %840, %v395
    %v842 = vpop.permute.xlu0 %841
    %844 = vset.pattern.permute.xlu0 3
    %845 = vperm.xlu0 %844, %v399
    %v846 = vpop.permute.xlu0 %845
    %848 = vset.pattern.permute.xlu0 3
    %849 = vperm.xlu0 %848, %v403
    %v850 = vpop.permute.xlu0 %849
    %852 = vset.pattern.permute.xlu0 3
    %853 = vperm.xlu0 %852, %v407
    %v854 = vpop.permute.xlu0 %853
    %856 = vset.pattern.permute.xlu0 3
    %857 = vperm.xlu0 %856, %v411
    %v858 = vpop.permute.xlu0 %857
    %860 = vset.pattern.permute.xlu0 3
    %861 = vperm.xlu0 %860, %v415
    %v862 = vpop.permute.xlu0 %861
    %864 = vset.pattern.permute.xlu0 3
    %865 = vperm.xlu0 %864, %v419
    %v866 = vpop.permute.xlu0 %865
    %868 = vset.pattern.permute.xlu0 3
    %869 = vperm.xlu0 %868, %v423
    %v870 = vpop.permute.xlu0 %869
    %872 = vset.pattern.permute.xlu0 3
    %873 = vperm.xlu0 %872, %v427
    %v874 = vpop.permute.xlu0 %873
    %876 = vset.pattern.permute.xlu0 3
    %877 = vperm.xlu0 %876, %v431
    %v878 = vpop.permute.xlu0 %877
    %v880 = vmul.f32 %v818, %v258
    %v881 = vmul.f32 %v818, %v259
    %v882 = vmul.f32 %v822, %v258
    %v883 = vmul.f32 %v822, %v259
    %v884 = vmul.f32 %v826, %v258
    %v885 = vmul.f32 %v826, %v259
    %v886 = vmul.f32 %v830, %v258
    %v887 = vmul.f32 %v830, %v259
    %v888 = vmul.f32 %v834, %v258
    %v889 = vmul.f32 %v834, %v259
    %v890 = vmul.f32 %v838, %v258
    %v891 = vmul.f32 %v838, %v259
    %v892 = vmul.f32 %v842, %v258
    %v893 = vmul.f32 %v842, %v259
    %v894 = vmul.f32 %v846, %v258
    %v895 = vmul.f32 %v846, %v259
    %v896 = vmul.f32 %v850, %v258
    %v897 = vmul.f32 %v850, %v259
    %v898 = vmul.f32 %v854, %v258
    %v899 = vmul.f32 %v854, %v259
    %v900 = vmul.f32 %v858, %v258
    %v901 = vmul.f32 %v858, %v259
    %v902 = vmul.f32 %v862, %v258
    %v903 = vmul.f32 %v862, %v259
    %v904 = vmul.f32 %v866, %v258
    %v905 = vmul.f32 %v866, %v259
    %v906 = vmul.f32 %v870, %v258
    %v907 = vmul.f32 %v870, %v259
    %v908 = vmul.f32 %v874, %v258
    %v909 = vmul.f32 %v874, %v259
    %v910 = vmul.f32 %v878, %v258
    %v911 = vmul.f32 %v878, %v259
    %v912 = vadd.f32 %v784, %v880
    %v913 = vadd.f32 %v785, %v881
    %v914 = vadd.f32 %v786, %v882
    %v915 = vadd.f32 %v787, %v883
    %v916 = vadd.f32 %v788, %v884
    %v917 = vadd.f32 %v789, %v885
    %v918 = vadd.f32 %v790, %v886
    %v919 = vadd.f32 %v791, %v887
    %v920 = vadd.f32 %v792, %v888
    %v921 = vadd.f32 %v793, %v889
    %v922 = vadd.f32 %v794, %v890
    %v923 = vadd.f32 %v795, %v891
    %v924 = vadd.f32 %v796, %v892
    %v925 = vadd.f32 %v797, %v893
    %v926 = vadd.f32 %v798, %v894
    %v927 = vadd.f32 %v799, %v895
    %v928 = vadd.f32 %v800, %v896
    %v929 = vadd.f32 %v801, %v897
    %v930 = vadd.f32 %v802, %v898
    %v931 = vadd.f32 %v803, %v899
    %v932 = vadd.f32 %v804, %v900
    %v933 = vadd.f32 %v805, %v901
    %v934 = vadd.f32 %v806, %v902
    %v935 = vadd.f32 %v807, %v903
    %v936 = vadd.f32 %v808, %v904
    %v937 = vadd.f32 %v809, %v905
    %v938 = vadd.f32 %v810, %v906
    %v939 = vadd.f32 %v811, %v907
    %v940 = vadd.f32 %v812, %v908
    %v941 = vadd.f32 %v813, %v909
    %v942 = vadd.f32 %v814, %v910
    %v943 = vadd.f32 %v815, %v911
    %944 = vset.pattern.permute.xlu0 4
    %945 = vperm.xlu0 %944, %v371
    %v946 = vpop.permute.xlu0 %945
    %948 = vset.pattern.permute.xlu0 4
    %949 = vperm.xlu0 %948, %v375
    %v950 = vpop.permute.xlu0 %949
    %952 = vset.pattern.permute.xlu0 4
    %953 = vperm.xlu0 %952, %v379
    %v954 = vpop.permute.xlu0 %953
    %956 = vset.pattern.permute.xlu0 4
    %957 = vperm.xlu0 %956, %v383
    %v958 = vpop.permute.xlu0 %957
    %960 = vset.pattern.permute.xlu0 4
    %961 = vperm.xlu0 %960, %v387
    %v962 = vpop.permute.xlu0 %961
    %964 = vset.pattern.permute.xlu0 4
    %965 = vperm.xlu0 %964, %v391
    %v966 = vpop.permute.xlu0 %965
    %968 = vset.pattern.permute.xlu0 4
    %969 = vperm.xlu0 %968, %v395
    %v970 = vpop.permute.xlu0 %969
    %972 = vset.pattern.permute.xlu0 4
    %973 = vperm.xlu0 %972, %v399
    %v974 = vpop.permute.xlu0 %973
    %976 = vset.pattern.permute.xlu0 4
    %977 = vperm.xlu0 %976, %v403
    %v978 = vpop.permute.xlu0 %977
    %980 = vset.pattern.permute.xlu0 4
    %981 = vperm.xlu0 %980, %v407
    %v982 = vpop.permute.xlu0 %981
    %984 = vset.pattern.permute.xlu0 4
    %985 = vperm.xlu0 %984, %v411
    %v986 = vpop.permute.xlu0 %985
    %988 = vset.pattern.permute.xlu0 4
    %989 = vperm.xlu0 %988, %v415
    %v990 = vpop.permute.xlu0 %989
    %992 = vset.pattern.permute.xlu0 4
    %993 = vperm.xlu0 %992, %v419
    %v994 = vpop.permute.xlu0 %993
    %996 = vset.pattern.permute.xlu0 4
    %997 = vperm.xlu0 %996, %v423
    %v998 = vpop.permute.xlu0 %997
    %1000 = vset.pattern.permute.xlu0 4
    %1001 = vperm.xlu0 %1000, %v427
    %v1002 = vpop.permute.xlu0 %1001
    %1004 = vset.pattern.permute.xlu0 4
    %1005 = vperm.xlu0 %1004, %v431
    %v1006 = vpop.permute.xlu0 %1005
    %v1008 = vmul.f32 %v946, %v260
    %v1009 = vmul.f32 %v946, %v261
    %v1010 = vmul.f32 %v950, %v260
    %v1011 = vmul.f32 %v950, %v261
    %v1012 = vmul.f32 %v954, %v260
    %v1013 = vmul.f32 %v954, %v261
    %v1014 = vmul.f32 %v958, %v260
    %v1015 = vmul.f32 %v958, %v261
    %v1016 = vmul.f32 %v962, %v260
    %v1017 = vmul.f32 %v962, %v261
    %v1018 = vmul.f32 %v966, %v260
    %v1019 = vmul.f32 %v966, %v261
    %v1020 = vmul.f32 %v970, %v260
    %v1021 = vmul.f32 %v970, %v261
    %v1022 = vmul.f32 %v974, %v260
    %v1023 = vmul.f32 %v974, %v261
    %v1024 = vmul.f32 %v978, %v260
    %v1025 = vmul.f32 %v978, %v261
    %v1026 = vmul.f32 %v982, %v260
    %v1027 = vmul.f32 %v982, %v261
    %v1028 = vmul.f32 %v986, %v260
    %v1029 = vmul.f32 %v986, %v261
    %v1030 = vmul.f32 %v990, %v260
    %v1031 = vmul.f32 %v990, %v261
    %v1032 = vmul.f32 %v994, %v260
    %v1033 = vmul.f32 %v994, %v261
    %v1034 = vmul.f32 %v998, %v260
    %v1035 = vmul.f32 %v998, %v261
    %v1036 = vmul.f32 %v1002, %v260
    %v1037 = vmul.f32 %v1002, %v261
    %v1038 = vmul.f32 %v1006, %v260
    %v1039 = vmul.f32 %v1006, %v261
    %v1040 = vadd.f32 %v912, %v1008
    %v1041 = vadd.f32 %v913, %v1009
    %v1042 = vadd.f32 %v914, %v1010
    %v1043 = vadd.f32 %v915, %v1011
    %v1044 = vadd.f32 %v916, %v1012
    %v1045 = vadd.f32 %v917, %v1013
    %v1046 = vadd.f32 %v918, %v1014
    %v1047 = vadd.f32 %v919, %v1015
    %v1048 = vadd.f32 %v920, %v1016
    %v1049 = vadd.f32 %v921, %v1017
    %v1050 = vadd.f32 %v922, %v1018
    %v1051 = vadd.f32 %v923, %v1019
    %v1052 = vadd.f32 %v924, %v1020
    %v1053 = vadd.f32 %v925, %v1021
    %v1054 = vadd.f32 %v926, %v1022
    %v1055 = vadd.f32 %v927, %v1023
    %v1056 = vadd.f32 %v928, %v1024
    %v1057 = vadd.f32 %v929, %v1025
    %v1058 = vadd.f32 %v930, %v1026
    %v1059 = vadd.f32 %v931, %v1027
    %v1060 = vadd.f32 %v932, %v1028
    %v1061 = vadd.f32 %v933, %v1029
    %v1062 = vadd.f32 %v934, %v1030
    %v1063 = vadd.f32 %v935, %v1031
    %v1064 = vadd.f32 %v936, %v1032
    %v1065 = vadd.f32 %v937, %v1033
    %v1066 = vadd.f32 %v938, %v1034
    %v1067 = vadd.f32 %v939, %v1035
    %v1068 = vadd.f32 %v940, %v1036
    %v1069 = vadd.f32 %v941, %v1037
    %v1070 = vadd.f32 %v942, %v1038
    %v1071 = vadd.f32 %v943, %v1039
    %1072 = vset.pattern.permute.xlu0 5
    %1073 = vperm.xlu0 %1072, %v371
    %v1074 = vpop.permute.xlu0 %1073
    %1076 = vset.pattern.permute.xlu0 5
    %1077 = vperm.xlu0 %1076, %v375
    %v1078 = vpop.permute.xlu0 %1077
    %1080 = vset.pattern.permute.xlu0 5
    %1081 = vperm.xlu0 %1080, %v379
    %v1082 = vpop.permute.xlu0 %1081
    %1084 = vset.pattern.permute.xlu0 5
    %1085 = vperm.xlu0 %1084, %v383
    %v1086 = vpop.permute.xlu0 %1085
    %1088 = vset.pattern.permute.xlu0 5
    %1089 = vperm.xlu0 %1088, %v387
    %v1090 = vpop.permute.xlu0 %1089
    %1092 = vset.pattern.permute.xlu0 5
    %1093 = vperm.xlu0 %1092, %v391
    %v1094 = vpop.permute.xlu0 %1093
    %1096 = vset.pattern.permute.xlu0 5
    %1097 = vperm.xlu0 %1096, %v395
    %v1098 = vpop.permute.xlu0 %1097
    %1100 = vset.pattern.permute.xlu0 5
    %1101 = vperm.xlu0 %1100, %v399
    %v1102 = vpop.permute.xlu0 %1101
    %1104 = vset.pattern.permute.xlu0 5
    %1105 = vperm.xlu0 %1104, %v403
    %v1106 = vpop.permute.xlu0 %1105
    %1108 = vset.pattern.permute.xlu0 5
    %1109 = vperm.xlu0 %1108, %v407
    %v1110 = vpop.permute.xlu0 %1109
    %1112 = vset.pattern.permute.xlu0 5
    %1113 = vperm.xlu0 %1112, %v411
    %v1114 = vpop.permute.xlu0 %1113
    %1116 = vset.pattern.permute.xlu0 5
    %1117 = vperm.xlu0 %1116, %v415
    %v1118 = vpop.permute.xlu0 %1117
    %1120 = vset.pattern.permute.xlu0 5
    %1121 = vperm.xlu0 %1120, %v419
    %v1122 = vpop.permute.xlu0 %1121
    %1124 = vset.pattern.permute.xlu0 5
    %1125 = vperm.xlu0 %1124, %v423
    %v1126 = vpop.permute.xlu0 %1125
    %1128 = vset.pattern.permute.xlu0 5
    %1129 = vperm.xlu0 %1128, %v427
    %v1130 = vpop.permute.xlu0 %1129
    %1132 = vset.pattern.permute.xlu0 5
    %1133 = vperm.xlu0 %1132, %v431
    %v1134 = vpop.permute.xlu0 %1133
    %v1136 = vmul.f32 %v1074, %v262
    %v1137 = vmul.f32 %v1074, %v263
    %v1138 = vmul.f32 %v1078, %v262
    %v1139 = vmul.f32 %v1078, %v263
    %v1140 = vmul.f32 %v1082, %v262
    %v1141 = vmul.f32 %v1082, %v263
    %v1142 = vmul.f32 %v1086, %v262
    %v1143 = vmul.f32 %v1086, %v263
    %v1144 = vmul.f32 %v1090, %v262
    %v1145 = vmul.f32 %v1090, %v263
    %v1146 = vmul.f32 %v1094, %v262
    %v1147 = vmul.f32 %v1094, %v263
    %v1148 = vmul.f32 %v1098, %v262
    %v1149 = vmul.f32 %v1098, %v263
    %v1150 = vmul.f32 %v1102, %v262
    %v1151 = vmul.f32 %v1102, %v263
    %v1152 = vmul.f32 %v1106, %v262
    %v1153 = vmul.f32 %v1106, %v263
    %v1154 = vmul.f32 %v1110, %v262
    %v1155 = vmul.f32 %v1110, %v263
    %v1156 = vmul.f32 %v1114, %v262
    %v1157 = vmul.f32 %v1114, %v263
    %v1158 = vmul.f32 %v1118, %v262
    %v1159 = vmul.f32 %v1118, %v263
    %v1160 = vmul.f32 %v1122, %v262
    %v1161 = vmul.f32 %v1122, %v263
    %v1162 = vmul.f32 %v1126, %v262
    %v1163 = vmul.f32 %v1126, %v263
    %v1164 = vmul.f32 %v1130, %v262
    %v1165 = vmul.f32 %v1130, %v263
    %v1166 = vmul.f32 %v1134, %v262
    %v1167 = vmul.f32 %v1134, %v263
    %v1168 = vadd.f32 %v1040, %v1136
    %v1169 = vadd.f32 %v1041, %v1137
    %v1170 = vadd.f32 %v1042, %v1138
    %v1171 = vadd.f32 %v1043, %v1139
    %v1172 = vadd.f32 %v1044, %v1140
    %v1173 = vadd.f32 %v1045, %v1141
    %v1174 = vadd.f32 %v1046, %v1142
    %v1175 = vadd.f32 %v1047, %v1143
    %v1176 = vadd.f32 %v1048, %v1144
    %v1177 = vadd.f32 %v1049, %v1145
    %v1178 = vadd.f32 %v1050, %v1146
    %v1179 = vadd.f32 %v1051, %v1147
    %v1180 = vadd.f32 %v1052, %v1148
    %v1181 = vadd.f32 %v1053, %v1149
    %v1182 = vadd.f32 %v1054, %v1150
    %v1183 = vadd.f32 %v1055, %v1151
    %v1184 = vadd.f32 %v1056, %v1152
    %v1185 = vadd.f32 %v1057, %v1153
    %v1186 = vadd.f32 %v1058, %v1154
    %v1187 = vadd.f32 %v1059, %v1155
    %v1188 = vadd.f32 %v1060, %v1156
    %v1189 = vadd.f32 %v1061, %v1157
    %v1190 = vadd.f32 %v1062, %v1158
    %v1191 = vadd.f32 %v1063, %v1159
    %v1192 = vadd.f32 %v1064, %v1160
    %v1193 = vadd.f32 %v1065, %v1161
    %v1194 = vadd.f32 %v1066, %v1162
    %v1195 = vadd.f32 %v1067, %v1163
    %v1196 = vadd.f32 %v1068, %v1164
    %v1197 = vadd.f32 %v1069, %v1165
    %v1198 = vadd.f32 %v1070, %v1166
    %v1199 = vadd.f32 %v1071, %v1167
    %1200 = vset.pattern.permute.xlu0 6
    %1201 = vperm.xlu0 %1200, %v371
    %v1202 = vpop.permute.xlu0 %1201
    %1204 = vset.pattern.permute.xlu0 6
    %1205 = vperm.xlu0 %1204, %v375
    %v1206 = vpop.permute.xlu0 %1205
    %1208 = vset.pattern.permute.xlu0 6
    %1209 = vperm.xlu0 %1208, %v379
    %v1210 = vpop.permute.xlu0 %1209
    %1212 = vset.pattern.permute.xlu0 6
    %1213 = vperm.xlu0 %1212, %v383
    %v1214 = vpop.permute.xlu0 %1213
    %1216 = vset.pattern.permute.xlu0 6
    %1217 = vperm.xlu0 %1216, %v387
    %v1218 = vpop.permute.xlu0 %1217
    %1220 = vset.pattern.permute.xlu0 6
    %1221 = vperm.xlu0 %1220, %v391
    %v1222 = vpop.permute.xlu0 %1221
    %1224 = vset.pattern.permute.xlu0 6
    %1225 = vperm.xlu0 %1224, %v395
    %v1226 = vpop.permute.xlu0 %1225
    %1228 = vset.pattern.permute.xlu0 6
    %1229 = vperm.xlu0 %1228, %v399
    %v1230 = vpop.permute.xlu0 %1229
    %1232 = vset.pattern.permute.xlu0 6
    %1233 = vperm.xlu0 %1232, %v403
    %v1234 = vpop.permute.xlu0 %1233
    %1236 = vset.pattern.permute.xlu0 6
    %1237 = vperm.xlu0 %1236, %v407
    %v1238 = vpop.permute.xlu0 %1237
    %1240 = vset.pattern.permute.xlu0 6
    %1241 = vperm.xlu0 %1240, %v411
    %v1242 = vpop.permute.xlu0 %1241
    %1244 = vset.pattern.permute.xlu0 6
    %1245 = vperm.xlu0 %1244, %v415
    %v1246 = vpop.permute.xlu0 %1245
    %1248 = vset.pattern.permute.xlu0 6
    %1249 = vperm.xlu0 %1248, %v419
    %v1250 = vpop.permute.xlu0 %1249
    %1252 = vset.pattern.permute.xlu0 6
    %1253 = vperm.xlu0 %1252, %v423
    %v1254 = vpop.permute.xlu0 %1253
    %1256 = vset.pattern.permute.xlu0 6
    %1257 = vperm.xlu0 %1256, %v427
    %v1258 = vpop.permute.xlu0 %1257
    %1260 = vset.pattern.permute.xlu0 6
    %1261 = vperm.xlu0 %1260, %v431
    %v1262 = vpop.permute.xlu0 %1261
    %v1264 = vmul.f32 %v1202, %v264
    %v1265 = vmul.f32 %v1202, %v265
    %v1266 = vmul.f32 %v1206, %v264
    %v1267 = vmul.f32 %v1206, %v265
    %v1268 = vmul.f32 %v1210, %v264
    %v1269 = vmul.f32 %v1210, %v265
    %v1270 = vmul.f32 %v1214, %v264
    %v1271 = vmul.f32 %v1214, %v265
    %v1272 = vmul.f32 %v1218, %v264
    %v1273 = vmul.f32 %v1218, %v265
    %v1274 = vmul.f32 %v1222, %v264
    %v1275 = vmul.f32 %v1222, %v265
    %v1276 = vmul.f32 %v1226, %v264
    %v1277 = vmul.f32 %v1226, %v265
    %v1278 = vmul.f32 %v1230, %v264
    %v1279 = vmul.f32 %v1230, %v265
    %v1280 = vmul.f32 %v1234, %v264
    %v1281 = vmul.f32 %v1234, %v265
    %v1282 = vmul.f32 %v1238, %v264
    %v1283 = vmul.f32 %v1238, %v265
    %v1284 = vmul.f32 %v1242, %v264
    %v1285 = vmul.f32 %v1242, %v265
    %v1286 = vmul.f32 %v1246, %v264
    %v1287 = vmul.f32 %v1246, %v265
    %v1288 = vmul.f32 %v1250, %v264
    %v1289 = vmul.f32 %v1250, %v265
    %v1290 = vmul.f32 %v1254, %v264
    %v1291 = vmul.f32 %v1254, %v265
    %v1292 = vmul.f32 %v1258, %v264
    %v1293 = vmul.f32 %v1258, %v265
    %v1294 = vmul.f32 %v1262, %v264
    %v1295 = vmul.f32 %v1262, %v265
    %v1296 = vadd.f32 %v1168, %v1264
    %v1297 = vadd.f32 %v1169, %v1265
    %v1298 = vadd.f32 %v1170, %v1266
    %v1299 = vadd.f32 %v1171, %v1267
    %v1300 = vadd.f32 %v1172, %v1268
    %v1301 = vadd.f32 %v1173, %v1269
    %v1302 = vadd.f32 %v1174, %v1270
    %v1303 = vadd.f32 %v1175, %v1271
    %v1304 = vadd.f32 %v1176, %v1272
    %v1305 = vadd.f32 %v1177, %v1273
    %v1306 = vadd.f32 %v1178, %v1274
    %v1307 = vadd.f32 %v1179, %v1275
    %v1308 = vadd.f32 %v1180, %v1276
    %v1309 = vadd.f32 %v1181, %v1277
    %v1310 = vadd.f32 %v1182, %v1278
    %v1311 = vadd.f32 %v1183, %v1279
    %v1312 = vadd.f32 %v1184, %v1280
    %v1313 = vadd.f32 %v1185, %v1281
    %v1314 = vadd.f32 %v1186, %v1282
    %v1315 = vadd.f32 %v1187, %v1283
    %v1316 = vadd.f32 %v1188, %v1284
    %v1317 = vadd.f32 %v1189, %v1285
    %v1318 = vadd.f32 %v1190, %v1286
    %v1319 = vadd.f32 %v1191, %v1287
    %v1320 = vadd.f32 %v1192, %v1288
    %v1321 = vadd.f32 %v1193, %v1289
    %v1322 = vadd.f32 %v1194, %v1290
    %v1323 = vadd.f32 %v1195, %v1291
    %v1324 = vadd.f32 %v1196, %v1292
    %v1325 = vadd.f32 %v1197, %v1293
    %v1326 = vadd.f32 %v1198, %v1294
    %v1327 = vadd.f32 %v1199, %v1295
    %1328 = vset.pattern.permute.xlu0 7
    %1329 = vperm.xlu0 %1328, %v371
    %v1330 = vpop.permute.xlu0 %1329
    %1332 = vset.pattern.permute.xlu0 7
    %1333 = vperm.xlu0 %1332, %v375
    %v1334 = vpop.permute.xlu0 %1333
    %1336 = vset.pattern.permute.xlu0 7
    %1337 = vperm.xlu0 %1336, %v379
    %v1338 = vpop.permute.xlu0 %1337
    %1340 = vset.pattern.permute.xlu0 7
    %1341 = vperm.xlu0 %1340, %v383
    %v1342 = vpop.permute.xlu0 %1341
    %1344 = vset.pattern.permute.xlu0 7
    %1345 = vperm.xlu0 %1344, %v387
    %v1346 = vpop.permute.xlu0 %1345
    %1348 = vset.pattern.permute.xlu0 7
    %1349 = vperm.xlu0 %1348, %v391
    %v1350 = vpop.permute.xlu0 %1349
    %1352 = vset.pattern.permute.xlu0 7
    %1353 = vperm.xlu0 %1352, %v395
    %v1354 = vpop.permute.xlu0 %1353
    %1356 = vset.pattern.permute.xlu0 7
    %1357 = vperm.xlu0 %1356, %v399
    %v1358 = vpop.permute.xlu0 %1357
    %1360 = vset.pattern.permute.xlu0 7
    %1361 = vperm.xlu0 %1360, %v403
    %v1362 = vpop.permute.xlu0 %1361
    %1364 = vset.pattern.permute.xlu0 7
    %1365 = vperm.xlu0 %1364, %v407
    %v1366 = vpop.permute.xlu0 %1365
    %1368 = vset.pattern.permute.xlu0 7
    %1369 = vperm.xlu0 %1368, %v411
    %v1370 = vpop.permute.xlu0 %1369
    %1372 = vset.pattern.permute.xlu0 7
    %1373 = vperm.xlu0 %1372, %v415
    %v1374 = vpop.permute.xlu0 %1373
    %1376 = vset.pattern.permute.xlu0 7
    %1377 = vperm.xlu0 %1376, %v419
    %v1378 = vpop.permute.xlu0 %1377
    %1380 = vset.pattern.permute.xlu0 7
    %1381 = vperm.xlu0 %1380, %v423
    %v1382 = vpop.permute.xlu0 %1381
    %1384 = vset.pattern.permute.xlu0 7
    %1385 = vperm.xlu0 %1384, %v427
    %v1386 = vpop.permute.xlu0 %1385
    %1388 = vset.pattern.permute.xlu0 7
    %1389 = vperm.xlu0 %1388, %v431
    %v1390 = vpop.permute.xlu0 %1389
    %v1392 = vmul.f32 %v1330, %v266
    %v1393 = vmul.f32 %v1330, %v267
    %v1394 = vmul.f32 %v1334, %v266
    %v1395 = vmul.f32 %v1334, %v267
    %v1396 = vmul.f32 %v1338, %v266
    %v1397 = vmul.f32 %v1338, %v267
    %v1398 = vmul.f32 %v1342, %v266
    %v1399 = vmul.f32 %v1342, %v267
    %v1400 = vmul.f32 %v1346, %v266
    %v1401 = vmul.f32 %v1346, %v267
    %v1402 = vmul.f32 %v1350, %v266
    %v1403 = vmul.f32 %v1350, %v267
    %v1404 = vmul.f32 %v1354, %v266
    %v1405 = vmul.f32 %v1354, %v267
    %v1406 = vmul.f32 %v1358, %v266
    %v1407 = vmul.f32 %v1358, %v267
    %v1408 = vmul.f32 %v1362, %v266
    %v1409 = vmul.f32 %v1362, %v267
    %v1410 = vmul.f32 %v1366, %v266
    %v1411 = vmul.f32 %v1366, %v267
    %v1412 = vmul.f32 %v1370, %v266
    %v1413 = vmul.f32 %v1370, %v267
    %v1414 = vmul.f32 %v1374, %v266
    %v1415 = vmul.f32 %v1374, %v267
    %v1416 = vmul.f32 %v1378, %v266
    %v1417 = vmul.f32 %v1378, %v267
    %v1418 = vmul.f32 %v1382, %v266
    %v1419 = vmul.f32 %v1382, %v267
    %v1420 = vmul.f32 %v1386, %v266
    %v1421 = vmul.f32 %v1386, %v267
    %v1422 = vmul.f32 %v1390, %v266
    %v1423 = vmul.f32 %v1390, %v267
    %v1424 = vadd.f32 %v1296, %v1392
    %v1425 = vadd.f32 %v1297, %v1393
    %v1426 = vadd.f32 %v1298, %v1394
    %v1427 = vadd.f32 %v1299, %v1395
    %v1428 = vadd.f32 %v1300, %v1396
    %v1429 = vadd.f32 %v1301, %v1397
    %v1430 = vadd.f32 %v1302, %v1398
    %v1431 = vadd.f32 %v1303, %v1399
    %v1432 = vadd.f32 %v1304, %v1400
    %v1433 = vadd.f32 %v1305, %v1401
    %v1434 = vadd.f32 %v1306, %v1402
    %v1435 = vadd.f32 %v1307, %v1403
    %v1436 = vadd.f32 %v1308, %v1404
    %v1437 = vadd.f32 %v1309, %v1405
    %v1438 = vadd.f32 %v1310, %v1406
    %v1439 = vadd.f32 %v1311, %v1407
    %v1440 = vadd.f32 %v1312, %v1408
    %v1441 = vadd.f32 %v1313, %v1409
    %v1442 = vadd.f32 %v1314, %v1410
    %v1443 = vadd.f32 %v1315, %v1411
    %v1444 = vadd.f32 %v1316, %v1412
    %v1445 = vadd.f32 %v1317, %v1413
    %v1446 = vadd.f32 %v1318, %v1414
    %v1447 = vadd.f32 %v1319, %v1415
    %v1448 = vadd.f32 %v1320, %v1416
    %v1449 = vadd.f32 %v1321, %v1417
    %v1450 = vadd.f32 %v1322, %v1418
    %v1451 = vadd.f32 %v1323, %v1419
    %v1452 = vadd.f32 %v1324, %v1420
    %v1453 = vadd.f32 %v1325, %v1421
    %v1454 = vadd.f32 %v1326, %v1422
    %v1455 = vadd.f32 %v1327, %v1423
    %v1456 = vld [vmem:[%s2] sm:$0xff]
    %v1457 = vld [vmem:[%s2 + $0x8] sm:$0xff]
    %v1458 = vld [vmem:[%s2 + $0x10] sm:$0xff]
    %v1459 = vld [vmem:[%s2 + $0x18] sm:$0xff]
    %v1460 = vld [vmem:[%s2 + $0x20] sm:$0xff]
    %v1461 = vld [vmem:[%s2 + $0x28] sm:$0xff]
    %v1462 = vld [vmem:[%s2 + $0x30] sm:$0xff]
    %v1463 = vld [vmem:[%s2 + $0x38] sm:$0xff]
    %v1464 = vld [vmem:[%s2 + $0x40] sm:$0xff]
    %v1465 = vld [vmem:[%s2 + $0x48] sm:$0xff]
    %v1466 = vld [vmem:[%s2 + $0x50] sm:$0xff]
    %v1467 = vld [vmem:[%s2 + $0x58] sm:$0xff]
    %v1468 = vld [vmem:[%s2 + $0x60] sm:$0xff]
    %v1469 = vld [vmem:[%s2 + $0x68] sm:$0xff]
    %v1470 = vld [vmem:[%s2 + $0x70] sm:$0xff]
    %v1471 = vld [vmem:[%s2 + $0x78] sm:$0xff]
    %v1472 = vld [vmem:[%s2 + $0x80] sm:$0xff]
    %v1473 = vld [vmem:[%s2 + $0x88] sm:$0xff]
    %v1474 = vld [vmem:[%s2 + $0x90] sm:$0xff]
    %v1475 = vld [vmem:[%s2 + $0x98] sm:$0xff]
    %v1476 = vld [vmem:[%s2 + $0xa0] sm:$0xff]
    %v1477 = vld [vmem:[%s2 + $0xa8] sm:$0xff]
    %v1478 = vld [vmem:[%s2 + $0xb0] sm:$0xff]
    %v1479 = vld [vmem:[%s2 + $0xb8] sm:$0xff]
    %v1480 = vld [vmem:[%s2 + $0xc0] sm:$0xff]
    %v1481 = vld [vmem:[%s2 + $0xc8] sm:$0xff]
    %v1482 = vld [vmem:[%s2 + $0xd0] sm:$0xff]
    %v1483 = vld [vmem:[%s2 + $0xd8] sm:$0xff]
    %v1484 = vld [vmem:[%s2 + $0xe0] sm:$0xff]
    %v1485 = vld [vmem:[%s2 + $0xe8] sm:$0xff]
    %v1486 = vld [vmem:[%s2 + $0xf0] sm:$0xff]
    %v1487 = vld [vmem:[%s2 + $0xf8] sm:$0xff]
    %v1488 = vpack.c.bf16 %v1457, %v1456
    %v1489 = vpack.c.bf16 %v1459, %v1458
    %v1490 = vpack.c.bf16 %v1461, %v1460
    %v1491 = vpack.c.bf16 %v1463, %v1462
    %v1492 = vpack.c.bf16 %v1465, %v1464
    %v1493 = vpack.c.bf16 %v1467, %v1466
    %v1494 = vpack.c.bf16 %v1469, %v1468
    %v1495 = vpack.c.bf16 %v1471, %v1470
    %v1496 = vpack.c.bf16 %v1473, %v1472
    %v1497 = vpack.c.bf16 %v1475, %v1474
    %v1498 = vpack.c.bf16 %v1477, %v1476
    %v1499 = vpack.c.bf16 %v1479, %v1478
    %v1500 = vpack.c.bf16 %v1481, %v1480
    %v1501 = vpack.c.bf16 %v1483, %v1482
    %v1502 = vpack.c.bf16 %v1485, %v1484
    %v1503 = vpack.c.bf16 %v1487, %v1486
    %v1504 = vpack.c.bf16 %v1425, %v1424
    %v1505 = vpack.c.bf16 %v1427, %v1426
    %v1506 = vpack.c.bf16 %v1429, %v1428
    %v1507 = vpack.c.bf16 %v1431, %v1430
    %v1508 = vpack.c.bf16 %v1433, %v1432
    %v1509 = vpack.c.bf16 %v1435, %v1434
    %v1510 = vpack.c.bf16 %v1437, %v1436
    %v1511 = vpack.c.bf16 %v1439, %v1438
    %v1512 = vpack.c.bf16 %v1441, %v1440
    %v1513 = vpack.c.bf16 %v1443, %v1442
    %v1514 = vpack.c.bf16 %v1445, %v1444
    %v1515 = vpack.c.bf16 %v1447, %v1446
    %v1516 = vpack.c.bf16 %v1449, %v1448
    %v1517 = vpack.c.bf16 %v1451, %v1450
    %v1518 = vpack.c.bf16 %v1453, %v1452
    %v1519 = vpack.c.bf16 %v1455, %v1454
    %vm1520 = vcmask 130048
    %v1522 = vsel %vm1520, %v1488, 0
    %1524 = vmatprep.subr.bf16.mxu0 0
    %1525 = vmatpush1.bf16.msra.mxu0 %v1504
    %1526 = vmatprep.subr.bf16.mxu0 0
    %1527 = vmatpush1.bf16.msra.mxu0 0
    %1528 = vmatprep.subr.bf16.mxu0 0
    %1529 = vmatpush1.bf16.msra.mxu0 0
    %1530 = vmatprep.subr.bf16.mxu0 0
    %1531 = vmatpush1.bf16.msra.mxu0 0
    %1532 = vmatprep.subr.bf16.mxu0 0
    %1533 = vmatpush1.bf16.msra.mxu0 0
    %1534 = vmatprep.subr.bf16.mxu0 0
    %1535 = vmatpush1.bf16.msra.mxu0 0
    %1536 = vmatprep.subr.bf16.mxu0 0
    %1537 = vmatpush1.bf16.msra.mxu0 0
    %1538 = vmatprep.subr.bf16.mxu0 0
    %1539 = vmatpush1.bf16.msra.mxu0 0
    %1540 = vmatprep.subr.bf16.mxu0 0
    %1541 = vmatpush1.bf16.msra.mxu0 0
    %1542 = vmatprep.subr.bf16.mxu0 0
    %1543 = vmatpush1.bf16.msra.mxu0 0
    %1544 = vmatprep.subr.bf16.mxu0 0
    %1545 = vmatpush1.bf16.msra.mxu0 0
    %1546 = vmatprep.subr.bf16.mxu0 0
    %1547 = vmatpush1.bf16.msra.mxu0 0
    %1548 = vmatprep.subr.bf16.mxu0 0
    %1549 = vmatpush1.bf16.msra.mxu0 0
    %1550 = vmatprep.subr.bf16.mxu0 0
    %1551 = vmatpush1.bf16.msra.mxu0 0
    %1552 = vmatprep.subr.bf16.mxu0 0
    %1553 = vmatpush1.bf16.msra.mxu0 0
    %1554 = vmatprep.subr.bf16.mxu0 0
    %1555 = vmatpush1.bf16.msra.mxu0 0
    %1556 = vmatprep.mubr.bf16.mxu0 0
    %1557 = vmatmul.mubr.bf16.gmra.mrb[0].mxu0 %v1522
    %v1558 = vpop.f32.mrb[0].mxu0
    %v1559 = vadd.f32 0.0, %v1558
    %v1560 = vpop.f32.mrb[0].mxu0
    %v1561 = vpop.f32.mrb[0].mxu0
    %v1562 = vadd.f32 0.0, %v1561
    %v1563 = vpop.f32.mrb[0].mxu0
    %1564 = vdwg.mxu0
    %v1566 = vsel %vm1520, %v1489, 0
    %1568 = vmatprep.subr.bf16.mxu0 0
    %1569 = vmatpush1.bf16.msra.mxu0 %v1505
    %1570 = vmatprep.subr.bf16.mxu0 0
    %1571 = vmatpush1.bf16.msra.mxu0 0
    %1572 = vmatprep.subr.bf16.mxu0 0
    %1573 = vmatpush1.bf16.msra.mxu0 0
    %1574 = vmatprep.subr.bf16.mxu0 0
    %1575 = vmatpush1.bf16.msra.mxu0 0
    %1576 = vmatprep.subr.bf16.mxu0 0
    %1577 = vmatpush1.bf16.msra.mxu0 0
    %1578 = vmatprep.subr.bf16.mxu0 0
    %1579 = vmatpush1.bf16.msra.mxu0 0
    %1580 = vmatprep.subr.bf16.mxu0 0
    %1581 = vmatpush1.bf16.msra.mxu0 0
    %1582 = vmatprep.subr.bf16.mxu0 0
    %1583 = vmatpush1.bf16.msra.mxu0 0
    %1584 = vmatprep.subr.bf16.mxu0 0
    %1585 = vmatpush1.bf16.msra.mxu0 0
    %1586 = vmatprep.subr.bf16.mxu0 0
    %1587 = vmatpush1.bf16.msra.mxu0 0
    %1588 = vmatprep.subr.bf16.mxu0 0
    %1589 = vmatpush1.bf16.msra.mxu0 0
    %1590 = vmatprep.subr.bf16.mxu0 0
    %1591 = vmatpush1.bf16.msra.mxu0 0
    %1592 = vmatprep.subr.bf16.mxu0 0
    %1593 = vmatpush1.bf16.msra.mxu0 0
    %1594 = vmatprep.subr.bf16.mxu0 0
    %1595 = vmatpush1.bf16.msra.mxu0 0
    %1596 = vmatprep.subr.bf16.mxu0 0
    %1597 = vmatpush1.bf16.msra.mxu0 0
    %1598 = vmatprep.subr.bf16.mxu0 0
    %1599 = vmatpush1.bf16.msra.mxu0 0
    %1600 = vmatprep.mubr.bf16.mxu0 0
    %1601 = vmatmul.mubr.bf16.gmra.mrb[0].mxu0 %v1566
    %v1602 = vpop.f32.mrb[0].mxu0
    %v1603 = vadd.f32 0.0, %v1602
    %v1604 = vpop.f32.mrb[0].mxu0
    %v1605 = vpop.f32.mrb[0].mxu0
    %v1606 = vadd.f32 0.0, %v1605
    %v1607 = vpop.f32.mrb[0].mxu0
    %1608 = vdwg.mxu0
    %v1610 = vsel %vm1520, %v1490, 0
    %1612 = vmatprep.subr.bf16.mxu0 0
    %1613 = vmatpush1.bf16.msra.mxu0 %v1506
    %1614 = vmatprep.subr.bf16.mxu0 0
    %1615 = vmatpush1.bf16.msra.mxu0 0
    %1616 = vmatprep.subr.bf16.mxu0 0
    %1617 = vmatpush1.bf16.msra.mxu0 0
    %1618 = vmatprep.subr.bf16.mxu0 0
    %1619 = vmatpush1.bf16.msra.mxu0 0
    %1620 = vmatprep.subr.bf16.mxu0 0
    %1621 = vmatpush1.bf16.msra.mxu0 0
    %1622 = vmatprep.subr.bf16.mxu0 0
    %1623 = vmatpush1.bf16.msra.mxu0 0
    %1624 = vmatprep.subr.bf16.mxu0 0
    %1625 = vmatpush1.bf16.msra.mxu0 0
    %1626 = vmatprep.subr.bf16.mxu0 0
    %1627 = vmatpush1.bf16.msra.mxu0 0
    %1628 = vmatprep.subr.bf16.mxu0 0
    %1629 = vmatpush1.bf16.msra.mxu0 0
    %1630 = vmatprep.subr.bf16.mxu0 0
    %1631 = vmatpush1.bf16.msra.mxu0 0
    %1632 = vmatprep.subr.bf16.mxu0 0
    %1633 = vmatpush1.bf16.msra.mxu0 0
    %1634 = vmatprep.subr.bf16.mxu0 0
    %1635 = vmatpush1.bf16.msra.mxu0 0
    %1636 = vmatprep.subr.bf16.mxu0 0
    %1637 = vmatpush1.bf16.msra.mxu0 0
    %1638 = vmatprep.subr.bf16.mxu0 0
    %1639 = vmatpush1.bf16.msra.mxu0 0
    %1640 = vmatprep.subr.bf16.mxu0 0
    %1641 = vmatpush1.bf16.msra.mxu0 0
    %1642 = vmatprep.subr.bf16.mxu0 0
    %1643 = vmatpush1.bf16.msra.mxu0 0
    %1644 = vmatprep.mubr.bf16.mxu0 0
    %1645 = vmatmul.mubr.bf16.gmra.mrb[0].mxu0 %v1610
    %v1646 = vpop.f32.mrb[0].mxu0
    %v1647 = vadd.f32 0.0, %v1646
    %v1648 = vpop.f32.mrb[0].mxu0
    %v1649 = vpop.f32.mrb[0].mxu0
    %v1650 = vadd.f32 0.0, %v1649
    %v1651 = vpop.f32.mrb[0].mxu0
    %1652 = vdwg.mxu0
    %v1654 = vsel %vm1520, %v1491, 0
    %1656 = vmatprep.subr.bf16.mxu0 0
    %1657 = vmatpush1.bf16.msra.mxu0 %v1507
    %1658 = vmatprep.subr.bf16.mxu0 0
    %1659 = vmatpush1.bf16.msra.mxu0 0
    %1660 = vmatprep.subr.bf16.mxu0 0
    %1661 = vmatpush1.bf16.msra.mxu0 0
    %1662 = vmatprep.subr.bf16.mxu0 0
    %1663 = vmatpush1.bf16.msra.mxu0 0
    %1664 = vmatprep.subr.bf16.mxu0 0
    %1665 = vmatpush1.bf16.msra.mxu0 0
    %1666 = vmatprep.subr.bf16.mxu0 0
    %1667 = vmatpush1.bf16.msra.mxu0 0
    %1668 = vmatprep.subr.bf16.mxu0 0
    %1669 = vmatpush1.bf16.msra.mxu0 0
    %1670 = vmatprep.subr.bf16.mxu0 0
    %1671 = vmatpush1.bf16.msra.mxu0 0
    %1672 = vmatprep.subr.bf16.mxu0 0
    %1673 = vmatpush1.bf16.msra.mxu0 0
    %1674 = vmatprep.subr.bf16.mxu0 0
    %1675 = vmatpush1.bf16.msra.mxu0 0
    %1676 = vmatprep.subr.bf16.mxu0 0
    %1677 = vmatpush1.bf16.msra.mxu0 0
    %1678 = vmatprep.subr.bf16.mxu0 0
    %1679 = vmatpush1.bf16.msra.mxu0 0
    %1680 = vmatprep.subr.bf16.mxu0 0
    %1681 = vmatpush1.bf16.msra.mxu0 0
    %1682 = vmatprep.subr.bf16.mxu0 0
    %1683 = vmatpush1.bf16.msra.mxu0 0
    %1684 = vmatprep.subr.bf16.mxu0 0
    %1685 = vmatpush1.bf16.msra.mxu0 0
    %1686 = vmatprep.subr.bf16.mxu0 0
    %1687 = vmatpush1.bf16.msra.mxu0 0
    %1688 = vmatprep.mubr.bf16.mxu0 0
    %1689 = vmatmul.mubr.bf16.gmra.mrb[0].mxu0 %v1654
    %v1690 = vpop.f32.mrb[0].mxu0
    %v1691 = vadd.f32 0.0, %v1690
    %v1692 = vpop.f32.mrb[0].mxu0
    %v1693 = vpop.f32.mrb[0].mxu0
    %v1694 = vadd.f32 0.0, %v1693
    %v1695 = vpop.f32.mrb[0].mxu0
    %1696 = vdwg.mxu0
    %v1698 = vsel %vm1520, %v1492, 0
    %1700 = vmatprep.subr.bf16.mxu0 0
    %1701 = vmatpush1.bf16.msra.mxu0 %v1508
    %1702 = vmatprep.subr.bf16.mxu0 0
    %1703 = vmatpush1.bf16.msra.mxu0 0
    %1704 = vmatprep.subr.bf16.mxu0 0
    %1705 = vmatpush1.bf16.msra.mxu0 0
    %1706 = vmatprep.subr.bf16.mxu0 0
    %1707 = vmatpush1.bf16.msra.mxu0 0
    %1708 = vmatprep.subr.bf16.mxu0 0
    %1709 = vmatpush1.bf16.msra.mxu0 0
    %1710 = vmatprep.subr.bf16.mxu0 0
    %1711 = vmatpush1.bf16.msra.mxu0 0
    %1712 = vmatprep.subr.bf16.mxu0 0
    %1713 = vmatpush1.bf16.msra.mxu0 0
    %1714 = vmatprep.subr.bf16.mxu0 0
    %1715 = vmatpush1.bf16.msra.mxu0 0
    %1716 = vmatprep.subr.bf16.mxu0 0
    %1717 = vmatpush1.bf16.msra.mxu0 0
    %1718 = vmatprep.subr.bf16.mxu0 0
    %1719 = vmatpush1.bf16.msra.mxu0 0
    %1720 = vmatprep.subr.bf16.mxu0 0
    %1721 = vmatpush1.bf16.msra.mxu0 0
    %1722 = vmatprep.subr.bf16.mxu0 0
    %1723 = vmatpush1.bf16.msra.mxu0 0
    %1724 = vmatprep.subr.bf16.mxu0 0
    %1725 = vmatpush1.bf16.msra.mxu0 0
    %1726 = vmatprep.subr.bf16.mxu0 0
    %1727 = vmatpush1.bf16.msra.mxu0 0
    %1728 = vmatprep.subr.bf16.mxu0 0
    %1729 = vmatpush1.bf16.msra.mxu0 0
    %1730 = vmatprep.subr.bf16.mxu0 0
    %1731 = vmatpush1.bf16.msra.mxu0 0
    %1732 = vmatprep.mubr.bf16.mxu0 0
    %1733 = vmatmul.mubr.bf16.gmra.mrb[0].mxu0 %v1698
    %v1734 = vpop.f32.mrb[0].mxu0
    %v1735 = vadd.f32 0.0, %v1734
    %v1736 = vpop.f32.mrb[0].mxu0
    %v1737 = vpop.f32.mrb[0].mxu0
    %v1738 = vadd.f32 0.0, %v1737
    %v1739 = vpop.f32.mrb[0].mxu0
    %1740 = vdwg.mxu0
    %v1742 = vsel %vm1520, %v1493, 0
    %1744 = vmatprep.subr.bf16.mxu0 0
    %1745 = vmatpush1.bf16.msra.mxu0 %v1509
    %1746 = vmatprep.subr.bf16.mxu0 0
    %1747 = vmatpush1.bf16.msra.mxu0 0
    %1748 = vmatprep.subr.bf16.mxu0 0
    %1749 = vmatpush1.bf16.msra.mxu0 0
    %1750 = vmatprep.subr.bf16.mxu0 0
    %1751 = vmatpush1.bf16.msra.mxu0 0
    %1752 = vmatprep.subr.bf16.mxu0 0
    %1753 = vmatpush1.bf16.msra.mxu0 0
    %1754 = vmatprep.subr.bf16.mxu0 0
    %1755 = vmatpush1.bf16.msra.mxu0 0
    %1756 = vmatprep.subr.bf16.mxu0 0
    %1757 = vmatpush1.bf16.msra.mxu0 0
    %1758 = vmatprep.subr.bf16.mxu0 0
    %1759 = vmatpush1.bf16.msra.mxu0 0
    %1760 = vmatprep.subr.bf16.mxu0 0
    %1761 = vmatpush1.bf16.msra.mxu0 0
    %1762 = vmatprep.subr.bf16.mxu0 0
    %1763 = vmatpush1.bf16.msra.mxu0 0
    %1764 = vmatprep.subr.bf16.mxu0 0
    %1765 = vmatpush1.bf16.msra.mxu0 0
    %1766 = vmatprep.subr.bf16.mxu0 0
    %1767 = vmatpush1.bf16.msra.mxu0 0
    %1768 = vmatprep.subr.bf16.mxu0 0
    %1769 = vmatpush1.bf16.msra.mxu0 0
    %1770 = vmatprep.subr.bf16.mxu0 0
    %1771 = vmatpush1.bf16.msra.mxu0 0
    %1772 = vmatprep.subr.bf16.mxu0 0
    %1773 = vmatpush1.bf16.msra.mxu0 0
    %1774 = vmatprep.subr.bf16.mxu0 0
    %1775 = vmatpush1.bf16.msra.mxu0 0
    %1776 = vmatprep.mubr.bf16.mxu0 0
    %1777 = vmatmul.mubr.bf16.gmra.mrb[0].mxu0 %v1742
    %v1778 = vpop.f32.mrb[0].mxu0
    %v1779 = vadd.f32 0.0, %v1778
    %v1780 = vpop.f32.mrb[0].mxu0
    %v1781 = vpop.f32.mrb[0].mxu0
    %v1782 = vadd.f32 0.0, %v1781
    %v1783 = vpop.f32.mrb[0].mxu0
    %1784 = vdwg.mxu0
    %v1786 = vsel %vm1520, %v1494, 0
    %1788 = vmatprep.subr.bf16.mxu0 0
    %1789 = vmatpush1.bf16.msra.mxu0 %v1510
    %1790 = vmatprep.subr.bf16.mxu0 0
    %1791 = vmatpush1.bf16.msra.mxu0 0
    %1792 = vmatprep.subr.bf16.mxu0 0
    %1793 = vmatpush1.bf16.msra.mxu0 0
    %1794 = vmatprep.subr.bf16.mxu0 0
    %1795 = vmatpush1.bf16.msra.mxu0 0
    %1796 = vmatprep.subr.bf16.mxu0 0
    %1797 = vmatpush1.bf16.msra.mxu0 0
    %1798 = vmatprep.subr.bf16.mxu0 0
    %1799 = vmatpush1.bf16.msra.mxu0 0
    %1800 = vmatprep.subr.bf16.mxu0 0
    %1801 = vmatpush1.bf16.msra.mxu0 0
    %1802 = vmatprep.subr.bf16.mxu0 0
    %1803 = vmatpush1.bf16.msra.mxu0 0
    %1804 = vmatprep.subr.bf16.mxu0 0
    %1805 = vmatpush1.bf16.msra.mxu0 0
    %1806 = vmatprep.subr.bf16.mxu0 0
    %1807 = vmatpush1.bf16.msra.mxu0 0
    %1808 = vmatprep.subr.bf16.mxu0 0
    %1809 = vmatpush1.bf16.msra.mxu0 0
    %1810 = vmatprep.subr.bf16.mxu0 0
    %1811 = vmatpush1.bf16.msra.mxu0 0
    %1812 = vmatprep.subr.bf16.mxu0 0
    %1813 = vmatpush1.bf16.msra.mxu0 0
    %1814 = vmatprep.subr.bf16.mxu0 0
    %1815 = vmatpush1.bf16.msra.mxu0 0
    %1816 = vmatprep.subr.bf16.mxu0 0
    %1817 = vmatpush1.bf16.msra.mxu0 0
    %1818 = vmatprep.subr.bf16.mxu0 0
    %1819 = vmatpush1.bf16.msra.mxu0 0
    %1820 = vmatprep.mubr.bf16.mxu0 0
    %1821 = vmatmul.mubr.bf16.gmra.mrb[0].mxu0 %v1786
    %v1822 = vpop.f32.mrb[0].mxu0
    %v1823 = vadd.f32 0.0, %v1822
    %v1824 = vpop.f32.mrb[0].mxu0
    %v1825 = vpop.f32.mrb[0].mxu0
    %v1826 = vadd.f32 0.0, %v1825
    %v1827 = vpop.f32.mrb[0].mxu0
    %1828 = vdwg.mxu0
    %v1830 = vsel %vm1520, %v1495, 0
    %1832 = vmatprep.subr.bf16.mxu0 0
    %1833 = vmatpush1.bf16.msra.mxu0 %v1511
    %1834 = vmatprep.subr.bf16.mxu0 0
    %1835 = vmatpush1.bf16.msra.mxu0 0
    %1836 = vmatprep.subr.bf16.mxu0 0
    %1837 = vmatpush1.bf16.msra.mxu0 0
    %1838 = vmatprep.subr.bf16.mxu0 0
    %1839 = vmatpush1.bf16.msra.mxu0 0
    %1840 = vmatprep.subr.bf16.mxu0 0
    %1841 = vmatpush1.bf16.msra.mxu0 0
    %1842 = vmatprep.subr.bf16.mxu0 0
    %1843 = vmatpush1.bf16.msra.mxu0 0
    %1844 = vmatprep.subr.bf16.mxu0 0
    %1845 = vmatpush1.bf16.msra.mxu0 0
    %1846 = vmatprep.subr.bf16.mxu0 0
    %1847 = vmatpush1.bf16.msra.mxu0 0
    %1848 = vmatprep.subr.bf16.mxu0 0
    %1849 = vmatpush1.bf16.msra.mxu0 0
    %1850 = vmatprep.subr.bf16.mxu0 0
    %1851 = vmatpush1.bf16.msra.mxu0 0
    %1852 = vmatprep.subr.bf16.mxu0 0
    %1853 = vmatpush1.bf16.msra.mxu0 0
    %1854 = vmatprep.subr.bf16.mxu0 0
    %1855 = vmatpush1.bf16.msra.mxu0 0
    %1856 = vmatprep.subr.bf16.mxu0 0
    %1857 = vmatpush1.bf16.msra.mxu0 0
    %1858 = vmatprep.subr.bf16.mxu0 0
    %1859 = vmatpush1.bf16.msra.mxu0 0
    %1860 = vmatprep.subr.bf16.mxu0 0
    %1861 = vmatpush1.bf16.msra.mxu0 0
    %1862 = vmatprep.subr.bf16.mxu0 0
    %1863 = vmatpush1.bf16.msra.mxu0 0
    %1864 = vmatprep.mubr.bf16.mxu0 0
    %1865 = vmatmul.mubr.bf16.gmra.mrb[0].mxu0 %v1830
    %v1866 = vpop.f32.mrb[0].mxu0
    %v1867 = vadd.f32 0.0, %v1866
    %v1868 = vpop.f32.mrb[0].mxu0
    %v1869 = vpop.f32.mrb[0].mxu0
    %v1870 = vadd.f32 0.0, %v1869
    %v1871 = vpop.f32.mrb[0].mxu0
    %1872 = vdwg.mxu0
    %v1874 = vsel %vm1520, %v1496, 0
    %1876 = vmatprep.subr.bf16.mxu0 0
    %1877 = vmatpush1.bf16.msra.mxu0 %v1512
    %1878 = vmatprep.subr.bf16.mxu0 0
    %1879 = vmatpush1.bf16.msra.mxu0 0
    %1880 = vmatprep.subr.bf16.mxu0 0
    %1881 = vmatpush1.bf16.msra.mxu0 0
    %1882 = vmatprep.subr.bf16.mxu0 0
    %1883 = vmatpush1.bf16.msra.mxu0 0
    %1884 = vmatprep.subr.bf16.mxu0 0
    %1885 = vmatpush1.bf16.msra.mxu0 0
    %1886 = vmatprep.subr.bf16.mxu0 0
    %1887 = vmatpush1.bf16.msra.mxu0 0
    %1888 = vmatprep.subr.bf16.mxu0 0
    %1889 = vmatpush1.bf16.msra.mxu0 0
    %1890 = vmatprep.subr.bf16.mxu0 0
    %1891 = vmatpush1.bf16.msra.mxu0 0
    %1892 = vmatprep.subr.bf16.mxu0 0
    %1893 = vmatpush1.bf16.msra.mxu0 0
    %1894 = vmatprep.subr.bf16.mxu0 0
    %1895 = vmatpush1.bf16.msra.mxu0 0
    %1896 = vmatprep.subr.bf16.mxu0 0
    %1897 = vmatpush1.bf16.msra.mxu0 0
    %1898 = vmatprep.subr.bf16.mxu0 0
    %1899 = vmatpush1.bf16.msra.mxu0 0
    %1900 = vmatprep.subr.bf16.mxu0 0
    %1901 = vmatpush1.bf16.msra.mxu0 0
    %1902 = vmatprep.subr.bf16.mxu0 0
    %1903 = vmatpush1.bf16.msra.mxu0 0
    %1904 = vmatprep.subr.bf16.mxu0 0
    %1905 = vmatpush1.bf16.msra.mxu0 0
    %1906 = vmatprep.subr.bf16.mxu0 0
    %1907 = vmatpush1.bf16.msra.mxu0 0
    %1908 = vmatprep.mubr.bf16.mxu0 0
    %1909 = vmatmul.mubr.bf16.gmra.mrb[0].mxu0 %v1874
    %v1910 = vpop.f32.mrb[0].mxu0
    %v1911 = vadd.f32 0.0, %v1910
    %v1912 = vpop.f32.mrb[0].mxu0
    %v1913 = vpop.f32.mrb[0].mxu0
    %v1914 = vadd.f32 0.0, %v1913
    %v1915 = vpop.f32.mrb[0].mxu0
    %1916 = vdwg.mxu0
    %v1918 = vsel %vm1520, %v1497, 0
    %1920 = vmatprep.subr.bf16.mxu0 0
    %1921 = vmatpush1.bf16.msra.mxu0 %v1513
    %1922 = vmatprep.subr.bf16.mxu0 0
    %1923 = vmatpush1.bf16.msra.mxu0 0
    %1924 = vmatprep.subr.bf16.mxu0 0
    %1925 = vmatpush1.bf16.msra.mxu0 0
    %1926 = vmatprep.subr.bf16.mxu0 0
    %1927 = vmatpush1.bf16.msra.mxu0 0
    %1928 = vmatprep.subr.bf16.mxu0 0
    %1929 = vmatpush1.bf16.msra.mxu0 0
    %1930 = vmatprep.subr.bf16.mxu0 0
    %1931 = vmatpush1.bf16.msra.mxu0 0
    %1932 = vmatprep.subr.bf16.mxu0 0
    %1933 = vmatpush1.bf16.msra.mxu0 0
    %1934 = vmatprep.subr.bf16.mxu0 0
    %1935 = vmatpush1.bf16.msra.mxu0 0
    %1936 = vmatprep.subr.bf16.mxu0 0
    %1937 = vmatpush1.bf16.msra.mxu0 0
    %1938 = vmatprep.subr.bf16.mxu0 0
    %1939 = vmatpush1.bf16.msra.mxu0 0
    %1940 = vmatprep.subr.bf16.mxu0 0
    %1941 = vmatpush1.bf16.msra.mxu0 0
    %1942 = vmatprep.subr.bf16.mxu0 0
    %1943 = vmatpush1.bf16.msra.mxu0 0
    %1944 = vmatprep.subr.bf16.mxu0 0
    %1945 = vmatpush1.bf16.msra.mxu0 0
    %1946 = vmatprep.subr.bf16.mxu0 0
    %1947 = vmatpush1.bf16.msra.mxu0 0
    %1948 = vmatprep.subr.bf16.mxu0 0
    %1949 = vmatpush1.bf16.msra.mxu0 0
    %1950 = vmatprep.subr.bf16.mxu0 0
    %1951 = vmatpush1.bf16.msra.mxu0 0
    %1952 = vmatprep.mubr.bf16.mxu0 0
    %1953 = vmatmul.mubr.bf16.gmra.mrb[0].mxu0 %v1918
    %v1954 = vpop.f32.mrb[0].mxu0
    %v1955 = vadd.f32 0.0, %v1954
    %v1956 = vpop.f32.mrb[0].mxu0
    %v1957 = vpop.f32.mrb[0].mxu0
    %v1958 = vadd.f32 0.0, %v1957
    %v1959 = vpop.f32.mrb[0].mxu0
    %1960 = vdwg.mxu0
    %v1962 = vsel %vm1520, %v1498, 0
    %1964 = vmatprep.subr.bf16.mxu0 0
    %1965 = vmatpush1.bf16.msra.mxu0 %v1514
    %1966 = vmatprep.subr.bf16.mxu0 0
    %1967 = vmatpush1.bf16.msra.mxu0 0
    %1968 = vmatprep.subr.bf16.mxu0 0
    %1969 = vmatpush1.bf16.msra.mxu0 0
    %1970 = vmatprep.subr.bf16.mxu0 0
    %1971 = vmatpush1.bf16.msra.mxu0 0
    %1972 = vmatprep.subr.bf16.mxu0 0
    %1973 = vmatpush1.bf16.msra.mxu0 0
    %1974 = vmatprep.subr.bf16.mxu0 0
    %1975 = vmatpush1.bf16.msra.mxu0 0
    %1976 = vmatprep.subr.bf16.mxu0 0
    %1977 = vmatpush1.bf16.msra.mxu0 0
    %1978 = vmatprep.subr.bf16.mxu0 0
    %1979 = vmatpush1.bf16.msra.mxu0 0
    %1980 = vmatprep.subr.bf16.mxu0 0
    %1981 = vmatpush1.bf16.msra.mxu0 0
    %1982 = vmatprep.subr.bf16.mxu0 0
    %1983 = vmatpush1.bf16.msra.mxu0 0
    %1984 = vmatprep.subr.bf16.mxu0 0
    %1985 = vmatpush1.bf16.msra.mxu0 0
    %1986 = vmatprep.subr.bf16.mxu0 0
    %1987 = vmatpush1.bf16.msra.mxu0 0
    %1988 = vmatprep.subr.bf16.mxu0 0
    %1989 = vmatpush1.bf16.msra.mxu0 0
    %1990 = vmatprep.subr.bf16.mxu0 0
    %1991 = vmatpush1.bf16.msra.mxu0 0
    %1992 = vmatprep.subr.bf16.mxu0 0
    %1993 = vmatpush1.bf16.msra.mxu0 0
    %1994 = vmatprep.subr.bf16.mxu0 0
    %1995 = vmatpush1.bf16.msra.mxu0 0
    %1996 = vmatprep.mubr.bf16.mxu0 0
    %1997 = vmatmul.mubr.bf16.gmra.mrb[0].mxu0 %v1962
    %v1998 = vpop.f32.mrb[0].mxu0
    %v1999 = vadd.f32 0.0, %v1998
    %v2000 = vpop.f32.mrb[0].mxu0
    %v2001 = vpop.f32.mrb[0].mxu0
    %v2002 = vadd.f32 0.0, %v2001
    %v2003 = vpop.f32.mrb[0].mxu0
    %2004 = vdwg.mxu0
    %v2006 = vsel %vm1520, %v1499, 0
    %2008 = vmatprep.subr.bf16.mxu0 0
    %2009 = vmatpush1.bf16.msra.mxu0 %v1515
    %2010 = vmatprep.subr.bf16.mxu0 0
    %2011 = vmatpush1.bf16.msra.mxu0 0
    %2012 = vmatprep.subr.bf16.mxu0 0
    %2013 = vmatpush1.bf16.msra.mxu0 0
    %2014 = vmatprep.subr.bf16.mxu0 0
    %2015 = vmatpush1.bf16.msra.mxu0 0
    %2016 = vmatprep.subr.bf16.mxu0 0
    %2017 = vmatpush1.bf16.msra.mxu0 0
    %2018 = vmatprep.subr.bf16.mxu0 0
    %2019 = vmatpush1.bf16.msra.mxu0 0
    %2020 = vmatprep.subr.bf16.mxu0 0
    %2021 = vmatpush1.bf16.msra.mxu0 0
    %2022 = vmatprep.subr.bf16.mxu0 0
    %2023 = vmatpush1.bf16.msra.mxu0 0
    %2024 = vmatprep.subr.bf16.mxu0 0
    %2025 = vmatpush1.bf16.msra.mxu0 0
    %2026 = vmatprep.subr.bf16.mxu0 0
    %2027 = vmatpush1.bf16.msra.mxu0 0
    %2028 = vmatprep.subr.bf16.mxu0 0
    %2029 = vmatpush1.bf16.msra.mxu0 0
    %2030 = vmatprep.subr.bf16.mxu0 0
    %2031 = vmatpush1.bf16.msra.mxu0 0
    %2032 = vmatprep.subr.bf16.mxu0 0
    %2033 = vmatpush1.bf16.msra.mxu0 0
    %2034 = vmatprep.subr.bf16.mxu0 0
    %2035 = vmatpush1.bf16.msra.mxu0 0
    %2036 = vmatprep.subr.bf16.mxu0 0
    %2037 = vmatpush1.bf16.msra.mxu0 0
    %2038 = vmatprep.subr.bf16.mxu0 0
    %2039 = vmatpush1.bf16.msra.mxu0 0
    %2040 = vmatprep.mubr.bf16.mxu0 0
    %2041 = vmatmul.mubr.bf16.gmra.mrb[0].mxu0 %v2006
    %v2042 = vpop.f32.mrb[0].mxu0
    %v2043 = vadd.f32 0.0, %v2042
    %v2044 = vpop.f32.mrb[0].mxu0
    %v2045 = vpop.f32.mrb[0].mxu0
    %v2046 = vadd.f32 0.0, %v2045
    %v2047 = vpop.f32.mrb[0].mxu0
    %2048 = vdwg.mxu0
    %v2050 = vsel %vm1520, %v1500, 0
    %2052 = vmatprep.subr.bf16.mxu0 0
    %2053 = vmatpush1.bf16.msra.mxu0 %v1516
    %2054 = vmatprep.subr.bf16.mxu0 0
    %2055 = vmatpush1.bf16.msra.mxu0 0
    %2056 = vmatprep.subr.bf16.mxu0 0
    %2057 = vmatpush1.bf16.msra.mxu0 0
    %2058 = vmatprep.subr.bf16.mxu0 0
    %2059 = vmatpush1.bf16.msra.mxu0 0
    %2060 = vmatprep.subr.bf16.mxu0 0
    %2061 = vmatpush1.bf16.msra.mxu0 0
    %2062 = vmatprep.subr.bf16.mxu0 0
    %2063 = vmatpush1.bf16.msra.mxu0 0
    %2064 = vmatprep.subr.bf16.mxu0 0
    %2065 = vmatpush1.bf16.msra.mxu0 0
    %2066 = vmatprep.subr.bf16.mxu0 0
    %2067 = vmatpush1.bf16.msra.mxu0 0
    %2068 = vmatprep.subr.bf16.mxu0 0
    %2069 = vmatpush1.bf16.msra.mxu0 0
    %2070 = vmatprep.subr.bf16.mxu0 0
    %2071 = vmatpush1.bf16.msra.mxu0 0
    %2072 = vmatprep.subr.bf16.mxu0 0
    %2073 = vmatpush1.bf16.msra.mxu0 0
    %2074 = vmatprep.subr.bf16.mxu0 0
    %2075 = vmatpush1.bf16.msra.mxu0 0
    %2076 = vmatprep.subr.bf16.mxu0 0
    %2077 = vmatpush1.bf16.msra.mxu0 0
    %2078 = vmatprep.subr.bf16.mxu0 0
    %2079 = vmatpush1.bf16.msra.mxu0 0
    %2080 = vmatprep.subr.bf16.mxu0 0
    %2081 = vmatpush1.bf16.msra.mxu0 0
    %2082 = vmatprep.subr.bf16.mxu0 0
    %2083 = vmatpush1.bf16.msra.mxu0 0
    %2084 = vmatprep.mubr.bf16.mxu0 0
    %2085 = vmatmul.mubr.bf16.gmra.mrb[0].mxu0 %v2050
    %v2086 = vpop.f32.mrb[0].mxu0
    %v2087 = vadd.f32 0.0, %v2086
    %v2088 = vpop.f32.mrb[0].mxu0
    %v2089 = vpop.f32.mrb[0].mxu0
    %v2090 = vadd.f32 0.0, %v2089
    %v2091 = vpop.f32.mrb[0].mxu0
    %2092 = vdwg.mxu0
    %v2094 = vsel %vm1520, %v1501, 0
    %2096 = vmatprep.subr.bf16.mxu0 0
    %2097 = vmatpush1.bf16.msra.mxu0 %v1517
    %2098 = vmatprep.subr.bf16.mxu0 0
    %2099 = vmatpush1.bf16.msra.mxu0 0
    %2100 = vmatprep.subr.bf16.mxu0 0
    %2101 = vmatpush1.bf16.msra.mxu0 0
    %2102 = vmatprep.subr.bf16.mxu0 0
    %2103 = vmatpush1.bf16.msra.mxu0 0
    %2104 = vmatprep.subr.bf16.mxu0 0
    %2105 = vmatpush1.bf16.msra.mxu0 0
    %2106 = vmatprep.subr.bf16.mxu0 0
    %2107 = vmatpush1.bf16.msra.mxu0 0
    %2108 = vmatprep.subr.bf16.mxu0 0
    %2109 = vmatpush1.bf16.msra.mxu0 0
    %2110 = vmatprep.subr.bf16.mxu0 0
    %2111 = vmatpush1.bf16.msra.mxu0 0
    %2112 = vmatprep.subr.bf16.mxu0 0
    %2113 = vmatpush1.bf16.msra.mxu0 0
    %2114 = vmatprep.subr.bf16.mxu0 0
    %2115 = vmatpush1.bf16.msra.mxu0 0
    %2116 = vmatprep.subr.bf16.mxu0 0
    %2117 = vmatpush1.bf16.msra.mxu0 0
    %2118 = vmatprep.subr.bf16.mxu0 0
    %2119 = vmatpush1.bf16.msra.mxu0 0
    %2120 = vmatprep.subr.bf16.mxu0 0
    %2121 = vmatpush1.bf16.msra.mxu0 0
    %2122 = vmatprep.subr.bf16.mxu0 0
    %2123 = vmatpush1.bf16.msra.mxu0 0
    %2124 = vmatprep.subr.bf16.mxu0 0
    %2125 = vmatpush1.bf16.msra.mxu0 0
    %2126 = vmatprep.subr.bf16.mxu0 0
    %2127 = vmatpush1.bf16.msra.mxu0 0
    %2128 = vmatprep.mubr.bf16.mxu0 0
    %2129 = vmatmul.mubr.bf16.gmra.mrb[0].mxu0 %v2094
    %v2130 = vpop.f32.mrb[0].mxu0
    %v2131 = vadd.f32 0.0, %v2130
    %v2132 = vpop.f32.mrb[0].mxu0
    %v2133 = vpop.f32.mrb[0].mxu0
    %v2134 = vadd.f32 0.0, %v2133
    %v2135 = vpop.f32.mrb[0].mxu0
    %2136 = vdwg.mxu0
    %v2138 = vsel %vm1520, %v1502, 0
    %2140 = vmatprep.subr.bf16.mxu0 0
    %2141 = vmatpush1.bf16.msra.mxu0 %v1518
    %2142 = vmatprep.subr.bf16.mxu0 0
    %2143 = vmatpush1.bf16.msra.mxu0 0
    %2144 = vmatprep.subr.bf16.mxu0 0
    %2145 = vmatpush1.bf16.msra.mxu0 0
    %2146 = vmatprep.subr.bf16.mxu0 0
    %2147 = vmatpush1.bf16.msra.mxu0 0
    %2148 = vmatprep.subr.bf16.mxu0 0
    %2149 = vmatpush1.bf16.msra.mxu0 0
    %2150 = vmatprep.subr.bf16.mxu0 0
    %2151 = vmatpush1.bf16.msra.mxu0 0
    %2152 = vmatprep.subr.bf16.mxu0 0
    %2153 = vmatpush1.bf16.msra.mxu0 0
    %2154 = vmatprep.subr.bf16.mxu0 0
    %2155 = vmatpush1.bf16.msra.mxu0 0
    %2156 = vmatprep.subr.bf16.mxu0 0
    %2157 = vmatpush1.bf16.msra.mxu0 0
    %2158 = vmatprep.subr.bf16.mxu0 0
    %2159 = vmatpush1.bf16.msra.mxu0 0
    %2160 = vmatprep.subr.bf16.mxu0 0
    %2161 = vmatpush1.bf16.msra.mxu0 0
    %2162 = vmatprep.subr.bf16.mxu0 0
    %2163 = vmatpush1.bf16.msra.mxu0 0
    %2164 = vmatprep.subr.bf16.mxu0 0
    %2165 = vmatpush1.bf16.msra.mxu0 0
    %2166 = vmatprep.subr.bf16.mxu0 0
    %2167 = vmatpush1.bf16.msra.mxu0 0
    %2168 = vmatprep.subr.bf16.mxu0 0
    %2169 = vmatpush1.bf16.msra.mxu0 0
    %2170 = vmatprep.subr.bf16.mxu0 0
    %2171 = vmatpush1.bf16.msra.mxu0 0
    %2172 = vmatprep.mubr.bf16.mxu0 0
    %2173 = vmatmul.mubr.bf16.gmra.mrb[0].mxu0 %v2138
    %v2174 = vpop.f32.mrb[0].mxu0
    %v2175 = vadd.f32 0.0, %v2174
    %v2176 = vpop.f32.mrb[0].mxu0
    %v2177 = vpop.f32.mrb[0].mxu0
    %v2178 = vadd.f32 0.0, %v2177
    %v2179 = vpop.f32.mrb[0].mxu0
    %2180 = vdwg.mxu0
    %v2182 = vsel %vm1520, %v1503, 0
    %2184 = vmatprep.subr.bf16.mxu0 0
    %2185 = vmatpush1.bf16.msra.mxu0 %v1519
    %2186 = vmatprep.subr.bf16.mxu0 0
    %2187 = vmatpush1.bf16.msra.mxu0 0
    %2188 = vmatprep.subr.bf16.mxu0 0
    %2189 = vmatpush1.bf16.msra.mxu0 0
    %2190 = vmatprep.subr.bf16.mxu0 0
    %2191 = vmatpush1.bf16.msra.mxu0 0
    %2192 = vmatprep.subr.bf16.mxu0 0
    %2193 = vmatpush1.bf16.msra.mxu0 0
    %2194 = vmatprep.subr.bf16.mxu0 0
    %2195 = vmatpush1.bf16.msra.mxu0 0
    %2196 = vmatprep.subr.bf16.mxu0 0
    %2197 = vmatpush1.bf16.msra.mxu0 0
    %2198 = vmatprep.subr.bf16.mxu0 0
    %2199 = vmatpush1.bf16.msra.mxu0 0
    %2200 = vmatprep.subr.bf16.mxu0 0
    %2201 = vmatpush1.bf16.msra.mxu0 0
    %2202 = vmatprep.subr.bf16.mxu0 0
    %2203 = vmatpush1.bf16.msra.mxu0 0
    %2204 = vmatprep.subr.bf16.mxu0 0
    %2205 = vmatpush1.bf16.msra.mxu0 0
    %2206 = vmatprep.subr.bf16.mxu0 0
    %2207 = vmatpush1.bf16.msra.mxu0 0
    %2208 = vmatprep.subr.bf16.mxu0 0
    %2209 = vmatpush1.bf16.msra.mxu0 0
    %2210 = vmatprep.subr.bf16.mxu0 0
    %2211 = vmatpush1.bf16.msra.mxu0 0
    %2212 = vmatprep.subr.bf16.mxu0 0
    %2213 = vmatpush1.bf16.msra.mxu0 0
    %2214 = vmatprep.subr.bf16.mxu0 0
    %2215 = vmatpush1.bf16.msra.mxu0 0
    %2216 = vmatprep.mubr.bf16.mxu0 0
    %2217 = vmatmul.mubr.bf16.gmra.mrb[0].mxu0 %v2182
    %v2218 = vpop.f32.mrb[0].mxu0
    %v2219 = vadd.f32 0.0, %v2218
    %v2220 = vpop.f32.mrb[0].mxu0
    %v2221 = vpop.f32.mrb[0].mxu0
    %v2222 = vadd.f32 0.0, %v2221
    %v2223 = vpop.f32.mrb[0].mxu0
    %2224 = vdwg.mxu0
    %2225 = vst.msk [vmem:[#allocation2] sm:$0xff] %vm1520, %v1559
    %2226 = vst.msk [vmem:[#allocation2 + $0x8] sm:$0xff] %vm1520, %v1562
    %2227 = vst.msk [vmem:[#allocation2 + $0x10] sm:$0xff] %vm1520, %v1603
    %2228 = vst.msk [vmem:[#allocation2 + $0x18] sm:$0xff] %vm1520, %v1606
    %2229 = vst.msk [vmem:[#allocation2 + $0x20] sm:$0xff] %vm1520, %v1647
    %2230 = vst.msk [vmem:[#allocation2 + $0x28] sm:$0xff] %vm1520, %v1650
    %2231 = vst.msk [vmem:[#allocation2 + $0x30] sm:$0xff] %vm1520, %v1691
    %2232 = vst.msk [vmem:[#allocation2 + $0x38] sm:$0xff] %vm1520, %v1694
    %2233 = vst.msk [vmem:[#allocation2 + $0x40] sm:$0xff] %vm1520, %v1735
    %2234 = vst.msk [vmem:[#allocation2 + $0x48] sm:$0xff] %vm1520, %v1738
    %2235 = vst.msk [vmem:[#allocation2 + $0x50] sm:$0xff] %vm1520, %v1779
    %2236 = vst.msk [vmem:[#allocation2 + $0x58] sm:$0xff] %vm1520, %v1782
    %2237 = vst.msk [vmem:[#allocation2 + $0x60] sm:$0xff] %vm1520, %v1823
    %2238 = vst.msk [vmem:[#allocation2 + $0x68] sm:$0xff] %vm1520, %v1826
    %2239 = vst.msk [vmem:[#allocation2 + $0x70] sm:$0xff] %vm1520, %v1867
    %2240 = vst.msk [vmem:[#allocation2 + $0x78] sm:$0xff] %vm1520, %v1870
    %2241 = vst.msk [vmem:[#allocation2 + $0x80] sm:$0xff] %vm1520, %v1911
    %2242 = vst.msk [vmem:[#allocation2 + $0x88] sm:$0xff] %vm1520, %v1914
    %2243 = vst.msk [vmem:[#allocation2 + $0x90] sm:$0xff] %vm1520, %v1955
    %2244 = vst.msk [vmem:[#allocation2 + $0x98] sm:$0xff] %vm1520, %v1958
    %2245 = vst.msk [vmem:[#allocation2 + $0xa0] sm:$0xff] %vm1520, %v1999
    %2246 = vst.msk [vmem:[#allocation2 + $0xa8] sm:$0xff] %vm1520, %v2002
    %2247 = vst.msk [vmem:[#allocation2 + $0xb0] sm:$0xff] %vm1520, %v2043
    %2248 = vst.msk [vmem:[#allocation2 + $0xb8] sm:$0xff] %vm1520, %v2046
    %2249 = vst.msk [vmem:[#allocation2 + $0xc0] sm:$0xff] %vm1520, %v2087
    %2250 = vst.msk [vmem:[#allocation2 + $0xc8] sm:$0xff] %vm1520, %v2090
    %2251 = vst.msk [vmem:[#allocation2 + $0xd0] sm:$0xff] %vm1520, %v2131
    %2252 = vst.msk [vmem:[#allocation2 + $0xd8] sm:$0xff] %vm1520, %v2134
    %2253 = vst.msk [vmem:[#allocation2 + $0xe0] sm:$0xff] %vm1520, %v2175
    %2254 = vst.msk [vmem:[#allocation2 + $0xe8] sm:$0xff] %vm1520, %v2178
    %2255 = vst.msk [vmem:[#allocation2 + $0xf0] sm:$0xff] %vm1520, %v2219
    %2256 = vst.msk [vmem:[#allocation2 + $0xf8] sm:$0xff] %vm1520, %v2222
    %s2257 = scalar_lea.vmem %s0, 8
    %v2258 = vld [vmem:[%s2257] sm:$0xff]
    %s2259 = scalar_lea.vmem %s1, 8
    %v2260 = vld [vmem:[%s2259] sm:$0xff]
    %v2261 = vlaneseq
    %v2262 = vshrl.u32 %v2261, 7
    %v2263 = vsub.s32 0, %v2262
    %v2264 = vrot.slane %v2258, %v2263
    %2266 = vbcast.lane.b32.xlu0 %v2264, 256
    %v2267 = vpop.permute.xlu0 %2266
    %s2269 = sor.u32 256, 8
    %2270 = vbcast.lane.b32.xlu0 %v2264, %s2269
    %v2271 = vpop.permute.xlu0 %2270
    %v2272 = vlaneseq
    %v2273 = vshrl.u32 %v2272, 7
    %v2274 = vsub.s32 1, %v2273
    %v2275 = vrot.slane %v2258, %v2274
    %2277 = vbcast.lane.b32.xlu0 %v2275, 256
    %v2278 = vpop.permute.xlu0 %2277
    %s2280 = sor.u32 256, 8
    %2281 = vbcast.lane.b32.xlu0 %v2275, %s2280
    %v2282 = vpop.permute.xlu0 %2281
    %v2283 = vlaneseq
    %v2284 = vshrl.u32 %v2283, 7
    %v2285 = vsub.s32 2, %v2284
    %v2286 = vrot.slane %v2258, %v2285
    %2288 = vbcast.lane.b32.xlu0 %v2286, 256
    %v2289 = vpop.permute.xlu0 %2288
    %s2291 = sor.u32 256, 8
    %2292 = vbcast.lane.b32.xlu0 %v2286, %s2291
    %v2293 = vpop.permute.xlu0 %2292
    %v2294 = vlaneseq
    %v2295 = vshrl.u32 %v2294, 7
    %v2296 = vsub.s32 3, %v2295
    %v2297 = vrot.slane %v2258, %v2296
    %2299 = vbcast.lane.b32.xlu0 %v2297, 256
    %v2300 = vpop.permute.xlu0 %2299
    %s2302 = sor.u32 256, 8
    %2303 = vbcast.lane.b32.xlu0 %v2297, %s2302
    %v2304 = vpop.permute.xlu0 %2303
    %v2305 = vlaneseq
    %v2306 = vshrl.u32 %v2305, 7
    %v2307 = vsub.s32 4, %v2306
    %v2308 = vrot.slane %v2258, %v2307
    %2310 = vbcast.lane.b32.xlu0 %v2308, 256
    %v2311 = vpop.permute.xlu0 %2310
    %s2313 = sor.u32 256, 8
    %2314 = vbcast.lane.b32.xlu0 %v2308, %s2313
    %v2315 = vpop.permute.xlu0 %2314
    %v2316 = vlaneseq
    %v2317 = vshrl.u32 %v2316, 7
    %v2318 = vsub.s32 5, %v2317
    %v2319 = vrot.slane %v2258, %v2318
    %2321 = vbcast.lane.b32.xlu0 %v2319, 256
    %v2322 = vpop.permute.xlu0 %2321
    %s2324 = sor.u32 256, 8
    %2325 = vbcast.lane.b32.xlu0 %v2319, %s2324
    %v2326 = vpop.permute.xlu0 %2325
    %v2327 = vlaneseq
    %v2328 = vshrl.u32 %v2327, 7
    %v2329 = vsub.s32 6, %v2328
    %v2330 = vrot.slane %v2258, %v2329
    %2332 = vbcast.lane.b32.xlu0 %v2330, 256
    %v2333 = vpop.permute.xlu0 %2332
    %s2335 = sor.u32 256, 8
    %2336 = vbcast.lane.b32.xlu0 %v2330, %s2335
    %v2337 = vpop.permute.xlu0 %2336
    %v2338 = vlaneseq
    %v2339 = vshrl.u32 %v2338, 7
    %v2340 = vsub.s32 7, %v2339
    %v2341 = vrot.slane %v2258, %v2340
    %2343 = vbcast.lane.b32.xlu0 %v2341, 256
    %v2344 = vpop.permute.xlu0 %2343
    %s2346 = sor.u32 256, 8
    %2347 = vbcast.lane.b32.xlu0 %v2341, %s2346
    %v2348 = vpop.permute.xlu0 %2347
    %v2350 = vcombine.high %v2260, %v2260
    %v2352 = vunpack.c.l.s4 1966171168
    %v2353 = vunpack.c.0.s8 %v2352
    %v2354 = vlaneseq
    %v2355 = vshrl.u32 %v2354, 7
    %v2356 = vsub.s32 %v2353, %v2355
    %v2357 = vrot.slane %v2260, %v2356
    %v2359 = vunpack.c.l.s4 1966171168
    %v2360 = vunpack.c.0.s8 %v2359
    %v2361 = vlaneseq
    %v2362 = vshrl.u32 %v2361, 7
    %v2363 = vsub.s32 %v2360, %v2362
    %v2364 = vrot.slane %v2350, %v2363
    %v2365 = vcombine.high %v2357, %v2357
    %v2366 = vcombine.high %v2364, %v2364
    %v2368 = vunpack.c.l.s4 1966171168
    %v2369 = vunpack.c.0.s8 %v2368
    %v2370 = vlaneseq
    %v2371 = vshrl.u32 %v2370, 7
    %v2372 = vsub.s32 %v2369, %v2371
    %v2373 = vrot.slane %v2357, %v2372
    %v2375 = vunpack.c.l.s4 1966171168
    %v2376 = vunpack.c.0.s8 %v2375
    %v2377 = vlaneseq
    %v2378 = vshrl.u32 %v2377, 7
    %v2379 = vsub.s32 %v2376, %v2378
    %v2380 = vrot.slane %v2364, %v2379
    %v2382 = vunpack.c.l.s4 1966171168
    %v2383 = vunpack.c.0.s8 %v2382
    %v2384 = vlaneseq
    %v2385 = vshrl.u32 %v2384, 7
    %v2386 = vsub.s32 %v2383, %v2385
    %v2387 = vrot.slane %v2365, %v2386
    %v2389 = vunpack.c.l.s4 1966171168
    %v2390 = vunpack.c.0.s8 %v2389
    %v2391 = vlaneseq
    %v2392 = vshrl.u32 %v2391, 7
    %v2393 = vsub.s32 %v2390, %v2392
    %v2394 = vrot.slane %v2366, %v2393
    %v2395 = vcombine.high %v2373, %v2373
    %v2396 = vcombine.high %v2380, %v2380
    %v2397 = vcombine.high %v2387, %v2387
    %v2398 = vcombine.high %v2394, %v2394
    %v2399 = vlaneseq
    %v2400 = vshrl.u32 %v2399, 7
    %v2401 = vsub.s32 0, %v2400
    %v2402 = vrot.slane %v2373, %v2401
    %v2403 = vlaneseq
    %v2404 = vshrl.u32 %v2403, 7
    %v2405 = vsub.s32 0, %v2404
    %v2406 = vrot.slane %v2387, %v2405
    %v2407 = vlaneseq
    %v2408 = vshrl.u32 %v2407, 7
    %v2409 = vsub.s32 0, %v2408
    %v2410 = vrot.slane %v2395, %v2409
    %v2411 = vlaneseq
    %v2412 = vshrl.u32 %v2411, 7
    %v2413 = vsub.s32 0, %v2412
    %v2414 = vrot.slane %v2397, %v2413
    %v2415 = vlaneseq
    %v2416 = vshrl.u32 %v2415, 7
    %v2417 = vsub.s32 0, %v2416
    %v2418 = vrot.slane %v2380, %v2417
    %v2419 = vlaneseq
    %v2420 = vshrl.u32 %v2419, 7
    %v2421 = vsub.s32 0, %v2420
    %v2422 = vrot.slane %v2394, %v2421
    %v2423 = vlaneseq
    %v2424 = vshrl.u32 %v2423, 7
    %v2425 = vsub.s32 0, %v2424
    %v2426 = vrot.slane %v2396, %v2425
    %v2427 = vlaneseq
    %v2428 = vshrl.u32 %v2427, 7
    %v2429 = vsub.s32 0, %v2428
    %v2430 = vrot.slane %v2398, %v2429
    %v2439 = vsub.f32 %v2267, %v2402
    %v2440 = vsub.f32 %v2271, %v2402
    %v2441 = vsub.f32 %v2278, %v2406
    %v2442 = vsub.f32 %v2282, %v2406
    %v2443 = vsub.f32 %v2289, %v2410
    %v2444 = vsub.f32 %v2293, %v2410
    %v2445 = vsub.f32 %v2300, %v2414
    %v2446 = vsub.f32 %v2304, %v2414
    %v2447 = vsub.f32 %v2311, %v2418
    %v2448 = vsub.f32 %v2315, %v2418
    %v2449 = vsub.f32 %v2322, %v2422
    %v2450 = vsub.f32 %v2326, %v2422
    %v2451 = vsub.f32 %v2333, %v2426
    %v2452 = vsub.f32 %v2337, %v2426
    %v2453 = vsub.f32 %v2344, %v2430
    %v2454 = vsub.f32 %v2348, %v2430
    %v2455 = vtanh.pop %v2439
    %v2456 = vtanh.pop %v2440
    %v2457 = vtanh.pop %v2441
    %v2458 = vtanh.pop %v2442
    %v2459 = vtanh.pop %v2443
    %v2460 = vtanh.pop %v2444
    %v2461 = vtanh.pop %v2445
    %v2462 = vtanh.pop %v2446
    %v2463 = vtanh.pop %v2447
    %v2464 = vtanh.pop %v2448
    %v2465 = vtanh.pop %v2449
    %v2466 = vtanh.pop %v2450
    %v2467 = vtanh.pop %v2451
    %v2468 = vtanh.pop %v2452
    %v2469 = vtanh.pop %v2453
    %v2470 = vtanh.pop %v2454
    %v2471 = vmul.f32 %v434, %v2455
    %v2472 = vmul.f32 %v434, %v2456
    %v2473 = vmul.f32 %v438, %v2455
    %v2474 = vmul.f32 %v438, %v2456
    %v2475 = vmul.f32 %v442, %v2455
    %v2476 = vmul.f32 %v442, %v2456
    %v2477 = vmul.f32 %v446, %v2455
    %v2478 = vmul.f32 %v446, %v2456
    %v2479 = vmul.f32 %v450, %v2455
    %v2480 = vmul.f32 %v450, %v2456
    %v2481 = vmul.f32 %v454, %v2455
    %v2482 = vmul.f32 %v454, %v2456
    %v2483 = vmul.f32 %v458, %v2455
    %v2484 = vmul.f32 %v458, %v2456
    %v2485 = vmul.f32 %v462, %v2455
    %v2486 = vmul.f32 %v462, %v2456
    %v2487 = vmul.f32 %v466, %v2455
    %v2488 = vmul.f32 %v466, %v2456
    %v2489 = vmul.f32 %v470, %v2455
    %v2490 = vmul.f32 %v470, %v2456
    %v2491 = vmul.f32 %v474, %v2455
    %v2492 = vmul.f32 %v474, %v2456
    %v2493 = vmul.f32 %v478, %v2455
    %v2494 = vmul.f32 %v478, %v2456
    %v2495 = vmul.f32 %v482, %v2455
    %v2496 = vmul.f32 %v482, %v2456
    %v2497 = vmul.f32 %v486, %v2455
    %v2498 = vmul.f32 %v486, %v2456
    %v2499 = vmul.f32 %v490, %v2455
    %v2500 = vmul.f32 %v490, %v2456
    %v2501 = vmul.f32 %v494, %v2455
    %v2502 = vmul.f32 %v494, %v2456
    %v2503 = vadd.f32 %v24, %v2471
    %v2504 = vadd.f32 %v25, %v2472
    %v2505 = vadd.f32 %v26, %v2473
    %v2506 = vadd.f32 %v27, %v2474
    %v2507 = vadd.f32 %v28, %v2475
    %v2508 = vadd.f32 %v29, %v2476
    %v2509 = vadd.f32 %v30, %v2477
    %v2510 = vadd.f32 %v31, %v2478
    %v2511 = vadd.f32 %v32, %v2479
    %v2512 = vadd.f32 %v33, %v2480
    %v2513 = vadd.f32 %v34, %v2481
    %v2514 = vadd.f32 %v35, %v2482
    %v2515 = vadd.f32 %v36, %v2483
    %v2516 = vadd.f32 %v37, %v2484
    %v2517 = vadd.f32 %v38, %v2485
    %v2518 = vadd.f32 %v39, %v2486
    %v2519 = vadd.f32 %v40, %v2487
    %v2520 = vadd.f32 %v41, %v2488
    %v2521 = vadd.f32 %v42, %v2489
    %v2522 = vadd.f32 %v43, %v2490
    %v2523 = vadd.f32 %v44, %v2491
    %v2524 = vadd.f32 %v45, %v2492
    %v2525 = vadd.f32 %v46, %v2493
    %v2526 = vadd.f32 %v47, %v2494
    %v2527 = vadd.f32 %v48, %v2495
    %v2528 = vadd.f32 %v49, %v2496
    %v2529 = vadd.f32 %v50, %v2497
    %v2530 = vadd.f32 %v51, %v2498
    %v2531 = vadd.f32 %v52, %v2499
    %v2532 = vadd.f32 %v53, %v2500
    %v2533 = vadd.f32 %v54, %v2501
    %v2534 = vadd.f32 %v55, %v2502
    %v2535 = vmul.f32 %v562, %v2457
    %v2536 = vmul.f32 %v562, %v2458
    %v2537 = vmul.f32 %v566, %v2457
    %v2538 = vmul.f32 %v566, %v2458
    %v2539 = vmul.f32 %v570, %v2457
    %v2540 = vmul.f32 %v570, %v2458
    %v2541 = vmul.f32 %v574, %v2457
    %v2542 = vmul.f32 %v574, %v2458
    %v2543 = vmul.f32 %v578, %v2457
    %v2544 = vmul.f32 %v578, %v2458
    %v2545 = vmul.f32 %v582, %v2457
    %v2546 = vmul.f32 %v582, %v2458
    %v2547 = vmul.f32 %v586, %v2457
    %v2548 = vmul.f32 %v586, %v2458
    %v2549 = vmul.f32 %v590, %v2457
    %v2550 = vmul.f32 %v590, %v2458
    %v2551 = vmul.f32 %v594, %v2457
    %v2552 = vmul.f32 %v594, %v2458
    %v2553 = vmul.f32 %v598, %v2457
    %v2554 = vmul.f32 %v598, %v2458
    %v2555 = vmul.f32 %v602, %v2457
    %v2556 = vmul.f32 %v602, %v2458
    %v2557 = vmul.f32 %v606, %v2457
    %v2558 = vmul.f32 %v606, %v2458
    %v2559 = vmul.f32 %v610, %v2457
    %v2560 = vmul.f32 %v610, %v2458
    %v2561 = vmul.f32 %v614, %v2457
    %v2562 = vmul.f32 %v614, %v2458
    %v2563 = vmul.f32 %v618, %v2457
    %v2564 = vmul.f32 %v618, %v2458
    %v2565 = vmul.f32 %v622, %v2457
    %v2566 = vmul.f32 %v622, %v2458
    %v2567 = vadd.f32 %v2503, %v2535
    %v2568 = vadd.f32 %v2504, %v2536
    %v2569 = vadd.f32 %v2505, %v2537
    %v2570 = vadd.f32 %v2506, %v2538
    %v2571 = vadd.f32 %v2507, %v2539
    %v2572 = vadd.f32 %v2508, %v2540
    %v2573 = vadd.f32 %v2509, %v2541
    %v2574 = vadd.f32 %v2510, %v2542
    %v2575 = vadd.f32 %v2511, %v2543
    %v2576 = vadd.f32 %v2512, %v2544
    %v2577 = vadd.f32 %v2513, %v2545
    %v2578 = vadd.f32 %v2514, %v2546
    %v2579 = vadd.f32 %v2515, %v2547
    %v2580 = vadd.f32 %v2516, %v2548
    %v2581 = vadd.f32 %v2517, %v2549
    %v2582 = vadd.f32 %v2518, %v2550
    %v2583 = vadd.f32 %v2519, %v2551
    %v2584 = vadd.f32 %v2520, %v2552
    %v2585 = vadd.f32 %v2521, %v2553
    %v2586 = vadd.f32 %v2522, %v2554
    %v2587 = vadd.f32 %v2523, %v2555
    %v2588 = vadd.f32 %v2524, %v2556
    %v2589 = vadd.f32 %v2525, %v2557
    %v2590 = vadd.f32 %v2526, %v2558
    %v2591 = vadd.f32 %v2527, %v2559
    %v2592 = vadd.f32 %v2528, %v2560
    %v2593 = vadd.f32 %v2529, %v2561
    %v2594 = vadd.f32 %v2530, %v2562
    %v2595 = vadd.f32 %v2531, %v2563
    %v2596 = vadd.f32 %v2532, %v2564
    %v2597 = vadd.f32 %v2533, %v2565
    %v2598 = vadd.f32 %v2534, %v2566
    %v2599 = vmul.f32 %v690, %v2459
    %v2600 = vmul.f32 %v690, %v2460
    %v2601 = vmul.f32 %v694, %v2459
    %v2602 = vmul.f32 %v694, %v2460
    %v2603 = vmul.f32 %v698, %v2459
    %v2604 = vmul.f32 %v698, %v2460
    %v2605 = vmul.f32 %v702, %v2459
    %v2606 = vmul.f32 %v702, %v2460
    %v2607 = vmul.f32 %v706, %v2459
    %v2608 = vmul.f32 %v706, %v2460
    %v2609 = vmul.f32 %v710, %v2459
    %v2610 = vmul.f32 %v710, %v2460
    %v2611 = vmul.f32 %v714, %v2459
    %v2612 = vmul.f32 %v714, %v2460
    %v2613 = vmul.f32 %v718, %v2459
    %v2614 = vmul.f32 %v718, %v2460
    %v2615 = vmul.f32 %v722, %v2459
    %v2616 = vmul.f32 %v722, %v2460
    %v2617 = vmul.f32 %v726, %v2459
    %v2618 = vmul.f32 %v726, %v2460
    %v2619 = vmul.f32 %v730, %v2459
    %v2620 = vmul.f32 %v730, %v2460
    %v2621 = vmul.f32 %v734, %v2459
    %v2622 = vmul.f32 %v734, %v2460
    %v2623 = vmul.f32 %v738, %v2459
    %v2624 = vmul.f32 %v738, %v2460
    %v2625 = vmul.f32 %v742, %v2459
    %v2626 = vmul.f32 %v742, %v2460
    %v2627 = vmul.f32 %v746, %v2459
    %v2628 = vmul.f32 %v746, %v2460
    %v2629 = vmul.f32 %v750, %v2459
    %v2630 = vmul.f32 %v750, %v2460
    %v2631 = vadd.f32 %v2567, %v2599
    %v2632 = vadd.f32 %v2568, %v2600
    %v2633 = vadd.f32 %v2569, %v2601
    %v2634 = vadd.f32 %v2570, %v2602
    %v2635 = vadd.f32 %v2571, %v2603
    %v2636 = vadd.f32 %v2572, %v2604
    %v2637 = vadd.f32 %v2573, %v2605
    %v2638 = vadd.f32 %v2574, %v2606
    %v2639 = vadd.f32 %v2575, %v2607
    %v2640 = vadd.f32 %v2576, %v2608
    %v2641 = vadd.f32 %v2577, %v2609
    %v2642 = vadd.f32 %v2578, %v2610
    %v2643 = vadd.f32 %v2579, %v2611
    %v2644 = vadd.f32 %v2580, %v2612
    %v2645 = vadd.f32 %v2581, %v2613
    %v2646 = vadd.f32 %v2582, %v2614
    %v2647 = vadd.f32 %v2583, %v2615
    %v2648 = vadd.f32 %v2584, %v2616
    %v2649 = vadd.f32 %v2585, %v2617
    %v2650 = vadd.f32 %v2586, %v2618
    %v2651 = vadd.f32 %v2587, %v2619
    %v2652 = vadd.f32 %v2588, %v2620
    %v2653 = vadd.f32 %v2589, %v2621
    %v2654 = vadd.f32 %v2590, %v2622
    %v2655 = vadd.f32 %v2591, %v2623
    %v2656 = vadd.f32 %v2592, %v2624
    %v2657 = vadd.f32 %v2593, %v2625
    %v2658 = vadd.f32 %v2594, %v2626
    %v2659 = vadd.f32 %v2595, %v2627
    %v2660 = vadd.f32 %v2596, %v2628
    %v2661 = vadd.f32 %v2597, %v2629
    %v2662 = vadd.f32 %v2598, %v2630
    %v2663 = vmul.f32 %v818, %v2461
    %v2664 = vmul.f32 %v818, %v2462
    %v2665 = vmul.f32 %v822, %v2461
    %v2666 = vmul.f32 %v822, %v2462
    %v2667 = vmul.f32 %v826, %v2461
    %v2668 = vmul.f32 %v826, %v2462
    %v2669 = vmul.f32 %v830, %v2461
    %v2670 = vmul.f32 %v830, %v2462
    %v2671 = vmul.f32 %v834, %v2461
    %v2672 = vmul.f32 %v834, %v2462
    %v2673 = vmul.f32 %v838, %v2461
    %v2674 = vmul.f32 %v838, %v2462
    %v2675 = vmul.f32 %v842, %v2461
    %v2676 = vmul.f32 %v842, %v2462
    %v2677 = vmul.f32 %v846, %v2461
    %v2678 = vmul.f32 %v846, %v2462
    %v2679 = vmul.f32 %v850, %v2461
    %v2680 = vmul.f32 %v850, %v2462
    %v2681 = vmul.f32 %v854, %v2461
    %v2682 = vmul.f32 %v854, %v2462
    %v2683 = vmul.f32 %v858, %v2461
    %v2684 = vmul.f32 %v858, %v2462
    %v2685 = vmul.f32 %v862, %v2461
    %v2686 = vmul.f32 %v862, %v2462
    %v2687 = vmul.f32 %v866, %v2461
    %v2688 = vmul.f32 %v866, %v2462
    %v2689 = vmul.f32 %v870, %v2461
    %v2690 = vmul.f32 %v870, %v2462
    %v2691 = vmul.f32 %v874, %v2461
    %v2692 = vmul.f32 %v874, %v2462
    %v2693 = vmul.f32 %v878, %v2461
    %v2694 = vmul.f32 %v878, %v2462
    %v2695 = vadd.f32 %v2631, %v2663
    %v2696 = vadd.f32 %v2632, %v2664
    %v2697 = vadd.f32 %v2633, %v2665
    %v2698 = vadd.f32 %v2634, %v2666
    %v2699 = vadd.f32 %v2635, %v2667
    %v2700 = vadd.f32 %v2636, %v2668
    %v2701 = vadd.f32 %v2637, %v2669
    %v2702 = vadd.f32 %v2638, %v2670
    %v2703 = vadd.f32 %v2639, %v2671
    %v2704 = vadd.f32 %v2640, %v2672
    %v2705 = vadd.f32 %v2641, %v2673
    %v2706 = vadd.f32 %v2642, %v2674
    %v2707 = vadd.f32 %v2643, %v2675
    %v2708 = vadd.f32 %v2644, %v2676
    %v2709 = vadd.f32 %v2645, %v2677
    %v2710 = vadd.f32 %v2646, %v2678
    %v2711 = vadd.f32 %v2647, %v2679
    %v2712 = vadd.f32 %v2648, %v2680
    %v2713 = vadd.f32 %v2649, %v2681
    %v2714 = vadd.f32 %v2650, %v2682
    %v2715 = vadd.f32 %v2651, %v2683
    %v2716 = vadd.f32 %v2652, %v2684
    %v2717 = vadd.f32 %v2653, %v2685
    %v2718 = vadd.f32 %v2654, %v2686
    %v2719 = vadd.f32 %v2655, %v2687
    %v2720 = vadd.f32 %v2656, %v2688
    %v2721 = vadd.f32 %v2657, %v2689
    %v2722 = vadd.f32 %v2658, %v2690
    %v2723 = vadd.f32 %v2659, %v2691
    %v2724 = vadd.f32 %v2660, %v2692
    %v2725 = vadd.f32 %v2661, %v2693
    %v2726 = vadd.f32 %v2662, %v2694
    %v2727 = vmul.f32 %v946, %v2463
    %v2728 = vmul.f32 %v946, %v2464
    %v2729 = vmul.f32 %v950, %v2463
    %v2730 = vmul.f32 %v950, %v2464
    %v2731 = vmul.f32 %v954, %v2463
    %v2732 = vmul.f32 %v954, %v2464
    %v2733 = vmul.f32 %v958, %v2463
    %v2734 = vmul.f32 %v958, %v2464
    %v2735 = vmul.f32 %v962, %v2463
    %v2736 = vmul.f32 %v962, %v2464
    %v2737 = vmul.f32 %v966, %v2463
    %v2738 = vmul.f32 %v966, %v2464
    %v2739 = vmul.f32 %v970, %v2463
    %v2740 = vmul.f32 %v970, %v2464
    %v2741 = vmul.f32 %v974, %v2463
    %v2742 = vmul.f32 %v974, %v2464
    %v2743 = vmul.f32 %v978, %v2463
    %v2744 = vmul.f32 %v978, %v2464
    %v2745 = vmul.f32 %v982, %v2463
    %v2746 = vmul.f32 %v982, %v2464
    %v2747 = vmul.f32 %v986, %v2463
    %v2748 = vmul.f32 %v986, %v2464
    %v2749 = vmul.f32 %v990, %v2463
    %v2750 = vmul.f32 %v990, %v2464
    %v2751 = vmul.f32 %v994, %v2463
    %v2752 = vmul.f32 %v994, %v2464
    %v2753 = vmul.f32 %v998, %v2463
    %v2754 = vmul.f32 %v998, %v2464
    %v2755 = vmul.f32 %v1002, %v2463
    %v2756 = vmul.f32 %v1002, %v2464
    %v2757 = vmul.f32 %v1006, %v2463
    %v2758 = vmul.f32 %v1006, %v2464
    %v2759 = vadd.f32 %v2695, %v2727
    %v2760 = vadd.f32 %v2696, %v2728
    %v2761 = vadd.f32 %v2697, %v2729
    %v2762 = vadd.f32 %v2698, %v2730
    %v2763 = vadd.f32 %v2699, %v2731
    %v2764 = vadd.f32 %v2700, %v2732
    %v2765 = vadd.f32 %v2701, %v2733
    %v2766 = vadd.f32 %v2702, %v2734
    %v2767 = vadd.f32 %v2703, %v2735
    %v2768 = vadd.f32 %v2704, %v2736
    %v2769 = vadd.f32 %v2705, %v2737
    %v2770 = vadd.f32 %v2706, %v2738
    %v2771 = vadd.f32 %v2707, %v2739
    %v2772 = vadd.f32 %v2708, %v2740
    %v2773 = vadd.f32 %v2709, %v2741
    %v2774 = vadd.f32 %v2710, %v2742
    %v2775 = vadd.f32 %v2711, %v2743
    %v2776 = vadd.f32 %v2712, %v2744
    %v2777 = vadd.f32 %v2713, %v2745
    %v2778 = vadd.f32 %v2714, %v2746
    %v2779 = vadd.f32 %v2715, %v2747
    %v2780 = vadd.f32 %v2716, %v2748
    %v2781 = vadd.f32 %v2717, %v2749
    %v2782 = vadd.f32 %v2718, %v2750
    %v2783 = vadd.f32 %v2719, %v2751
    %v2784 = vadd.f32 %v2720, %v2752
    %v2785 = vadd.f32 %v2721, %v2753
    %v2786 = vadd.f32 %v2722, %v2754
    %v2787 = vadd.f32 %v2723, %v2755
    %v2788 = vadd.f32 %v2724, %v2756
    %v2789 = vadd.f32 %v2725, %v2757
    %v2790 = vadd.f32 %v2726, %v2758
    %v2791 = vmul.f32 %v1074, %v2465
    %v2792 = vmul.f32 %v1074, %v2466
    %v2793 = vmul.f32 %v1078, %v2465
    %v2794 = vmul.f32 %v1078, %v2466
    %v2795 = vmul.f32 %v1082, %v2465
    %v2796 = vmul.f32 %v1082, %v2466
    %v2797 = vmul.f32 %v1086, %v2465
    %v2798 = vmul.f32 %v1086, %v2466
    %v2799 = vmul.f32 %v1090, %v2465
    %v2800 = vmul.f32 %v1090, %v2466
    %v2801 = vmul.f32 %v1094, %v2465
    %v2802 = vmul.f32 %v1094, %v2466
    %v2803 = vmul.f32 %v1098, %v2465
    %v2804 = vmul.f32 %v1098, %v2466
    %v2805 = vmul.f32 %v1102, %v2465
    %v2806 = vmul.f32 %v1102, %v2466
    %v2807 = vmul.f32 %v1106, %v2465
    %v2808 = vmul.f32 %v1106, %v2466
    %v2809 = vmul.f32 %v1110, %v2465
    %v2810 = vmul.f32 %v1110, %v2466
    %v2811 = vmul.f32 %v1114, %v2465
    %v2812 = vmul.f32 %v1114, %v2466
    %v2813 = vmul.f32 %v1118, %v2465
    %v2814 = vmul.f32 %v1118, %v2466
    %v2815 = vmul.f32 %v1122, %v2465
    %v2816 = vmul.f32 %v1122, %v2466
    %v2817 = vmul.f32 %v1126, %v2465
    %v2818 = vmul.f32 %v1126, %v2466
    %v2819 = vmul.f32 %v1130, %v2465
    %v2820 = vmul.f32 %v1130, %v2466
    %v2821 = vmul.f32 %v1134, %v2465
    %v2822 = vmul.f32 %v1134, %v2466
    %v2823 = vadd.f32 %v2759, %v2791
    %v2824 = vadd.f32 %v2760, %v2792
    %v2825 = vadd.f32 %v2761, %v2793
    %v2826 = vadd.f32 %v2762, %v2794
    %v2827 = vadd.f32 %v2763, %v2795
    %v2828 = vadd.f32 %v2764, %v2796
    %v2829 = vadd.f32 %v2765, %v2797
    %v2830 = vadd.f32 %v2766, %v2798
    %v2831 = vadd.f32 %v2767, %v2799
    %v2832 = vadd.f32 %v2768, %v2800
    %v2833 = vadd.f32 %v2769, %v2801
    %v2834 = vadd.f32 %v2770, %v2802
    %v2835 = vadd.f32 %v2771, %v2803
    %v2836 = vadd.f32 %v2772, %v2804
    %v2837 = vadd.f32 %v2773, %v2805
    %v2838 = vadd.f32 %v2774, %v2806
    %v2839 = vadd.f32 %v2775, %v2807
    %v2840 = vadd.f32 %v2776, %v2808
    %v2841 = vadd.f32 %v2777, %v2809
    %v2842 = vadd.f32 %v2778, %v2810
    %v2843 = vadd.f32 %v2779, %v2811
    %v2844 = vadd.f32 %v2780, %v2812
    %v2845 = vadd.f32 %v2781, %v2813
    %v2846 = vadd.f32 %v2782, %v2814
    %v2847 = vadd.f32 %v2783, %v2815
    %v2848 = vadd.f32 %v2784, %v2816
    %v2849 = vadd.f32 %v2785, %v2817
    %v2850 = vadd.f32 %v2786, %v2818
    %v2851 = vadd.f32 %v2787, %v2819
    %v2852 = vadd.f32 %v2788, %v2820
    %v2853 = vadd.f32 %v2789, %v2821
    %v2854 = vadd.f32 %v2790, %v2822
    %v2855 = vmul.f32 %v1202, %v2467
    %v2856 = vmul.f32 %v1202, %v2468
    %v2857 = vmul.f32 %v1206, %v2467
    %v2858 = vmul.f32 %v1206, %v2468
    %v2859 = vmul.f32 %v1210, %v2467
    %v2860 = vmul.f32 %v1210, %v2468
    %v2861 = vmul.f32 %v1214, %v2467
    %v2862 = vmul.f32 %v1214, %v2468
    %v2863 = vmul.f32 %v1218, %v2467
    %v2864 = vmul.f32 %v1218, %v2468
    %v2865 = vmul.f32 %v1222, %v2467
    %v2866 = vmul.f32 %v1222, %v2468
    %v2867 = vmul.f32 %v1226, %v2467
    %v2868 = vmul.f32 %v1226, %v2468
    %v2869 = vmul.f32 %v1230, %v2467
    %v2870 = vmul.f32 %v1230, %v2468
    %v2871 = vmul.f32 %v1234, %v2467
    %v2872 = vmul.f32 %v1234, %v2468
    %v2873 = vmul.f32 %v1238, %v2467
    %v2874 = vmul.f32 %v1238, %v2468
    %v2875 = vmul.f32 %v1242, %v2467
    %v2876 = vmul.f32 %v1242, %v2468
    %v2877 = vmul.f32 %v1246, %v2467
    %v2878 = vmul.f32 %v1246, %v2468
    %v2879 = vmul.f32 %v1250, %v2467
    %v2880 = vmul.f32 %v1250, %v2468
    %v2881 = vmul.f32 %v1254, %v2467
    %v2882 = vmul.f32 %v1254, %v2468
    %v2883 = vmul.f32 %v1258, %v2467
    %v2884 = vmul.f32 %v1258, %v2468
    %v2885 = vmul.f32 %v1262, %v2467
    %v2886 = vmul.f32 %v1262, %v2468
    %v2887 = vadd.f32 %v2823, %v2855
    %v2888 = vadd.f32 %v2824, %v2856
    %v2889 = vadd.f32 %v2825, %v2857
    %v2890 = vadd.f32 %v2826, %v2858
    %v2891 = vadd.f32 %v2827, %v2859
    %v2892 = vadd.f32 %v2828, %v2860
    %v2893 = vadd.f32 %v2829, %v2861
    %v2894 = vadd.f32 %v2830, %v2862
    %v2895 = vadd.f32 %v2831, %v2863
    %v2896 = vadd.f32 %v2832, %v2864
    %v2897 = vadd.f32 %v2833, %v2865
    %v2898 = vadd.f32 %v2834, %v2866
    %v2899 = vadd.f32 %v2835, %v2867
    %v2900 = vadd.f32 %v2836, %v2868
    %v2901 = vadd.f32 %v2837, %v2869
    %v2902 = vadd.f32 %v2838, %v2870
    %v2903 = vadd.f32 %v2839, %v2871
    %v2904 = vadd.f32 %v2840, %v2872
    %v2905 = vadd.f32 %v2841, %v2873
    %v2906 = vadd.f32 %v2842, %v2874
    %v2907 = vadd.f32 %v2843, %v2875
    %v2908 = vadd.f32 %v2844, %v2876
    %v2909 = vadd.f32 %v2845, %v2877
    %v2910 = vadd.f32 %v2846, %v2878
    %v2911 = vadd.f32 %v2847, %v2879
    %v2912 = vadd.f32 %v2848, %v2880
    %v2913 = vadd.f32 %v2849, %v2881
    %v2914 = vadd.f32 %v2850, %v2882
    %v2915 = vadd.f32 %v2851, %v2883
    %v2916 = vadd.f32 %v2852, %v2884
    %v2917 = vadd.f32 %v2853, %v2885
    %v2918 = vadd.f32 %v2854, %v2886
    %v2919 = vmul.f32 %v1330, %v2469
    %v2920 = vmul.f32 %v1330, %v2470
    %v2921 = vmul.f32 %v1334, %v2469
    %v2922 = vmul.f32 %v1334, %v2470
    %v2923 = vmul.f32 %v1338, %v2469
    %v2924 = vmul.f32 %v1338, %v2470
    %v2925 = vmul.f32 %v1342, %v2469
    %v2926 = vmul.f32 %v1342, %v2470
    %v2927 = vmul.f32 %v1346, %v2469
    %v2928 = vmul.f32 %v1346, %v2470
    %v2929 = vmul.f32 %v1350, %v2469
    %v2930 = vmul.f32 %v1350, %v2470
    %v2931 = vmul.f32 %v1354, %v2469
    %v2932 = vmul.f32 %v1354, %v2470
    %v2933 = vmul.f32 %v1358, %v2469
    %v2934 = vmul.f32 %v1358, %v2470
    %v2935 = vmul.f32 %v1362, %v2469
    %v2936 = vmul.f32 %v1362, %v2470
    %v2937 = vmul.f32 %v1366, %v2469
    %v2938 = vmul.f32 %v1366, %v2470
    %v2939 = vmul.f32 %v1370, %v2469
    %v2940 = vmul.f32 %v1370, %v2470
    %v2941 = vmul.f32 %v1374, %v2469
    %v2942 = vmul.f32 %v1374, %v2470
    %v2943 = vmul.f32 %v1378, %v2469
    %v2944 = vmul.f32 %v1378, %v2470
    %v2945 = vmul.f32 %v1382, %v2469
    %v2946 = vmul.f32 %v1382, %v2470
    %v2947 = vmul.f32 %v1386, %v2469
    %v2948 = vmul.f32 %v1386, %v2470
    %v2949 = vmul.f32 %v1390, %v2469
    %v2950 = vmul.f32 %v1390, %v2470
    %v2951 = vadd.f32 %v2887, %v2919
    %v2952 = vadd.f32 %v2888, %v2920
    %v2953 = vadd.f32 %v2889, %v2921
    %v2954 = vadd.f32 %v2890, %v2922
    %v2955 = vadd.f32 %v2891, %v2923
    %v2956 = vadd.f32 %v2892, %v2924
    %v2957 = vadd.f32 %v2893, %v2925
    %v2958 = vadd.f32 %v2894, %v2926
    %v2959 = vadd.f32 %v2895, %v2927
    %v2960 = vadd.f32 %v2896, %v2928
    %v2961 = vadd.f32 %v2897, %v2929
    %v2962 = vadd.f32 %v2898, %v2930
    %v2963 = vadd.f32 %v2899, %v2931
    %v2964 = vadd.f32 %v2900, %v2932
    %v2965 = vadd.f32 %v2901, %v2933
    %v2966 = vadd.f32 %v2902, %v2934
    %v2967 = vadd.f32 %v2903, %v2935
    %v2968 = vadd.f32 %v2904, %v2936
    %v2969 = vadd.f32 %v2905, %v2937
    %v2970 = vadd.f32 %v2906, %v2938
    %v2971 = vadd.f32 %v2907, %v2939
    %v2972 = vadd.f32 %v2908, %v2940
    %v2973 = vadd.f32 %v2909, %v2941
    %v2974 = vadd.f32 %v2910, %v2942
    %v2975 = vadd.f32 %v2911, %v2943
    %v2976 = vadd.f32 %v2912, %v2944
    %v2977 = vadd.f32 %v2913, %v2945
    %v2978 = vadd.f32 %v2914, %v2946
    %v2979 = vadd.f32 %v2915, %v2947
    %v2980 = vadd.f32 %v2916, %v2948
    %v2981 = vadd.f32 %v2917, %v2949
    %v2982 = vadd.f32 %v2918, %v2950
    %s2983 = scalar_lea.vmem %s2, 256
    %v2984 = vld [vmem:[%s2983] sm:$0xff]
    %v2985 = vld [vmem:[%s2983 + $0x8] sm:$0xff]
    %v2986 = vld [vmem:[%s2983 + $0x10] sm:$0xff]
    %v2987 = vld [vmem:[%s2983 + $0x18] sm:$0xff]
    %v2988 = vld [vmem:[%s2983 + $0x20] sm:$0xff]
    %v2989 = vld [vmem:[%s2983 + $0x28] sm:$0xff]
    %v2990 = vld [vmem:[%s2983 + $0x30] sm:$0xff]
    %v2991 = vld [vmem:[%s2983 + $0x38] sm:$0xff]
    %v2992 = vld [vmem:[%s2983 + $0x40] sm:$0xff]
    %v2993 = vld [vmem:[%s2983 + $0x48] sm:$0xff]
    %v2994 = vld [vmem:[%s2983 + $0x50] sm:$0xff]
    %v2995 = vld [vmem:[%s2983 + $0x58] sm:$0xff]
    %v2996 = vld [vmem:[%s2983 + $0x60] sm:$0xff]
    %v2997 = vld [vmem:[%s2983 + $0x68] sm:$0xff]
    %v2998 = vld [vmem:[%s2983 + $0x70] sm:$0xff]
    %v2999 = vld [vmem:[%s2983 + $0x78] sm:$0xff]
    %v3000 = vld [vmem:[%s2983 + $0x80] sm:$0xff]
    %v3001 = vld [vmem:[%s2983 + $0x88] sm:$0xff]
    %v3002 = vld [vmem:[%s2983 + $0x90] sm:$0xff]
    %v3003 = vld [vmem:[%s2983 + $0x98] sm:$0xff]
    %v3004 = vld [vmem:[%s2983 + $0xa0] sm:$0xff]
    %v3005 = vld [vmem:[%s2983 + $0xa8] sm:$0xff]
    %v3006 = vld [vmem:[%s2983 + $0xb0] sm:$0xff]
    %v3007 = vld [vmem:[%s2983 + $0xb8] sm:$0xff]
    %v3008 = vld [vmem:[%s2983 + $0xc0] sm:$0xff]
    %v3009 = vld [vmem:[%s2983 + $0xc8] sm:$0xff]
    %v3010 = vld [vmem:[%s2983 + $0xd0] sm:$0xff]
    %v3011 = vld [vmem:[%s2983 + $0xd8] sm:$0xff]
    %v3012 = vld [vmem:[%s2983 + $0xe0] sm:$0xff]
    %v3013 = vld [vmem:[%s2983 + $0xe8] sm:$0xff]
    %v3014 = vld [vmem:[%s2983 + $0xf0] sm:$0xff]
    %v3015 = vld [vmem:[%s2983 + $0xf8] sm:$0xff]
    %v3016 = vpack.c.bf16 %v2985, %v2984
    %v3017 = vpack.c.bf16 %v2987, %v2986
    %v3018 = vpack.c.bf16 %v2989, %v2988
    %v3019 = vpack.c.bf16 %v2991, %v2990
    %v3020 = vpack.c.bf16 %v2993, %v2992
    %v3021 = vpack.c.bf16 %v2995, %v2994
    %v3022 = vpack.c.bf16 %v2997, %v2996
    %v3023 = vpack.c.bf16 %v2999, %v2998
    %v3024 = vpack.c.bf16 %v3001, %v3000
    %v3025 = vpack.c.bf16 %v3003, %v3002
    %v3026 = vpack.c.bf16 %v3005, %v3004
    %v3027 = vpack.c.bf16 %v3007, %v3006
    %v3028 = vpack.c.bf16 %v3009, %v3008
    %v3029 = vpack.c.bf16 %v3011, %v3010
    %v3030 = vpack.c.bf16 %v3013, %v3012
    %v3031 = vpack.c.bf16 %v3015, %v3014
    %v3032 = vpack.c.bf16 %v2952, %v2951
    %v3033 = vpack.c.bf16 %v2954, %v2953
    %v3034 = vpack.c.bf16 %v2956, %v2955
    %v3035 = vpack.c.bf16 %v2958, %v2957
    %v3036 = vpack.c.bf16 %v2960, %v2959
    %v3037 = vpack.c.bf16 %v2962, %v2961
    %v3038 = vpack.c.bf16 %v2964, %v2963
    %v3039 = vpack.c.bf16 %v2966, %v2965
    %v3040 = vpack.c.bf16 %v2968, %v2967
    %v3041 = vpack.c.bf16 %v2970, %v2969
    %v3042 = vpack.c.bf16 %v2972, %v2971
    %v3043 = vpack.c.bf16 %v2974, %v2973
    %v3044 = vpack.c.bf16 %v2976, %v2975
    %v3045 = vpack.c.bf16 %v2978, %v2977
    %v3046 = vpack.c.bf16 %v2980, %v2979
    %v3047 = vpack.c.bf16 %v2982, %v2981
    %v3049 = vsel %vm1520, %v3016, 0
    %3051 = vmatprep.subr.bf16.mxu0 0
    %3052 = vmatpush1.bf16.msra.mxu0 %v3032
    %3053 = vmatprep.subr.bf16.mxu0 0
    %3054 = vmatpush1.bf16.msra.mxu0 0
    %3055 = vmatprep.subr.bf16.mxu0 0
    %3056 = vmatpush1.bf16.msra.mxu0 0
    %3057 = vmatprep.subr.bf16.mxu0 0
    %3058 = vmatpush1.bf16.msra.mxu0 0
    %3059 = vmatprep.subr.bf16.mxu0 0
    %3060 = vmatpush1.bf16.msra.mxu0 0
    %3061 = vmatprep.subr.bf16.mxu0 0
    %3062 = vmatpush1.bf16.msra.mxu0 0
    %3063 = vmatprep.subr.bf16.mxu0 0
    %3064 = vmatpush1.bf16.msra.mxu0 0
    %3065 = vmatprep.subr.bf16.mxu0 0
    %3066 = vmatpush1.bf16.msra.mxu0 0
    %3067 = vmatprep.subr.bf16.mxu0 0
    %3068 = vmatpush1.bf16.msra.mxu0 0
    %3069 = vmatprep.subr.bf16.mxu0 0
    %3070 = vmatpush1.bf16.msra.mxu0 0
    %3071 = vmatprep.subr.bf16.mxu0 0
    %3072 = vmatpush1.bf16.msra.mxu0 0
    %3073 = vmatprep.subr.bf16.mxu0 0
    %3074 = vmatpush1.bf16.msra.mxu0 0
    %3075 = vmatprep.subr.bf16.mxu0 0
    %3076 = vmatpush1.bf16.msra.mxu0 0
    %3077 = vmatprep.subr.bf16.mxu0 0
    %3078 = vmatpush1.bf16.msra.mxu0 0
    %3079 = vmatprep.subr.bf16.mxu0 0
    %3080 = vmatpush1.bf16.msra.mxu0 0
    %3081 = vmatprep.subr.bf16.mxu0 0
    %3082 = vmatpush1.bf16.msra.mxu0 0
    %3083 = vmatprep.mubr.bf16.mxu0 0
    %3084 = vmatmul.mubr.bf16.gmra.mrb[0].mxu0 %v3049
    %v3085 = vpop.f32.mrb[0].mxu0
    %v3086 = vadd.f32 0.0, %v3085
    %v3087 = vpop.f32.mrb[0].mxu0
    %v3088 = vpop.f32.mrb[0].mxu0
    %v3089 = vadd.f32 0.0, %v3088
    %v3090 = vpop.f32.mrb[0].mxu0
    %3091 = vdwg.mxu0
    %v3093 = vsel %vm1520, %v3017, 0
    %3095 = vmatprep.subr.bf16.mxu0 0
    %3096 = vmatpush1.bf16.msra.mxu0 %v3033
    %3097 = vmatprep.subr.bf16.mxu0 0
    %3098 = vmatpush1.bf16.msra.mxu0 0
    %3099 = vmatprep.subr.bf16.mxu0 0
    %3100 = vmatpush1.bf16.msra.mxu0 0
    %3101 = vmatprep.subr.bf16.mxu0 0
    %3102 = vmatpush1.bf16.msra.mxu0 0
    %3103 = vmatprep.subr.bf16.mxu0 0
    %3104 = vmatpush1.bf16.msra.mxu0 0
    %3105 = vmatprep.subr.bf16.mxu0 0
    %3106 = vmatpush1.bf16.msra.mxu0 0
    %3107 = vmatprep.subr.bf16.mxu0 0
    %3108 = vmatpush1.bf16.msra.mxu0 0
    %3109 = vmatprep.subr.bf16.mxu0 0
    %3110 = vmatpush1.bf16.msra.mxu0 0
    %3111 = vmatprep.subr.bf16.mxu0 0
    %3112 = vmatpush1.bf16.msra.mxu0 0
    %3113 = vmatprep.subr.bf16.mxu0 0
    %3114 = vmatpush1.bf16.msra.mxu0 0
    %3115 = vmatprep.subr.bf16.mxu0 0
    %3116 = vmatpush1.bf16.msra.mxu0 0
    %3117 = vmatprep.subr.bf16.mxu0 0
    %3118 = vmatpush1.bf16.msra.mxu0 0
    %3119 = vmatprep.subr.bf16.mxu0 0
    %3120 = vmatpush1.bf16.msra.mxu0 0
    %3121 = vmatprep.subr.bf16.mxu0 0
    %3122 = vmatpush1.bf16.msra.mxu0 0
    %3123 = vmatprep.subr.bf16.mxu0 0
    %3124 = vmatpush1.bf16.msra.mxu0 0
    %3125 = vmatprep.subr.bf16.mxu0 0
    %3126 = vmatpush1.bf16.msra.mxu0 0
    %3127 = vmatprep.mubr.bf16.mxu0 0
    %3128 = vmatmul.mubr.bf16.gmra.mrb[0].mxu0 %v3093
    %v3129 = vpop.f32.mrb[0].mxu0
    %v3130 = vadd.f32 0.0, %v3129
    %v3131 = vpop.f32.mrb[0].mxu0
    %v3132 = vpop.f32.mrb[0].mxu0
    %v3133 = vadd.f32 0.0, %v3132
    %v3134 = vpop.f32.mrb[0].mxu0
    %3135 = vdwg.mxu0
    %v3137 = vsel %vm1520, %v3018, 0
    %3139 = vmatprep.subr.bf16.mxu0 0
    %3140 = vmatpush1.bf16.msra.mxu0 %v3034
    %3141 = vmatprep.subr.bf16.mxu0 0
    %3142 = vmatpush1.bf16.msra.mxu0 0
    %3143 = vmatprep.subr.bf16.mxu0 0
    %3144 = vmatpush1.bf16.msra.mxu0 0
    %3145 = vmatprep.subr.bf16.mxu0 0
    %3146 = vmatpush1.bf16.msra.mxu0 0
    %3147 = vmatprep.subr.bf16.mxu0 0
    %3148 = vmatpush1.bf16.msra.mxu0 0
    %3149 = vmatprep.subr.bf16.mxu0 0
    %3150 = vmatpush1.bf16.msra.mxu0 0
    %3151 = vmatprep.subr.bf16.mxu0 0
    %3152 = vmatpush1.bf16.msra.mxu0 0
    %3153 = vmatprep.subr.bf16.mxu0 0
    %3154 = vmatpush1.bf16.msra.mxu0 0
    %3155 = vmatprep.subr.bf16.mxu0 0
    %3156 = vmatpush1.bf16.msra.mxu0 0
    %3157 = vmatprep.subr.bf16.mxu0 0
    %3158 = vmatpush1.bf16.msra.mxu0 0
    %3159 = vmatprep.subr.bf16.mxu0 0
    %3160 = vmatpush1.bf16.msra.mxu0 0
    %3161 = vmatprep.subr.bf16.mxu0 0
    %3162 = vmatpush1.bf16.msra.mxu0 0
    %3163 = vmatprep.subr.bf16.mxu0 0
    %3164 = vmatpush1.bf16.msra.mxu0 0
    %3165 = vmatprep.subr.bf16.mxu0 0
    %3166 = vmatpush1.bf16.msra.mxu0 0
    %3167 = vmatprep.subr.bf16.mxu0 0
    %3168 = vmatpush1.bf16.msra.mxu0 0
    %3169 = vmatprep.subr.bf16.mxu0 0
    %3170 = vmatpush1.bf16.msra.mxu0 0
    %3171 = vmatprep.mubr.bf16.mxu0 0
    %3172 = vmatmul.mubr.bf16.gmra.mrb[0].mxu0 %v3137
    %v3173 = vpop.f32.mrb[0].mxu0
    %v3174 = vadd.f32 0.0, %v3173
    %v3175 = vpop.f32.mrb[0].mxu0
    %v3176 = vpop.f32.mrb[0].mxu0
    %v3177 = vadd.f32 0.0, %v3176
    %v3178 = vpop.f32.mrb[0].mxu0
    %3179 = vdwg.mxu0
    %v3181 = vsel %vm1520, %v3019, 0
    %3183 = vmatprep.subr.bf16.mxu0 0
    %3184 = vmatpush1.bf16.msra.mxu0 %v3035
    %3185 = vmatprep.subr.bf16.mxu0 0
    %3186 = vmatpush1.bf16.msra.mxu0 0
    %3187 = vmatprep.subr.bf16.mxu0 0
    %3188 = vmatpush1.bf16.msra.mxu0 0
    %3189 = vmatprep.subr.bf16.mxu0 0
    %3190 = vmatpush1.bf16.msra.mxu0 0
    %3191 = vmatprep.subr.bf16.mxu0 0
    %3192 = vmatpush1.bf16.msra.mxu0 0
    %3193 = vmatprep.subr.bf16.mxu0 0
    %3194 = vmatpush1.bf16.msra.mxu0 0
    %3195 = vmatprep.subr.bf16.mxu0 0
    %3196 = vmatpush1.bf16.msra.mxu0 0
    %3197 = vmatprep.subr.bf16.mxu0 0
    %3198 = vmatpush1.bf16.msra.mxu0 0
    %3199 = vmatprep.subr.bf16.mxu0 0
    %3200 = vmatpush1.bf16.msra.mxu0 0
    %3201 = vmatprep.subr.bf16.mxu0 0
    %3202 = vmatpush1.bf16.msra.mxu0 0
    %3203 = vmatprep.subr.bf16.mxu0 0
    %3204 = vmatpush1.bf16.msra.mxu0 0
    %3205 = vmatprep.subr.bf16.mxu0 0
    %3206 = vmatpush1.bf16.msra.mxu0 0
    %3207 = vmatprep.subr.bf16.mxu0 0
    %3208 = vmatpush1.bf16.msra.mxu0 0
    %3209 = vmatprep.subr.bf16.mxu0 0
    %3210 = vmatpush1.bf16.msra.mxu0 0
    %3211 = vmatprep.subr.bf16.mxu0 0
    %3212 = vmatpush1.bf16.msra.mxu0 0
    %3213 = vmatprep.subr.bf16.mxu0 0
    %3214 = vmatpush1.bf16.msra.mxu0 0
    %3215 = vmatprep.mubr.bf16.mxu0 0
    %3216 = vmatmul.mubr.bf16.gmra.mrb[0].mxu0 %v3181
    %v3217 = vpop.f32.mrb[0].mxu0
    %v3218 = vadd.f32 0.0, %v3217
    %v3219 = vpop.f32.mrb[0].mxu0
    %v3220 = vpop.f32.mrb[0].mxu0
    %v3221 = vadd.f32 0.0, %v3220
    %v3222 = vpop.f32.mrb[0].mxu0
    %3223 = vdwg.mxu0
    %v3225 = vsel %vm1520, %v3020, 0
    %3227 = vmatprep.subr.bf16.mxu0 0
    %3228 = vmatpush1.bf16.msra.mxu0 %v3036
    %3229 = vmatprep.subr.bf16.mxu0 0
    %3230 = vmatpush1.bf16.msra.mxu0 0
    %3231 = vmatprep.subr.bf16.mxu0 0
    %3232 = vmatpush1.bf16.msra.mxu0 0
    %3233 = vmatprep.subr.bf16.mxu0 0
    %3234 = vmatpush1.bf16.msra.mxu0 0
    %3235 = vmatprep.subr.bf16.mxu0 0
    %3236 = vmatpush1.bf16.msra.mxu0 0
    %3237 = vmatprep.subr.bf16.mxu0 0
    %3238 = vmatpush1.bf16.msra.mxu0 0
    %3239 = vmatprep.subr.bf16.mxu0 0
    %3240 = vmatpush1.bf16.msra.mxu0 0
    %3241 = vmatprep.subr.bf16.mxu0 0
    %3242 = vmatpush1.bf16.msra.mxu0 0
    %3243 = vmatprep.subr.bf16.mxu0 0
    %3244 = vmatpush1.bf16.msra.mxu0 0
    %3245 = vmatprep.subr.bf16.mxu0 0
    %3246 = vmatpush1.bf16.msra.mxu0 0
    %3247 = vmatprep.subr.bf16.mxu0 0
    %3248 = vmatpush1.bf16.msra.mxu0 0
    %3249 = vmatprep.subr.bf16.mxu0 0
    %3250 = vmatpush1.bf16.msra.mxu0 0
    %3251 = vmatprep.subr.bf16.mxu0 0
    %3252 = vmatpush1.bf16.msra.mxu0 0
    %3253 = vmatprep.subr.bf16.mxu0 0
    %3254 = vmatpush1.bf16.msra.mxu0 0
    %3255 = vmatprep.subr.bf16.mxu0 0
    %3256 = vmatpush1.bf16.msra.mxu0 0
    %3257 = vmatprep.subr.bf16.mxu0 0
    %3258 = vmatpush1.bf16.msra.mxu0 0
    %3259 = vmatprep.mubr.bf16.mxu0 0
    %3260 = vmatmul.mubr.bf16.gmra.mrb[0].mxu0 %v3225
    %v3261 = vpop.f32.mrb[0].mxu0
    %v3262 = vadd.f32 0.0, %v3261
    %v3263 = vpop.f32.mrb[0].mxu0
    %v3264 = vpop.f32.mrb[0].mxu0
    %v3265 = vadd.f32 0.0, %v3264
    %v3266 = vpop.f32.mrb[0].mxu0
    %3267 = vdwg.mxu0
    %v3269 = vsel %vm1520, %v3021, 0
    %3271 = vmatprep.subr.bf16.mxu0 0
    %3272 = vmatpush1.bf16.msra.mxu0 %v3037
    %3273 = vmatprep.subr.bf16.mxu0 0
    %3274 = vmatpush1.bf16.msra.mxu0 0
    %3275 = vmatprep.subr.bf16.mxu0 0
    %3276 = vmatpush1.bf16.msra.mxu0 0
    %3277 = vmatprep.subr.bf16.mxu0 0
    %3278 = vmatpush1.bf16.msra.mxu0 0
    %3279 = vmatprep.subr.bf16.mxu0 0
    %3280 = vmatpush1.bf16.msra.mxu0 0
    %3281 = vmatprep.subr.bf16.mxu0 0
    %3282 = vmatpush1.bf16.msra.mxu0 0
    %3283 = vmatprep.subr.bf16.mxu0 0
    %3284 = vmatpush1.bf16.msra.mxu0 0
    %3285 = vmatprep.subr.bf16.mxu0 0
    %3286 = vmatpush1.bf16.msra.mxu0 0
    %3287 = vmatprep.subr.bf16.mxu0 0
    %3288 = vmatpush1.bf16.msra.mxu0 0
    %3289 = vmatprep.subr.bf16.mxu0 0
    %3290 = vmatpush1.bf16.msra.mxu0 0
    %3291 = vmatprep.subr.bf16.mxu0 0
    %3292 = vmatpush1.bf16.msra.mxu0 0
    %3293 = vmatprep.subr.bf16.mxu0 0
    %3294 = vmatpush1.bf16.msra.mxu0 0
    %3295 = vmatprep.subr.bf16.mxu0 0
    %3296 = vmatpush1.bf16.msra.mxu0 0
    %3297 = vmatprep.subr.bf16.mxu0 0
    %3298 = vmatpush1.bf16.msra.mxu0 0
    %3299 = vmatprep.subr.bf16.mxu0 0
    %3300 = vmatpush1.bf16.msra.mxu0 0
    %3301 = vmatprep.subr.bf16.mxu0 0
    %3302 = vmatpush1.bf16.msra.mxu0 0
    %3303 = vmatprep.mubr.bf16.mxu0 0
    %3304 = vmatmul.mubr.bf16.gmra.mrb[0].mxu0 %v3269
    %v3305 = vpop.f32.mrb[0].mxu0
    %v3306 = vadd.f32 0.0, %v3305
    %v3307 = vpop.f32.mrb[0].mxu0
    %v3308 = vpop.f32.mrb[0].mxu0
    %v3309 = vadd.f32 0.0, %v3308
    %v3310 = vpop.f32.mrb[0].mxu0
    %3311 = vdwg.mxu0
    %v3313 = vsel %vm1520, %v3022, 0
    %3315 = vmatprep.subr.bf16.mxu0 0
    %3316 = vmatpush1.bf16.msra.mxu0 %v3038
    %3317 = vmatprep.subr.bf16.mxu0 0
    %3318 = vmatpush1.bf16.msra.mxu0 0
    %3319 = vmatprep.subr.bf16.mxu0 0
    %3320 = vmatpush1.bf16.msra.mxu0 0
    %3321 = vmatprep.subr.bf16.mxu0 0
    %3322 = vmatpush1.bf16.msra.mxu0 0
    %3323 = vmatprep.subr.bf16.mxu0 0
    %3324 = vmatpush1.bf16.msra.mxu0 0
    %3325 = vmatprep.subr.bf16.mxu0 0
    %3326 = vmatpush1.bf16.msra.mxu0 0
    %3327 = vmatprep.subr.bf16.mxu0 0
    %3328 = vmatpush1.bf16.msra.mxu0 0
    %3329 = vmatprep.subr.bf16.mxu0 0
    %3330 = vmatpush1.bf16.msra.mxu0 0
    %3331 = vmatprep.subr.bf16.mxu0 0
    %3332 = vmatpush1.bf16.msra.mxu0 0
    %3333 = vmatprep.subr.bf16.mxu0 0
    %3334 = vmatpush1.bf16.msra.mxu0 0
    %3335 = vmatprep.subr.bf16.mxu0 0
    %3336 = vmatpush1.bf16.msra.mxu0 0
    %3337 = vmatprep.subr.bf16.mxu0 0
    %3338 = vmatpush1.bf16.msra.mxu0 0
    %3339 = vmatprep.subr.bf16.mxu0 0
    %3340 = vmatpush1.bf16.msra.mxu0 0
    %3341 = vmatprep.subr.bf16.mxu0 0
    %3342 = vmatpush1.bf16.msra.mxu0 0
    %3343 = vmatprep.subr.bf16.mxu0 0
    %3344 = vmatpush1.bf16.msra.mxu0 0
    %3345 = vmatprep.subr.bf16.mxu0 0
    %3346 = vmatpush1.bf16.msra.mxu0 0
    %3347 = vmatprep.mubr.bf16.mxu0 0
    %3348 = vmatmul.mubr.bf16.gmra.mrb[0].mxu0 %v3313
    %v3349 = vpop.f32.mrb[0].mxu0
    %v3350 = vadd.f32 0.0, %v3349
    %v3351 = vpop.f32.mrb[0].mxu0
    %v3352 = vpop.f32.mrb[0].mxu0
    %v3353 = vadd.f32 0.0, %v3352
    %v3354 = vpop.f32.mrb[0].mxu0
    %3355 = vdwg.mxu0
    %v3357 = vsel %vm1520, %v3023, 0
    %3359 = vmatprep.subr.bf16.mxu0 0
    %3360 = vmatpush1.bf16.msra.mxu0 %v3039
    %3361 = vmatprep.subr.bf16.mxu0 0
    %3362 = vmatpush1.bf16.msra.mxu0 0
    %3363 = vmatprep.subr.bf16.mxu0 0
    %3364 = vmatpush1.bf16.msra.mxu0 0
    %3365 = vmatprep.subr.bf16.mxu0 0
    %3366 = vmatpush1.bf16.msra.mxu0 0
    %3367 = vmatprep.subr.bf16.mxu0 0
    %3368 = vmatpush1.bf16.msra.mxu0 0
    %3369 = vmatprep.subr.bf16.mxu0 0
    %3370 = vmatpush1.bf16.msra.mxu0 0
    %3371 = vmatprep.subr.bf16.mxu0 0
    %3372 = vmatpush1.bf16.msra.mxu0 0
    %3373 = vmatprep.subr.bf16.mxu0 0
    %3374 = vmatpush1.bf16.msra.mxu0 0
    %3375 = vmatprep.subr.bf16.mxu0 0
    %3376 = vmatpush1.bf16.msra.mxu0 0
    %3377 = vmatprep.subr.bf16.mxu0 0
    %3378 = vmatpush1.bf16.msra.mxu0 0
    %3379 = vmatprep.subr.bf16.mxu0 0
    %3380 = vmatpush1.bf16.msra.mxu0 0
    %3381 = vmatprep.subr.bf16.mxu0 0
    %3382 = vmatpush1.bf16.msra.mxu0 0
    %3383 = vmatprep.subr.bf16.mxu0 0
    %3384 = vmatpush1.bf16.msra.mxu0 0
    %3385 = vmatprep.subr.bf16.mxu0 0
    %3386 = vmatpush1.bf16.msra.mxu0 0
    %3387 = vmatprep.subr.bf16.mxu0 0
    %3388 = vmatpush1.bf16.msra.mxu0 0
    %3389 = vmatprep.subr.bf16.mxu0 0
    %3390 = vmatpush1.bf16.msra.mxu0 0
    %3391 = vmatprep.mubr.bf16.mxu0 0
    %3392 = vmatmul.mubr.bf16.gmra.mrb[0].mxu0 %v3357
    %v3393 = vpop.f32.mrb[0].mxu0
    %v3394 = vadd.f32 0.0, %v3393
    %v3395 = vpop.f32.mrb[0].mxu0
    %v3396 = vpop.f32.mrb[0].mxu0
    %v3397 = vadd.f32 0.0, %v3396
    %v3398 = vpop.f32.mrb[0].mxu0
    %3399 = vdwg.mxu0
    %v3401 = vsel %vm1520, %v3024, 0
    %3403 = vmatprep.subr.bf16.mxu0 0
    %3404 = vmatpush1.bf16.msra.mxu0 %v3040
    %3405 = vmatprep.subr.bf16.mxu0 0
    %3406 = vmatpush1.bf16.msra.mxu0 0
    %3407 = vmatprep.subr.bf16.mxu0 0
    %3408 = vmatpush1.bf16.msra.mxu0 0
    %3409 = vmatprep.subr.bf16.mxu0 0
    %3410 = vmatpush1.bf16.msra.mxu0 0
    %3411 = vmatprep.subr.bf16.mxu0 0
    %3412 = vmatpush1.bf16.msra.mxu0 0
    %3413 = vmatprep.subr.bf16.mxu0 0
    %3414 = vmatpush1.bf16.msra.mxu0 0
    %3415 = vmatprep.subr.bf16.mxu0 0
    %3416 = vmatpush1.bf16.msra.mxu0 0
    %3417 = vmatprep.subr.bf16.mxu0 0
    %3418 = vmatpush1.bf16.msra.mxu0 0
    %3419 = vmatprep.subr.bf16.mxu0 0
    %3420 = vmatpush1.bf16.msra.mxu0 0
    %3421 = vmatprep.subr.bf16.mxu0 0
    %3422 = vmatpush1.bf16.msra.mxu0 0
    %3423 = vmatprep.subr.bf16.mxu0 0
    %3424 = vmatpush1.bf16.msra.mxu0 0
    %3425 = vmatprep.subr.bf16.mxu0 0
    %3426 = vmatpush1.bf16.msra.mxu0 0
    %3427 = vmatprep.subr.bf16.mxu0 0
    %3428 = vmatpush1.bf16.msra.mxu0 0
    %3429 = vmatprep.subr.bf16.mxu0 0
    %3430 = vmatpush1.bf16.msra.mxu0 0
    %3431 = vmatprep.subr.bf16.mxu0 0
    %3432 = vmatpush1.bf16.msra.mxu0 0
    %3433 = vmatprep.subr.bf16.mxu0 0
    %3434 = vmatpush1.bf16.msra.mxu0 0
    %3435 = vmatprep.mubr.bf16.mxu0 0
    %3436 = vmatmul.mubr.bf16.gmra.mrb[0].mxu0 %v3401
    %v3437 = vpop.f32.mrb[0].mxu0
    %v3438 = vadd.f32 0.0, %v3437
    %v3439 = vpop.f32.mrb[0].mxu0
    %v3440 = vpop.f32.mrb[0].mxu0
    %v3441 = vadd.f32 0.0, %v3440
    %v3442 = vpop.f32.mrb[0].mxu0
    %3443 = vdwg.mxu0
    %v3445 = vsel %vm1520, %v3025, 0
    %3447 = vmatprep.subr.bf16.mxu0 0
    %3448 = vmatpush1.bf16.msra.mxu0 %v3041
    %3449 = vmatprep.subr.bf16.mxu0 0
    %3450 = vmatpush1.bf16.msra.mxu0 0
    %3451 = vmatprep.subr.bf16.mxu0 0
    %3452 = vmatpush1.bf16.msra.mxu0 0
    %3453 = vmatprep.subr.bf16.mxu0 0
    %3454 = vmatpush1.bf16.msra.mxu0 0
    %3455 = vmatprep.subr.bf16.mxu0 0
    %3456 = vmatpush1.bf16.msra.mxu0 0
    %3457 = vmatprep.subr.bf16.mxu0 0
    %3458 = vmatpush1.bf16.msra.mxu0 0
    %3459 = vmatprep.subr.bf16.mxu0 0
    %3460 = vmatpush1.bf16.msra.mxu0 0
    %3461 = vmatprep.subr.bf16.mxu0 0
    %3462 = vmatpush1.bf16.msra.mxu0 0
    %3463 = vmatprep.subr.bf16.mxu0 0
    %3464 = vmatpush1.bf16.msra.mxu0 0
    %3465 = vmatprep.subr.bf16.mxu0 0
    %3466 = vmatpush1.bf16.msra.mxu0 0
    %3467 = vmatprep.subr.bf16.mxu0 0
    %3468 = vmatpush1.bf16.msra.mxu0 0
    %3469 = vmatprep.subr.bf16.mxu0 0
    %3470 = vmatpush1.bf16.msra.mxu0 0
    %3471 = vmatprep.subr.bf16.mxu0 0
    %3472 = vmatpush1.bf16.msra.mxu0 0
    %3473 = vmatprep.subr.bf16.mxu0 0
    %3474 = vmatpush1.bf16.msra.mxu0 0
    %3475 = vmatprep.subr.bf16.mxu0 0
    %3476 = vmatpush1.bf16.msra.mxu0 0
    %3477 = vmatprep.subr.bf16.mxu0 0
    %3478 = vmatpush1.bf16.msra.mxu0 0
    %3479 = vmatprep.mubr.bf16.mxu0 0
    %3480 = vmatmul.mubr.bf16.gmra.mrb[0].mxu0 %v3445
    %v3481 = vpop.f32.mrb[0].mxu0
    %v3482 = vadd.f32 0.0, %v3481
    %v3483 = vpop.f32.mrb[0].mxu0
    %v3484 = vpop.f32.mrb[0].mxu0
    %v3485 = vadd.f32 0.0, %v3484
    %v3486 = vpop.f32.mrb[0].mxu0
    %3487 = vdwg.mxu0
    %v3489 = vsel %vm1520, %v3026, 0
    %3491 = vmatprep.subr.bf16.mxu0 0
    %3492 = vmatpush1.bf16.msra.mxu0 %v3042
    %3493 = vmatprep.subr.bf16.mxu0 0
    %3494 = vmatpush1.bf16.msra.mxu0 0
    %3495 = vmatprep.subr.bf16.mxu0 0
    %3496 = vmatpush1.bf16.msra.mxu0 0
    %3497 = vmatprep.subr.bf16.mxu0 0
    %3498 = vmatpush1.bf16.msra.mxu0 0
    %3499 = vmatprep.subr.bf16.mxu0 0
    %3500 = vmatpush1.bf16.msra.mxu0 0
    %3501 = vmatprep.subr.bf16.mxu0 0
    %3502 = vmatpush1.bf16.msra.mxu0 0
    %3503 = vmatprep.subr.bf16.mxu0 0
    %3504 = vmatpush1.bf16.msra.mxu0 0
    %3505 = vmatprep.subr.bf16.mxu0 0
    %3506 = vmatpush1.bf16.msra.mxu0 0
    %3507 = vmatprep.subr.bf16.mxu0 0
    %3508 = vmatpush1.bf16.msra.mxu0 0
    %3509 = vmatprep.subr.bf16.mxu0 0
    %3510 = vmatpush1.bf16.msra.mxu0 0
    %3511 = vmatprep.subr.bf16.mxu0 0
    %3512 = vmatpush1.bf16.msra.mxu0 0
    %3513 = vmatprep.subr.bf16.mxu0 0
    %3514 = vmatpush1.bf16.msra.mxu0 0
    %3515 = vmatprep.subr.bf16.mxu0 0
    %3516 = vmatpush1.bf16.msra.mxu0 0
    %3517 = vmatprep.subr.bf16.mxu0 0
    %3518 = vmatpush1.bf16.msra.mxu0 0
    %3519 = vmatprep.subr.bf16.mxu0 0
    %3520 = vmatpush1.bf16.msra.mxu0 0
    %3521 = vmatprep.subr.bf16.mxu0 0
    %3522 = vmatpush1.bf16.msra.mxu0 0
    %3523 = vmatprep.mubr.bf16.mxu0 0
    %3524 = vmatmul.mubr.bf16.gmra.mrb[0].mxu0 %v3489
    %v3525 = vpop.f32.mrb[0].mxu0
    %v3526 = vadd.f32 0.0, %v3525
    %v3527 = vpop.f32.mrb[0].mxu0
    %v3528 = vpop.f32.mrb[0].mxu0
    %v3529 = vadd.f32 0.0, %v3528
    %v3530 = vpop.f32.mrb[0].mxu0
    %3531 = vdwg.mxu0
    %v3533 = vsel %vm1520, %v3027, 0
    %3535 = vmatprep.subr.bf16.mxu0 0
    %3536 = vmatpush1.bf16.msra.mxu0 %v3043
    %3537 = vmatprep.subr.bf16.mxu0 0
    %3538 = vmatpush1.bf16.msra.mxu0 0
    %3539 = vmatprep.subr.bf16.mxu0 0
    %3540 = vmatpush1.bf16.msra.mxu0 0
    %3541 = vmatprep.subr.bf16.mxu0 0
    %3542 = vmatpush1.bf16.msra.mxu0 0
    %3543 = vmatprep.subr.bf16.mxu0 0
    %3544 = vmatpush1.bf16.msra.mxu0 0
    %3545 = vmatprep.subr.bf16.mxu0 0
    %3546 = vmatpush1.bf16.msra.mxu0 0
    %3547 = vmatprep.subr.bf16.mxu0 0
    %3548 = vmatpush1.bf16.msra.mxu0 0
    %3549 = vmatprep.subr.bf16.mxu0 0
    %3550 = vmatpush1.bf16.msra.mxu0 0
    %3551 = vmatprep.subr.bf16.mxu0 0
    %3552 = vmatpush1.bf16.msra.mxu0 0
    %3553 = vmatprep.subr.bf16.mxu0 0
    %3554 = vmatpush1.bf16.msra.mxu0 0
    %3555 = vmatprep.subr.bf16.mxu0 0
    %3556 = vmatpush1.bf16.msra.mxu0 0
    %3557 = vmatprep.subr.bf16.mxu0 0
    %3558 = vmatpush1.bf16.msra.mxu0 0
    %3559 = vmatprep.subr.bf16.mxu0 0
    %3560 = vmatpush1.bf16.msra.mxu0 0
    %3561 = vmatprep.subr.bf16.mxu0 0
    %3562 = vmatpush1.bf16.msra.mxu0 0
    %3563 = vmatprep.subr.bf16.mxu0 0
    %3564 = vmatpush1.bf16.msra.mxu0 0
    %3565 = vmatprep.subr.bf16.mxu0 0
    %3566 = vmatpush1.bf16.msra.mxu0 0
    %3567 = vmatprep.mubr.bf16.mxu0 0
    %3568 = vmatmul.mubr.bf16.gmra.mrb[0].mxu0 %v3533
    %v3569 = vpop.f32.mrb[0].mxu0
    %v3570 = vadd.f32 0.0, %v3569
    %v3571 = vpop.f32.mrb[0].mxu0
    %v3572 = vpop.f32.mrb[0].mxu0
    %v3573 = vadd.f32 0.0, %v3572
    %v3574 = vpop.f32.mrb[0].mxu0
    %3575 = vdwg.mxu0
    %v3577 = vsel %vm1520, %v3028, 0
    %3579 = vmatprep.subr.bf16.mxu0 0
    %3580 = vmatpush1.bf16.msra.mxu0 %v3044
    %3581 = vmatprep.subr.bf16.mxu0 0
    %3582 = vmatpush1.bf16.msra.mxu0 0
    %3583 = vmatprep.subr.bf16.mxu0 0
    %3584 = vmatpush1.bf16.msra.mxu0 0
    %3585 = vmatprep.subr.bf16.mxu0 0
    %3586 = vmatpush1.bf16.msra.mxu0 0
    %3587 = vmatprep.subr.bf16.mxu0 0
    %3588 = vmatpush1.bf16.msra.mxu0 0
    %3589 = vmatprep.subr.bf16.mxu0 0
    %3590 = vmatpush1.bf16.msra.mxu0 0
    %3591 = vmatprep.subr.bf16.mxu0 0
    %3592 = vmatpush1.bf16.msra.mxu0 0
    %3593 = vmatprep.subr.bf16.mxu0 0
    %3594 = vmatpush1.bf16.msra.mxu0 0
    %3595 = vmatprep.subr.bf16.mxu0 0
    %3596 = vmatpush1.bf16.msra.mxu0 0
    %3597 = vmatprep.subr.bf16.mxu0 0
    %3598 = vmatpush1.bf16.msra.mxu0 0
    %3599 = vmatprep.subr.bf16.mxu0 0
    %3600 = vmatpush1.bf16.msra.mxu0 0
    %3601 = vmatprep.subr.bf16.mxu0 0
    %3602 = vmatpush1.bf16.msra.mxu0 0
    %3603 = vmatprep.subr.bf16.mxu0 0
    %3604 = vmatpush1.bf16.msra.mxu0 0
    %3605 = vmatprep.subr.bf16.mxu0 0
    %3606 = vmatpush1.bf16.msra.mxu0 0
    %3607 = vmatprep.subr.bf16.mxu0 0
    %3608 = vmatpush1.bf16.msra.mxu0 0
    %3609 = vmatprep.subr.bf16.mxu0 0
    %3610 = vmatpush1.bf16.msra.mxu0 0
    %3611 = vmatprep.mubr.bf16.mxu0 0
    %3612 = vmatmul.mubr.bf16.gmra.mrb[0].mxu0 %v3577
    %v3613 = vpop.f32.mrb[0].mxu0
    %v3614 = vadd.f32 0.0, %v3613
    %v3615 = vpop.f32.mrb[0].mxu0
    %v3616 = vpop.f32.mrb[0].mxu0
    %v3617 = vadd.f32 0.0, %v3616
    %v3618 = vpop.f32.mrb[0].mxu0
    %3619 = vdwg.mxu0
    %v3621 = vsel %vm1520, %v3029, 0
    %3623 = vmatprep.subr.bf16.mxu0 0
    %3624 = vmatpush1.bf16.msra.mxu0 %v3045
    %3625 = vmatprep.subr.bf16.mxu0 0
    %3626 = vmatpush1.bf16.msra.mxu0 0
    %3627 = vmatprep.subr.bf16.mxu0 0
    %3628 = vmatpush1.bf16.msra.mxu0 0
    %3629 = vmatprep.subr.bf16.mxu0 0
    %3630 = vmatpush1.bf16.msra.mxu0 0
    %3631 = vmatprep.subr.bf16.mxu0 0
    %3632 = vmatpush1.bf16.msra.mxu0 0
    %3633 = vmatprep.subr.bf16.mxu0 0
    %3634 = vmatpush1.bf16.msra.mxu0 0
    %3635 = vmatprep.subr.bf16.mxu0 0
    %3636 = vmatpush1.bf16.msra.mxu0 0
    %3637 = vmatprep.subr.bf16.mxu0 0
    %3638 = vmatpush1.bf16.msra.mxu0 0
    %3639 = vmatprep.subr.bf16.mxu0 0
    %3640 = vmatpush1.bf16.msra.mxu0 0
    %3641 = vmatprep.subr.bf16.mxu0 0
    %3642 = vmatpush1.bf16.msra.mxu0 0
    %3643 = vmatprep.subr.bf16.mxu0 0
    %3644 = vmatpush1.bf16.msra.mxu0 0
    %3645 = vmatprep.subr.bf16.mxu0 0
    %3646 = vmatpush1.bf16.msra.mxu0 0
    %3647 = vmatprep.subr.bf16.mxu0 0
    %3648 = vmatpush1.bf16.msra.mxu0 0
    %3649 = vmatprep.subr.bf16.mxu0 0
    %3650 = vmatpush1.bf16.msra.mxu0 0
    %3651 = vmatprep.subr.bf16.mxu0 0
    %3652 = vmatpush1.bf16.msra.mxu0 0
    %3653 = vmatprep.subr.bf16.mxu0 0
    %3654 = vmatpush1.bf16.msra.mxu0 0
    %3655 = vmatprep.mubr.bf16.mxu0 0
    %3656 = vmatmul.mubr.bf16.gmra.mrb[0].mxu0 %v3621
    %v3657 = vpop.f32.mrb[0].mxu0
    %v3658 = vadd.f32 0.0, %v3657
    %v3659 = vpop.f32.mrb[0].mxu0
    %v3660 = vpop.f32.mrb[0].mxu0
    %v3661 = vadd.f32 0.0, %v3660
    %v3662 = vpop.f32.mrb[0].mxu0
    %3663 = vdwg.mxu0
    %v3665 = vsel %vm1520, %v3030, 0
    %3667 = vmatprep.subr.bf16.mxu0 0
    %3668 = vmatpush1.bf16.msra.mxu0 %v3046
    %3669 = vmatprep.subr.bf16.mxu0 0
    %3670 = vmatpush1.bf16.msra.mxu0 0
    %3671 = vmatprep.subr.bf16.mxu0 0
    %3672 = vmatpush1.bf16.msra.mxu0 0
    %3673 = vmatprep.subr.bf16.mxu0 0
    %3674 = vmatpush1.bf16.msra.mxu0 0
    %3675 = vmatprep.subr.bf16.mxu0 0
    %3676 = vmatpush1.bf16.msra.mxu0 0
    %3677 = vmatprep.subr.bf16.mxu0 0
    %3678 = vmatpush1.bf16.msra.mxu0 0
    %3679 = vmatprep.subr.bf16.mxu0 0
    %3680 = vmatpush1.bf16.msra.mxu0 0
    %3681 = vmatprep.subr.bf16.mxu0 0
    %3682 = vmatpush1.bf16.msra.mxu0 0
    %3683 = vmatprep.subr.bf16.mxu0 0
    %3684 = vmatpush1.bf16.msra.mxu0 0
    %3685 = vmatprep.subr.bf16.mxu0 0
    %3686 = vmatpush1.bf16.msra.mxu0 0
    %3687 = vmatprep.subr.bf16.mxu0 0
    %3688 = vmatpush1.bf16.msra.mxu0 0
    %3689 = vmatprep.subr.bf16.mxu0 0
    %3690 = vmatpush1.bf16.msra.mxu0 0
    %3691 = vmatprep.subr.bf16.mxu0 0
    %3692 = vmatpush1.bf16.msra.mxu0 0
    %3693 = vmatprep.subr.bf16.mxu0 0
    %3694 = vmatpush1.bf16.msra.mxu0 0
    %3695 = vmatprep.subr.bf16.mxu0 0
    %3696 = vmatpush1.bf16.msra.mxu0 0
    %3697 = vmatprep.subr.bf16.mxu0 0
    %3698 = vmatpush1.bf16.msra.mxu0 0
    %3699 = vmatprep.mubr.bf16.mxu0 0
    %3700 = vmatmul.mubr.bf16.gmra.mrb[0].mxu0 %v3665
    %v3701 = vpop.f32.mrb[0].mxu0
    %v3702 = vadd.f32 0.0, %v3701
    %v3703 = vpop.f32.mrb[0].mxu0
    %v3704 = vpop.f32.mrb[0].mxu0
    %v3705 = vadd.f32 0.0, %v3704
    %v3706 = vpop.f32.mrb[0].mxu0
    %3707 = vdwg.mxu0
    %v3709 = vsel %vm1520, %v3031, 0
    %3711 = vmatprep.subr.bf16.mxu0 0
    %3712 = vmatpush1.bf16.msra.mxu0 %v3047
    %3713 = vmatprep.subr.bf16.mxu0 0
    %3714 = vmatpush1.bf16.msra.mxu0 0
    %3715 = vmatprep.subr.bf16.mxu0 0
    %3716 = vmatpush1.bf16.msra.mxu0 0
    %3717 = vmatprep.subr.bf16.mxu0 0
    %3718 = vmatpush1.bf16.msra.mxu0 0
    %3719 = vmatprep.subr.bf16.mxu0 0
    %3720 = vmatpush1.bf16.msra.mxu0 0
    %3721 = vmatprep.subr.bf16.mxu0 0
    %3722 = vmatpush1.bf16.msra.mxu0 0
    %3723 = vmatprep.subr.bf16.mxu0 0
    %3724 = vmatpush1.bf16.msra.mxu0 0
    %3725 = vmatprep.subr.bf16.mxu0 0
    %3726 = vmatpush1.bf16.msra.mxu0 0
    %3727 = vmatprep.subr.bf16.mxu0 0
    %3728 = vmatpush1.bf16.msra.mxu0 0
    %3729 = vmatprep.subr.bf16.mxu0 0
    %3730 = vmatpush1.bf16.msra.mxu0 0
    %3731 = vmatprep.subr.bf16.mxu0 0
    %3732 = vmatpush1.bf16.msra.mxu0 0
    %3733 = vmatprep.subr.bf16.mxu0 0
    %3734 = vmatpush1.bf16.msra.mxu0 0
    %3735 = vmatprep.subr.bf16.mxu0 0
    %3736 = vmatpush1.bf16.msra.mxu0 0
    %3737 = vmatprep.subr.bf16.mxu0 0
    %3738 = vmatpush1.bf16.msra.mxu0 0
    %3739 = vmatprep.subr.bf16.mxu0 0
    %3740 = vmatpush1.bf16.msra.mxu0 0
    %3741 = vmatprep.subr.bf16.mxu0 0
    %3742 = vmatpush1.bf16.msra.mxu0 0
    %3743 = vmatprep.mubr.bf16.mxu0 0
    %3744 = vmatmul.mubr.bf16.gmra.mrb[0].mxu0 %v3709
    %v3745 = vpop.f32.mrb[0].mxu0
    %v3746 = vadd.f32 0.0, %v3745
    %v3747 = vpop.f32.mrb[0].mxu0
    %v3748 = vpop.f32.mrb[0].mxu0
    %v3749 = vadd.f32 0.0, %v3748
    %v3750 = vpop.f32.mrb[0].mxu0
    %3751 = vdwg.mxu0
    %s3752 = scalar_lea.vmem [#allocation2], 256
    %3753 = vst.msk [vmem:[%s3752] sm:$0xff] %vm1520, %v3086
    %3754 = vst.msk [vmem:[%s3752 + $0x8] sm:$0xff] %vm1520, %v3089
    %3755 = vst.msk [vmem:[%s3752 + $0x10] sm:$0xff] %vm1520, %v3130
    %3756 = vst.msk [vmem:[%s3752 + $0x18] sm:$0xff] %vm1520, %v3133
    %3757 = vst.msk [vmem:[%s3752 + $0x20] sm:$0xff] %vm1520, %v3174
    %3758 = vst.msk [vmem:[%s3752 + $0x28] sm:$0xff] %vm1520, %v3177
    %3759 = vst.msk [vmem:[%s3752 + $0x30] sm:$0xff] %vm1520, %v3218
    %3760 = vst.msk [vmem:[%s3752 + $0x38] sm:$0xff] %vm1520, %v3221
    %3761 = vst.msk [vmem:[%s3752 + $0x40] sm:$0xff] %vm1520, %v3262
    %3762 = vst.msk [vmem:[%s3752 + $0x48] sm:$0xff] %vm1520, %v3265
    %3763 = vst.msk [vmem:[%s3752 + $0x50] sm:$0xff] %vm1520, %v3306
    %3764 = vst.msk [vmem:[%s3752 + $0x58] sm:$0xff] %vm1520, %v3309
    %3765 = vst.msk [vmem:[%s3752 + $0x60] sm:$0xff] %vm1520, %v3350
    %3766 = vst.msk [vmem:[%s3752 + $0x68] sm:$0xff] %vm1520, %v3353
    %3767 = vst.msk [vmem:[%s3752 + $0x70] sm:$0xff] %vm1520, %v3394
    %3768 = vst.msk [vmem:[%s3752 + $0x78] sm:$0xff] %vm1520, %v3397
    %3769 = vst.msk [vmem:[%s3752 + $0x80] sm:$0xff] %vm1520, %v3438
    %3770 = vst.msk [vmem:[%s3752 + $0x88] sm:$0xff] %vm1520, %v3441
    %3771 = vst.msk [vmem:[%s3752 + $0x90] sm:$0xff] %vm1520, %v3482
    %3772 = vst.msk [vmem:[%s3752 + $0x98] sm:$0xff] %vm1520, %v3485
    %3773 = vst.msk [vmem:[%s3752 + $0xa0] sm:$0xff] %vm1520, %v3526
    %3774 = vst.msk [vmem:[%s3752 + $0xa8] sm:$0xff] %vm1520, %v3529
    %3775 = vst.msk [vmem:[%s3752 + $0xb0] sm:$0xff] %vm1520, %v3570
    %3776 = vst.msk [vmem:[%s3752 + $0xb8] sm:$0xff] %vm1520, %v3573
    %3777 = vst.msk [vmem:[%s3752 + $0xc0] sm:$0xff] %vm1520, %v3614
    %3778 = vst.msk [vmem:[%s3752 + $0xc8] sm:$0xff] %vm1520, %v3617
    %3779 = vst.msk [vmem:[%s3752 + $0xd0] sm:$0xff] %vm1520, %v3658
    %3780 = vst.msk [vmem:[%s3752 + $0xd8] sm:$0xff] %vm1520, %v3661
    %3781 = vst.msk [vmem:[%s3752 + $0xe0] sm:$0xff] %vm1520, %v3702
    %3782 = vst.msk [vmem:[%s3752 + $0xe8] sm:$0xff] %vm1520, %v3705
    %3783 = vst.msk [vmem:[%s3752 + $0xf0] sm:$0xff] %vm1520, %v3746
    %3784 = vst.msk [vmem:[%s3752 + $0xf8] sm:$0xff] %vm1520, %v3749
    // Predicated region
    $region22: #{_lambda_.3} parent=1 // pred_check
      _
    $region23: #{_lambda_.3} parent=1 // pred_check_branch
      %3786 = sbr.rel (0) target = $region25
    $region24: #{_lambda_.3} parent=1 // pred_region
      %s3788 = ssub.s32 8192, 8192
      %3789 = vsyncadd [#allocation3], %s3788
      %s3790 = sshll.u32 [#allocation2], 4
      %s3791 = int_to_ptr.vmem [resolvable:$true] %s3790
      %3796 = dma.vmem_to_hbm [thread:$0]  %s3791, 8192, %s5, [#allocation3], 128, 128, 8
    $region25: #{_lambda_.3} parent=1 // pred_fallthru
      _
    // Predicated region
    $region26: #{_lambda_.3} parent=1 // pred_check
      _
    $region27: #{_lambda_.3} parent=1 // pred_check_branch
      %3798 = sbr.rel (0) target = $region29
    $region28: #{_lambda_.3} parent=1 // pred_region
      %3799 = dma.done [#allocation3], 8192
    $region29: #{_lambda_.3} parent=1 // pred_fallthru
      _
    %3800 = vsyncpa [#allocation3], 1

</llo_original>
